<compile_context>
chip_gen: v7x
topology: tpu7x:2x2x1
jax: 0.10.0
libtpu: 0.0.40
codegen_flags: <defaults>
</compile_context>

<pallas_src>
import jax
import jax.numpy as jnp
from jax.experimental import pallas as pl
from jax.experimental.pallas import tpu as pltpu


# ----------------------------- fused kernel -----------------------------

def _fedavg_mnist_kernel(x_ref, t1_ref, w2_ref, wf1_ref, wf2_ref, wf3_ref,
                         p1l_ref, p1r_ref, p2l_ref, p2r_ref, bias_ref, o_ref):
    """Whole FedAvgNetMNIST forward for TB images, entirely in VMEM.

    Row index of every activation = spatial_row * TB + image; lane layouts:
      x        : (28*TB,  28)  bf16
      conv1 out: (24*TB, 192)  lanes = (ow 0..23, c 0..7)    [c >= 6 zero pad]
      pool1 out: (12*TB,  96)  lanes = (ow 0..11, c 0..7)
      conv2 out: ( 8*TB, 128)  lanes = (ow 0..7,  c 0..15)
      pool2 out: ( 4*TB,  64)  lanes = (ow 0..3,  c 0..15)   rows ordered (h, image)
      fc1/fc2  : (   TB, 128)
      output   : (   TB, 128)  = [logits(10) | relu(fc2) z(84) | zeros]
    """
    f32 = jnp.float32
    bf16 = jnp.bfloat16
    TB = o_ref.shape[0]
    R = 24 * TB

    bias = bias_ref[...]                                  # (5, 192) f32

    # ---- conv1 (1->6, 5x5, VALID) as ONE fused Toeplitz matmul + bias + ReLU ----
    # LHS (24*TB, 140): lane-concat of the 5 row-shifted windows of the image block.
    lhs1 = jnp.concatenate(
        [x_ref[pl.ds(i * TB, R), :] for i in range(5)], axis=1)          # bf16
    y1 = jnp.dot(lhs1, t1_ref[...], preferred_element_type=f32)          # (24*TB,192)
    y1 = jnp.maximum(y1 + bias[0:1, :], 0.0).astype(bf16)

    # ---- 2x2 max-pool #1: exact 0/1 selection matmuls, bf16 operands ----
    m1 = jnp.maximum(jnp.dot(p1l_ref[0], y1, preferred_element_type=f32),
                     jnp.dot(p1l_ref[1], y1, preferred_element_type=f32)
                     ).astype(bf16)                                      # (12*TB,192)
    p1 = jnp.maximum(jnp.dot(m1, p1r_ref[0], preferred_element_type=f32),
                     jnp.dot(m1, p1r_ref[1], preferred_element_type=f32)
                     ).astype(bf16)                                      # (12*TB, 96)

    # ---- conv2 (6->16, 5x5, VALID): 5 pre-summed (over j) shift matmuls ----
    acc2 = jnp.zeros((8 * TB, 128), f32)
    for i in range(5):
        acc2 = acc2 + jnp.dot(p1[i * TB:(i + 8) * TB, :], w2_ref[i],
                              preferred_element_type=f32)                # (8*TB,128)
    y2 = jnp.maximum(acc2 + bias[1:2, 0:128], 0.0).astype(bf16)

    # ---- 2x2 max-pool #2 (rows come out ordered (h, image)) ----
    m2 = jnp.maximum(jnp.dot(p2l_ref[0], y2, preferred_element_type=f32),
                     jnp.dot(p2l_ref[1], y2, preferred_element_type=f32)
                     ).astype(bf16)                                      # (4*TB,128)
    p2 = jnp.maximum(jnp.dot(m2, p2r_ref[0], preferred_element_type=f32),
                     jnp.dot(m2, p2r_ref[1], preferred_element_type=f32)
                     ).astype(bf16)                                      # (4*TB, 64)

    # ---- fc1 (256 -> 120): NCHW flatten baked into wf1; rows are (h, image) ----
    acc3 = jnp.zeros((TB, 128), f32)
    for h in range(4):
        acc3 = acc3 + jnp.dot(p2[h * TB:(h + 1) * TB, :], wf1_ref[h],
                              preferred_element_type=f32)                # (TB, 128)
    h1 = jnp.maximum(acc3 + bias[2:3, 0:128], 0.0).astype(bf16)

    # ---- fc2 (120 -> 84) + ReLU, emitted directly into lanes 10..93 ----
    z = jnp.maximum(jnp.dot(h1, wf2_ref[...], preferred_element_type=f32)
                    + bias[3:4, 0:128], 0.0)                             # (TB,128) f32

    # ---- fc3 (84 -> 10) on lanes 10..93 of z; output = logits | z | zeros ----
    logits = jnp.dot(z.astype(bf16), wf3_ref[...],
                     preferred_element_type=f32) + bias[4:5, 0:128]
    o_ref[...] = logits + z                                              # exact z pass


# ----------------------------- wrapper -----------------------------

def fedavgnet_mnist_forward(packed, x_nchw, get_features=False, tb=8):
    """Fused batched Pallas forward. x_nchw: (B, 1, 28, 28) like the PyTorch module."""
    B = x_nchw.shape[0]
    G = -(-B // tb)            # cdiv
    Bp = G * tb

    x = x_nchw.astype(jnp.bfloat16).reshape(B, 28, 28)
    if Bp != B:
        x = jnp.pad(x, ((0, Bp - B), (0, 0), (0, 0)))
    # Interleave batch into rows: block g, row r*tb + b = image (g*tb + b), row r.
    x = x.reshape(G, tb, 28, 28).transpose(0, 2, 1, 3).reshape(G * 28 * tb, 28)

    out = pl.pallas_call(
        _fedavg_mnist_kernel,
        out_shape=jax.ShapeDtypeStruct((Bp, 128), jnp.float32),
        grid_spec=pltpu.PrefetchScalarGridSpec(
            num_scalar_prefetch=0,
            grid=(G,),
            in_specs=[
                pl.BlockSpec((28 * tb, 28), lambda g: (g, 0)),        # image block
                pl.BlockSpec((140, 192), lambda g: (0, 0)),           # conv1 Toeplitz
                pl.BlockSpec((5, 96, 128), lambda g: (0, 0, 0)),      # conv2 (pre-summed)
                pl.BlockSpec((4, 64, 128), lambda g: (0, 0, 0)),      # fc1 per pooled row
                pl.BlockSpec((128, 128), lambda g: (0, 0)),           # fc2 (shifted)
                pl.BlockSpec((128, 128), lambda g: (0, 0)),           # fc3
                pl.BlockSpec((2, 12 * tb, 24 * tb), lambda g: (0, 0, 0)),  # pool1 rows
                pl.BlockSpec((2, 192, 96), lambda g: (0, 0, 0)),           # pool1 lanes
                pl.BlockSpec((2, 4 * tb, 8 * tb), lambda g: (0, 0, 0)),    # pool2 rows
                pl.BlockSpec((2, 128, 64), lambda g: (0, 0, 0)),           # pool2 lanes
                pl.BlockSpec((5, 192), lambda g: (0, 0)),             # packed biases
            ],
            out_specs=pl.BlockSpec((tb, 128), lambda g: (g, 0)),
        ),
        compiler_params=pltpu.CompilerParams(
            dimension_semantics=("parallel",)),
    )(x, packed["t1"], packed["w2"], packed["wf1"], packed["wf2"], packed["wf3"],
      packed["p1l"], packed["p1r"], packed["p2l"], packed["p2r"], packed["bias"])

    out = out[:B]
    logits = out[:, :10]
    if get_features:
        return logits, out[:, 10:94]
    return logits


# ----------------------------- parameter packing -----------------------------

def _pool_select(n, parity):
    """(n, n//2) 0/1 matrix with M[2*k + parity, k] = 1 (picks every other index)."""
    rows = jnp.arange(n)[:, None]
    cols = jnp.arange(n // 2)[None, :]
    return (rows == 2 * cols + parity).astype(jnp.float32)


def pack_params(params, tb=8):
    """Repack PyTorch-layout parameters into the kernel's padded, fused layouts."""
    f32, bf16 = jnp.float32, jnp.bfloat16

    w1 = params["conv1_w"].astype(f32)     # (6, 1, 5, 5)   (out_c, in_c, kh, kw)
    b1 = params["conv1_b"].astype(f32)     # (6,)
    w2 = params["conv2_w"].astype(f32)     # (16, 6, 5, 5)
    b2 = params["conv2_b"].astype(f32)     # (16,)
    wf1 = params["fc1_w"].astype(f32)      # (120, 256)  in-index = c*16 + h*4 + w
    bf1 = params["fc1_b"].astype(f32)
    wf2 = params["fc2_w"].astype(f32)      # (84, 120)
    bf2 = params["fc2_b"].astype(f32)
    wf3 = params["fc3_w"].astype(f32)      # (10, 84)
    bf3 = params["fc3_b"].astype(f32)

    # conv1 -> fused Toeplitz: T1[i*28 + w, ow*8 + c] = w1[c,0,i, w-ow] for 0<=w-ow<5.
    w1p = jnp.pad(jnp.transpose(w1[:, 0, :, :], (1, 2, 0)),
                  ((0, 0), (0, 0), (0, 2)))                         # (i, j, c8)
    jmat = jnp.arange(28)[:, None] - jnp.arange(24)[None, :]        # w - ow  (28, 24)
    valid = ((jmat >= 0) & (jmat < 5)).astype(f32)
    t1 = w1p[:, jnp.clip(jmat, 0, 4), :] * valid[None, :, :, None]  # (5, 28, 24, 8)
    t1 = t1.reshape(5, 28, 192).reshape(140, 192).astype(bf16)

    # conv2 -> 5 pre-summed (over j) shifted block matrices (exact: disjoint nonzeros):
    # W2s[i][owp*8 + ci, ow*16 + co] = w2[co, ci, i, owp-ow] if 0 <= owp-ow < 5.
    w2p = jnp.pad(jnp.transpose(w2, (2, 3, 1, 0)),
                  ((0, 0), (0, 0), (0, 2), (0, 0)))                 # (i, j, ci8, co16)
    d = jnp.arange(12)[:, None] - jnp.arange(8)[None, :]            # owp - ow  (12, 8)
    validd = ((d >= 0) & (d < 5)).astype(f32)
    w2s = w2p[:, jnp.clip(d, 0, 4), :, :]                           # (i, owp, ow, ci, co)
    w2s = (w2s * validd[None, :, :, None, None]).transpose(0, 1, 3, 2, 4)
    w2s = w2s.reshape(5, 96, 128).astype(bf16)

    # fc1 -> per-pooled-row matrices; bakes in the NCHW flatten (k = c*16 + h*4 + w):
    # WF1[h][ow*16 + co, n] = fc1.weight[n, co*16 + h*4 + ow]
    wf1p = jnp.transpose(wf1.reshape(120, 16, 4, 4), (2, 3, 1, 0))  # (h, ow, co, n)
    wf1p = jnp.pad(wf1p.reshape(4, 64, 120), ((0, 0), (0, 0), (0, 8))).astype(bf16)

    # fc2: rows 0..119 = fc2.weight.T, output shifted into lanes 10..93 so the kernel
    # can compose [logits | z | zeros] with a single add (exact f32 z passthrough).
    wf2p = jnp.zeros((128, 128), f32).at[:120, 10:94].set(wf2.T).astype(bf16)

    # fc3: reads z from lanes 10..93, writes logits to lanes 0..9.
    wf3p = jnp.zeros((128, 128), f32).at[10:94, :10].set(wf3.T).astype(bf16)

    # Exact 0/1 selection matrices implementing the two 2x2 max-pools (bf16 operands).
    # Row selects are kron'd with eye(tb) because rows carry (spatial_row, image).
    s24 = [_pool_select(24, k) for k in (0, 1)]
    s8 = [_pool_select(8, k) for k in (0, 1)]
    eye_tb = jnp.eye(tb, dtype=f32)
    p1l = jnp.stack([jnp.kron(s.T, eye_tb) for s in s24]).astype(bf16)         # (2,12t,24t)
    p1r = jnp.stack([jnp.kron(s, jnp.eye(8, dtype=f32)) for s in s24]).astype(bf16)   # (2,192,96)
    p2l = jnp.stack([jnp.kron(s.T, eye_tb) for s in s8]).astype(bf16)          # (2, 4t, 8t)
    p2r = jnp.stack([jnp.kron(s, jnp.eye(16, dtype=f32)) for s in s8]).astype(bf16)   # (2,128,64)

    # Biases, pre-broadcast onto the kernel's lane layouts (kept f32).
    bias = jnp.zeros((5, 192), jnp.float32)
    bias = bias.at[0, :].set(jnp.tile(jnp.pad(b1, (0, 2)), 24))   # conv1: (ow, c) lanes
    bias = bias.at[1, :128].set(jnp.tile(b2, 8))                  # conv2: (ow, c) lanes
    bias = bias.at[2, :120].set(bf1)
    bias = bias.at[3, 10:94].set(bf2)                             # fc2 shifted to 10..93
    bias = bias.at[4, :10].set(bf3)

    return {"t1": t1, "w2": w2s, "wf1": wf1p, "wf2": wf2p, "wf3": wf3p,
            "p1l": p1l, "p1r": p1r, "p2l": p2l, "p2r": p2r, "bias": bias}


# ----------------------------- params & reference -----------------------------

def init_params(key):
    """Deterministic PyTorch-layout params, uniform(-1/sqrt(fan_in), 1/sqrt(fan_in))."""
    def u(k, shape, fan_in):
        bound = 1.0 / (float(fan_in) ** 0.5)
        return jax.random.uniform(k, shape, jnp.float32, -bound, bound)

    ks = jax.random.split(key, 10)
    return {
        "conv1_w": u(ks[0], (6, 1, 5, 5), 25), "conv1_b": u(ks[1], (6,), 25),
        "conv2_w": u(ks[2], (16, 6, 5, 5), 150), "conv2_b": u(ks[3], (16,), 150),
        "fc1_w": u(ks[4], (120, 256), 256), "fc1_b": u(ks[5], (120,), 256),
        "fc2_w": u(ks[6], (84, 120), 120), "fc2_b": u(ks[7], (84,), 120),
        "fc3_w": u(ks[8], (10, 84), 84), "fc3_b": u(ks[9], (10,), 84),
    }


def _maxpool_nchw(x):
    B, C, H, W = x.shape
    return jnp.max(x.reshape(B, C, H // 2, 2, W // 2, 2), axis=(3, 5))


def reference_forward(params, x_nchw):
    """Pure-JAX (XLA, f32) reference of the PyTorch forward, for a numerical check."""
    x = x_nchw.astype(jnp.float32)
    y = jax.lax.conv_general_dilated(x, params["conv1_w"], (1, 1), "VALID",
                                     dimension_numbers=("NCHW", "OIHW", "NCHW"))
    y = _maxpool_nchw(jnp.maximum(y + params["conv1_b"][None, :, None, None], 0.0))
    y = jax.lax.conv_general_dilated(y, params["conv2_w"], (1, 1), "VALID",
                                     dimension_numbers=("NCHW", "OIHW", "NCHW"))
    y = _maxpool_nchw(jnp.maximum(y + params["conv2_b"][None, :, None, None], 0.0))
    flat = y.reshape(x.shape[0], 16 * 4 * 4)
    h = jnp.maximum(flat @ params["fc1_w"].T + params["fc1_b"], 0.0)
    z = jnp.maximum(h @ params["fc2_w"].T + params["fc2_b"], 0.0)
    return z @ params["fc3_w"].T + params["fc3_b"], z


if __name__ == "__main__":
    key = jax.random.PRNGKey(0)
    pkey, xkey = jax.random.split(key)
    params = init_params(pkey)

    TB = 8                                    # images per grid step
    packed = pack_params(params, tb=TB)

    # MNIST-shaped NCHW input (28x28 is required by the fixed x.view(-1, 16*4*4)).
    # B=16 -> grid of 2 "parallel" steps (even, so v7x's two TensorCores both work).
    x = jax.random.normal(xkey, (16, 1, 28, 28), jnp.float32)

    fwd = jax.jit(lambda pk, xx: fedavgnet_mnist_forward(pk, xx, get_features=True, tb=TB))
    logits, z = fwd(packed, x)
    logits = jax.block_until_ready(logits)
    z = jax.block_until_ready(z)

    assert logits.shape == (16, 10), logits.shape
    assert z.shape == (16, 84), z.shape
    assert bool(jnp.all(jnp.isfinite(logits)))

    ref_logits, ref_z = reference_forward(params, x)
    err_l = float(jnp.max(jnp.abs(logits - ref_logits)))
    err_z = float(jnp.max(jnp.abs(z - ref_z)))
    # bf16 matmul operands (with f32 accumulation) are intentional -> modest tolerance.
    assert bool(jnp.allclose(logits, ref_logits, rtol=3e-2, atol=3e-2)), \
        f"logits max abs err {err_l}"
    assert bool(jnp.allclose(z, ref_z, rtol=3e-2, atol=3e-2)), \
        f"features max abs err {err_z}"

    print("KERNEL_OK")
</pallas_src>

<mosaic_0001>
module attributes {stable_mosaic.version = 11 : i64} {
  func.func @_fedavg_mnist_kernel(%arg0: i32, %arg1: memref<224x28xbf16, #tpu.memory_space<vmem>>, %arg2: memref<140x192xbf16, #tpu.memory_space<vmem>>, %arg3: memref<5x96x128xbf16, #tpu.memory_space<vmem>>, %arg4: memref<4x64x128xbf16, #tpu.memory_space<vmem>>, %arg5: memref<128x128xbf16, #tpu.memory_space<vmem>>, %arg6: memref<128x128xbf16, #tpu.memory_space<vmem>>, %arg7: memref<2x96x192xbf16, #tpu.memory_space<vmem>>, %arg8: memref<2x192x96xbf16, #tpu.memory_space<vmem>>, %arg9: memref<2x32x64xbf16, #tpu.memory_space<vmem>>, %arg10: memref<2x128x64xbf16, #tpu.memory_space<vmem>>, %arg11: memref<5x192xf32, #tpu.memory_space<vmem>>, %arg12: memref<8x128xf32, #tpu.memory_space<vmem>>) attributes {dimension_semantics = [#tpu.dimension_semantics<parallel>], iteration_bounds = array<i64: 2>, scalar_prefetch = 0 : i64, scratch_operands = 0 : i64, tpu.core_type = #tpu.core_type<tc>, window_params = [{transform_indices = @transform_0, window_bounds = array<i64: 224, 28>}, {pipeline_mode = #tpu.pipeline_mode<synchronous>, transform_indices = @transform_1, window_bounds = array<i64: 140, 192>}, {pipeline_mode = #tpu.pipeline_mode<synchronous>, transform_indices = @transform_2, window_bounds = array<i64: 5, 96, 128>}, {pipeline_mode = #tpu.pipeline_mode<synchronous>, transform_indices = @transform_3, window_bounds = array<i64: 4, 64, 128>}, {pipeline_mode = #tpu.pipeline_mode<synchronous>, transform_indices = @transform_4, window_bounds = array<i64: 128, 128>}, {pipeline_mode = #tpu.pipeline_mode<synchronous>, transform_indices = @transform_5, window_bounds = array<i64: 128, 128>}, {pipeline_mode = #tpu.pipeline_mode<synchronous>, transform_indices = @transform_6, window_bounds = array<i64: 2, 96, 192>}, {pipeline_mode = #tpu.pipeline_mode<synchronous>, transform_indices = @transform_7, window_bounds = array<i64: 2, 192, 96>}, {pipeline_mode = #tpu.pipeline_mode<synchronous>, transform_indices = @transform_8, window_bounds = array<i64: 2, 32, 64>}, {pipeline_mode = #tpu.pipeline_mode<synchronous>, transform_indices = @transform_9, window_bounds = array<i64: 2, 128, 64>}, {pipeline_mode = #tpu.pipeline_mode<synchronous>, transform_indices = @transform_10, window_bounds = array<i64: 5, 192>}, {transform_indices = @transform_11, window_bounds = array<i64: 8, 128>}]} {
    %c0 = arith.constant 0 : index
    %c0_0 = arith.constant 0 : index
    %0 = vector.load %arg11[%c0, %c0_0] : memref<5x192xf32, #tpu.memory_space<vmem>>, vector<5x192xf32>
    %c0_1 = arith.constant 0 : index
    %c0_2 = arith.constant 0 : index
    %1 = vector.load %arg1[%c0_1, %c0_2] : memref<224x28xbf16, #tpu.memory_space<vmem>>, vector<192x28xbf16>
    %c8 = arith.constant 8 : index
    %c0_3 = arith.constant 0 : index
    %2 = vector.load %arg1[%c8, %c0_3] : memref<224x28xbf16, #tpu.memory_space<vmem>>, vector<192x28xbf16>
    %c16 = arith.constant 16 : index
    %c0_4 = arith.constant 0 : index
    %3 = vector.load %arg1[%c16, %c0_4] : memref<224x28xbf16, #tpu.memory_space<vmem>>, vector<192x28xbf16>
    %c24 = arith.constant 24 : index
    %c0_5 = arith.constant 0 : index
    %4 = vector.load %arg1[%c24, %c0_5] : memref<224x28xbf16, #tpu.memory_space<vmem>>, vector<192x28xbf16>
    %c32 = arith.constant 32 : index
    %c0_6 = arith.constant 0 : index
    %5 = vector.load %arg1[%c32, %c0_6] : memref<224x28xbf16, #tpu.memory_space<vmem>>, vector<192x28xbf16>
    %6 = tpu.concatenate %1, %2, %3, %4, %5 in 1 : vector<192x28xbf16>, vector<192x28xbf16>, vector<192x28xbf16>, vector<192x28xbf16>, vector<192x28xbf16> -> vector<192x140xbf16>
    %c0_7 = arith.constant 0 : index
    %c0_8 = arith.constant 0 : index
    %7 = vector.load %arg2[%c0_7, %c0_8] : memref<140x192xbf16, #tpu.memory_space<vmem>>, vector<140x192xbf16>
    %cst = arith.constant dense<0.000000e+00> : vector<192x192xf32>
    %8 = tpu.matmul %6, %7, %cst {dimension_numbers = #tpu.dot_dimension_numbers<[1], [0], [0], [1], [0, 0, 1, 1], [], []>} : vector<192x140xbf16>, vector<140x192xbf16>, vector<192x192xf32> -> vector<192x192xf32>
    %9 = vector.extract_strided_slice %0 {offsets = [0, 0], sizes = [1, 192], strides = [1, 1]} : vector<5x192xf32> to vector<1x192xf32>
    %10 = vector.broadcast %9 : vector<1x192xf32> to vector<192x192xf32>
    %11 = arith.addf %8, %10 : vector<192x192xf32>
    %cst_9 = arith.constant 0.000000e+00 : f32
    %12 = vector.broadcast %cst_9 : f32 to vector<192x192xf32>
    %13 = arith.maximumf %11, %12 : vector<192x192xf32>
    %14 = arith.truncf %13 : vector<192x192xf32> to vector<192x192xbf16>
    %c0_10 = arith.constant 0 : index
    %c0_11 = arith.constant 0 : index
    %c0_12 = arith.constant 0 : index
    %15 = vector.load %arg7[%c0_10, %c0_11, %c0_12] : memref<2x96x192xbf16, #tpu.memory_space<vmem>>, vector<1x96x192xbf16>
    %16 = vector.shape_cast %15 : vector<1x96x192xbf16> to vector<96x192xbf16>
    %cst_13 = arith.constant dense<0.000000e+00> : vector<96x192xf32>
    %17 = tpu.matmul %16, %14, %cst_13 {dimension_numbers = #tpu.dot_dimension_numbers<[1], [0], [0], [1], [0, 0, 1, 1], [], []>} : vector<96x192xbf16>, vector<192x192xbf16>, vector<96x192xf32> -> vector<96x192xf32>
    %c1 = arith.constant 1 : index
    %c0_14 = arith.constant 0 : index
    %c0_15 = arith.constant 0 : index
    %18 = vector.load %arg7[%c1, %c0_14, %c0_15] : memref<2x96x192xbf16, #tpu.memory_space<vmem>>, vector<1x96x192xbf16>
    %19 = vector.shape_cast %18 : vector<1x96x192xbf16> to vector<96x192xbf16>
    %cst_16 = arith.constant dense<0.000000e+00> : vector<96x192xf32>
    %20 = tpu.matmul %19, %14, %cst_16 {dimension_numbers = #tpu.dot_dimension_numbers<[1], [0], [0], [1], [0, 0, 1, 1], [], []>} : vector<96x192xbf16>, vector<192x192xbf16>, vector<96x192xf32> -> vector<96x192xf32>
    %21 = arith.maximumf %17, %20 : vector<96x192xf32>
    %22 = arith.truncf %21 : vector<96x192xf32> to vector<96x192xbf16>
    %c0_17 = arith.constant 0 : index
    %c0_18 = arith.constant 0 : index
    %c0_19 = arith.constant 0 : index
    %23 = vector.load %arg8[%c0_17, %c0_18, %c0_19] : memref<2x192x96xbf16, #tpu.memory_space<vmem>>, vector<1x192x96xbf16>
    %24 = vector.shape_cast %23 : vector<1x192x96xbf16> to vector<192x96xbf16>
    %cst_20 = arith.constant dense<0.000000e+00> : vector<96x96xf32>
    %25 = tpu.matmul %22, %24, %cst_20 {dimension_numbers = #tpu.dot_dimension_numbers<[1], [0], [0], [1], [0, 0, 1, 1], [], []>} : vector<96x192xbf16>, vector<192x96xbf16>, vector<96x96xf32> -> vector<96x96xf32>
    %c1_21 = arith.constant 1 : index
    %c0_22 = arith.constant 0 : index
    %c0_23 = arith.constant 0 : index
    %26 = vector.load %arg8[%c1_21, %c0_22, %c0_23] : memref<2x192x96xbf16, #tpu.memory_space<vmem>>, vector<1x192x96xbf16>
    %27 = vector.shape_cast %26 : vector<1x192x96xbf16> to vector<192x96xbf16>
    %cst_24 = arith.constant dense<0.000000e+00> : vector<96x96xf32>
    %28 = tpu.matmul %22, %27, %cst_24 {dimension_numbers = #tpu.dot_dimension_numbers<[1], [0], [0], [1], [0, 0, 1, 1], [], []>} : vector<96x192xbf16>, vector<192x96xbf16>, vector<96x96xf32> -> vector<96x96xf32>
    %29 = arith.maximumf %25, %28 : vector<96x96xf32>
    %30 = arith.truncf %29 : vector<96x96xf32> to vector<96x96xbf16>
    %cst_25 = arith.constant 0.000000e+00 : f32
    %31 = vector.broadcast %cst_25 : f32 to vector<64x128xf32>
    %32 = vector.extract_strided_slice %30 {offsets = [0, 0], sizes = [64, 96], strides = [1, 1]} : vector<96x96xbf16> to vector<64x96xbf16>
    %c0_26 = arith.constant 0 : index
    %c0_27 = arith.constant 0 : index
    %c0_28 = arith.constant 0 : index
    %33 = vector.load %arg3[%c0_26, %c0_27, %c0_28] : memref<5x96x128xbf16, #tpu.memory_space<vmem>>, vector<1x96x128xbf16>
    %34 = vector.shape_cast %33 : vector<1x96x128xbf16> to vector<96x128xbf16>
    %cst_29 = arith.constant dense<0.000000e+00> : vector<64x128xf32>
    %35 = tpu.matmul %32, %34, %cst_29 {dimension_numbers = #tpu.dot_dimension_numbers<[1], [0], [0], [1], [0, 0, 1, 1], [], []>} : vector<64x96xbf16>, vector<96x128xbf16>, vector<64x128xf32> -> vector<64x128xf32>
    %36 = arith.addf %31, %35 : vector<64x128xf32>
    %37 = vector.extract_strided_slice %30 {offsets = [8, 0], sizes = [64, 96], strides = [1, 1]} : vector<96x96xbf16> to vector<64x96xbf16>
    %c1_30 = arith.constant 1 : index
    %c0_31 = arith.constant 0 : index
    %c0_32 = arith.constant 0 : index
    %38 = vector.load %arg3[%c1_30, %c0_31, %c0_32] : memref<5x96x128xbf16, #tpu.memory_space<vmem>>, vector<1x96x128xbf16>
    %39 = vector.shape_cast %38 : vector<1x96x128xbf16> to vector<96x128xbf16>
    %cst_33 = arith.constant dense<0.000000e+00> : vector<64x128xf32>
    %40 = tpu.matmul %37, %39, %cst_33 {dimension_numbers = #tpu.dot_dimension_numbers<[1], [0], [0], [1], [0, 0, 1, 1], [], []>} : vector<64x96xbf16>, vector<96x128xbf16>, vector<64x128xf32> -> vector<64x128xf32>
    %41 = arith.addf %36, %40 : vector<64x128xf32>
    %42 = vector.extract_strided_slice %30 {offsets = [16, 0], sizes = [64, 96], strides = [1, 1]} : vector<96x96xbf16> to vector<64x96xbf16>
    %c2 = arith.constant 2 : index
    %c0_34 = arith.constant 0 : index
    %c0_35 = arith.constant 0 : index
    %43 = vector.load %arg3[%c2, %c0_34, %c0_35] : memref<5x96x128xbf16, #tpu.memory_space<vmem>>, vector<1x96x128xbf16>
    %44 = vector.shape_cast %43 : vector<1x96x128xbf16> to vector<96x128xbf16>
    %cst_36 = arith.constant dense<0.000000e+00> : vector<64x128xf32>
    %45 = tpu.matmul %42, %44, %cst_36 {dimension_numbers = #tpu.dot_dimension_numbers<[1], [0], [0], [1], [0, 0, 1, 1], [], []>} : vector<64x96xbf16>, vector<96x128xbf16>, vector<64x128xf32> -> vector<64x128xf32>
    %46 = arith.addf %41, %45 : vector<64x128xf32>
    %47 = vector.extract_strided_slice %30 {offsets = [24, 0], sizes = [64, 96], strides = [1, 1]} : vector<96x96xbf16> to vector<64x96xbf16>
    %c3 = arith.constant 3 : index
    %c0_37 = arith.constant 0 : index
    %c0_38 = arith.constant 0 : index
    %48 = vector.load %arg3[%c3, %c0_37, %c0_38] : memref<5x96x128xbf16, #tpu.memory_space<vmem>>, vector<1x96x128xbf16>
    %49 = vector.shape_cast %48 : vector<1x96x128xbf16> to vector<96x128xbf16>
    %cst_39 = arith.constant dense<0.000000e+00> : vector<64x128xf32>
    %50 = tpu.matmul %47, %49, %cst_39 {dimension_numbers = #tpu.dot_dimension_numbers<[1], [0], [0], [1], [0, 0, 1, 1], [], []>} : vector<64x96xbf16>, vector<96x128xbf16>, vector<64x128xf32> -> vector<64x128xf32>
    %51 = arith.addf %46, %50 : vector<64x128xf32>
    %52 = vector.extract_strided_slice %30 {offsets = [32, 0], sizes = [64, 96], strides = [1, 1]} : vector<96x96xbf16> to vector<64x96xbf16>
    %c4 = arith.constant 4 : index
    %c0_40 = arith.constant 0 : index
    %c0_41 = arith.constant 0 : index
    %53 = vector.load %arg3[%c4, %c0_40, %c0_41] : memref<5x96x128xbf16, #tpu.memory_space<vmem>>, vector<1x96x128xbf16>
    %54 = vector.shape_cast %53 : vector<1x96x128xbf16> to vector<96x128xbf16>
    %cst_42 = arith.constant dense<0.000000e+00> : vector<64x128xf32>
    %55 = tpu.matmul %52, %54, %cst_42 {dimension_numbers = #tpu.dot_dimension_numbers<[1], [0], [0], [1], [0, 0, 1, 1], [], []>} : vector<64x96xbf16>, vector<96x128xbf16>, vector<64x128xf32> -> vector<64x128xf32>
    %56 = arith.addf %51, %55 : vector<64x128xf32>
    %57 = vector.extract_strided_slice %0 {offsets = [1, 0], sizes = [1, 128], strides = [1, 1]} : vector<5x192xf32> to vector<1x128xf32>
    %58 = vector.broadcast %57 : vector<1x128xf32> to vector<64x128xf32>
    %59 = arith.addf %56, %58 : vector<64x128xf32>
    %cst_43 = arith.constant 0.000000e+00 : f32
    %60 = vector.broadcast %cst_43 : f32 to vector<64x128xf32>
    %61 = arith.maximumf %59, %60 : vector<64x128xf32>
    %62 = arith.truncf %61 : vector<64x128xf32> to vector<64x128xbf16>
    %c0_44 = arith.constant 0 : index
    %c0_45 = arith.constant 0 : index
    %c0_46 = arith.constant 0 : index
    %63 = vector.load %arg9[%c0_44, %c0_45, %c0_46] : memref<2x32x64xbf16, #tpu.memory_space<vmem>>, vector<1x32x64xbf16>
    %64 = vector.shape_cast %63 : vector<1x32x64xbf16> to vector<32x64xbf16>
    %cst_47 = arith.constant dense<0.000000e+00> : vector<32x128xf32>
    %65 = tpu.matmul %64, %62, %cst_47 {dimension_numbers = #tpu.dot_dimension_numbers<[1], [0], [0], [1], [0, 0, 1, 1], [], []>} : vector<32x64xbf16>, vector<64x128xbf16>, vector<32x128xf32> -> vector<32x128xf32>
    %c1_48 = arith.constant 1 : index
    %c0_49 = arith.constant 0 : index
    %c0_50 = arith.constant 0 : index
    %66 = vector.load %arg9[%c1_48, %c0_49, %c0_50] : memref<2x32x64xbf16, #tpu.memory_space<vmem>>, vector<1x32x64xbf16>
    %67 = vector.shape_cast %66 : vector<1x32x64xbf16> to vector<32x64xbf16>
    %cst_51 = arith.constant dense<0.000000e+00> : vector<32x128xf32>
    %68 = tpu.matmul %67, %62, %cst_51 {dimension_numbers = #tpu.dot_dimension_numbers<[1], [0], [0], [1], [0, 0, 1, 1], [], []>} : vector<32x64xbf16>, vector<64x128xbf16>, vector<32x128xf32> -> vector<32x128xf32>
    %69 = arith.maximumf %65, %68 : vector<32x128xf32>
    %70 = arith.truncf %69 : vector<32x128xf32> to vector<32x128xbf16>
    %c0_52 = arith.constant 0 : index
    %c0_53 = arith.constant 0 : index
    %c0_54 = arith.constant 0 : index
    %71 = vector.load %arg10[%c0_52, %c0_53, %c0_54] : memref<2x128x64xbf16, #tpu.memory_space<vmem>>, vector<1x128x64xbf16>
    %72 = vector.shape_cast %71 : vector<1x128x64xbf16> to vector<128x64xbf16>
    %cst_55 = arith.constant dense<0.000000e+00> : vector<32x64xf32>
    %73 = tpu.matmul %70, %72, %cst_55 {dimension_numbers = #tpu.dot_dimension_numbers<[1], [0], [0], [1], [0, 0, 1, 1], [], []>} : vector<32x128xbf16>, vector<128x64xbf16>, vector<32x64xf32> -> vector<32x64xf32>
    %c1_56 = arith.constant 1 : index
    %c0_57 = arith.constant 0 : index
    %c0_58 = arith.constant 0 : index
    %74 = vector.load %arg10[%c1_56, %c0_57, %c0_58] : memref<2x128x64xbf16, #tpu.memory_space<vmem>>, vector<1x128x64xbf16>
    %75 = vector.shape_cast %74 : vector<1x128x64xbf16> to vector<128x64xbf16>
    %cst_59 = arith.constant dense<0.000000e+00> : vector<32x64xf32>
    %76 = tpu.matmul %70, %75, %cst_59 {dimension_numbers = #tpu.dot_dimension_numbers<[1], [0], [0], [1], [0, 0, 1, 1], [], []>} : vector<32x128xbf16>, vector<128x64xbf16>, vector<32x64xf32> -> vector<32x64xf32>
    %77 = arith.maximumf %73, %76 : vector<32x64xf32>
    %78 = arith.truncf %77 : vector<32x64xf32> to vector<32x64xbf16>
    %cst_60 = arith.constant 0.000000e+00 : f32
    %79 = vector.broadcast %cst_60 : f32 to vector<8x128xf32>
    %80 = vector.extract_strided_slice %78 {offsets = [0, 0], sizes = [8, 64], strides = [1, 1]} : vector<32x64xbf16> to vector<8x64xbf16>
    %c0_61 = arith.constant 0 : index
    %c0_62 = arith.constant 0 : index
    %c0_63 = arith.constant 0 : index
    %81 = vector.load %arg4[%c0_61, %c0_62, %c0_63] : memref<4x64x128xbf16, #tpu.memory_space<vmem>>, vector<1x64x128xbf16>
    %82 = vector.shape_cast %81 : vector<1x64x128xbf16> to vector<64x128xbf16>
    %cst_64 = arith.constant dense<0.000000e+00> : vector<8x128xf32>
    %83 = tpu.matmul %80, %82, %cst_64 {dimension_numbers = #tpu.dot_dimension_numbers<[1], [0], [0], [1], [0, 0, 1, 1], [], []>} : vector<8x64xbf16>, vector<64x128xbf16>, vector<8x128xf32> -> vector<8x128xf32>
    %84 = arith.addf %79, %83 : vector<8x128xf32>
    %85 = vector.extract_strided_slice %78 {offsets = [8, 0], sizes = [8, 64], strides = [1, 1]} : vector<32x64xbf16> to vector<8x64xbf16>
    %c1_65 = arith.constant 1 : index
    %c0_66 = arith.constant 0 : index
    %c0_67 = arith.constant 0 : index
    %86 = vector.load %arg4[%c1_65, %c0_66, %c0_67] : memref<4x64x128xbf16, #tpu.memory_space<vmem>>, vector<1x64x128xbf16>
    %87 = vector.shape_cast %86 : vector<1x64x128xbf16> to vector<64x128xbf16>
    %cst_68 = arith.constant dense<0.000000e+00> : vector<8x128xf32>
    %88 = tpu.matmul %85, %87, %cst_68 {dimension_numbers = #tpu.dot_dimension_numbers<[1], [0], [0], [1], [0, 0, 1, 1], [], []>} : vector<8x64xbf16>, vector<64x128xbf16>, vector<8x128xf32> -> vector<8x128xf32>
    %89 = arith.addf %84, %88 : vector<8x128xf32>
    %90 = vector.extract_strided_slice %78 {offsets = [16, 0], sizes = [8, 64], strides = [1, 1]} : vector<32x64xbf16> to vector<8x64xbf16>
    %c2_69 = arith.constant 2 : index
    %c0_70 = arith.constant 0 : index
    %c0_71 = arith.constant 0 : index
    %91 = vector.load %arg4[%c2_69, %c0_70, %c0_71] : memref<4x64x128xbf16, #tpu.memory_space<vmem>>, vector<1x64x128xbf16>
    %92 = vector.shape_cast %91 : vector<1x64x128xbf16> to vector<64x128xbf16>
    %cst_72 = arith.constant dense<0.000000e+00> : vector<8x128xf32>
    %93 = tpu.matmul %90, %92, %cst_72 {dimension_numbers = #tpu.dot_dimension_numbers<[1], [0], [0], [1], [0, 0, 1, 1], [], []>} : vector<8x64xbf16>, vector<64x128xbf16>, vector<8x128xf32> -> vector<8x128xf32>
    %94 = arith.addf %89, %93 : vector<8x128xf32>
    %95 = vector.extract_strided_slice %78 {offsets = [24, 0], sizes = [8, 64], strides = [1, 1]} : vector<32x64xbf16> to vector<8x64xbf16>
    %c3_73 = arith.constant 3 : index
    %c0_74 = arith.constant 0 : index
    %c0_75 = arith.constant 0 : index
    %96 = vector.load %arg4[%c3_73, %c0_74, %c0_75] : memref<4x64x128xbf16, #tpu.memory_space<vmem>>, vector<1x64x128xbf16>
    %97 = vector.shape_cast %96 : vector<1x64x128xbf16> to vector<64x128xbf16>
    %cst_76 = arith.constant dense<0.000000e+00> : vector<8x128xf32>
    %98 = tpu.matmul %95, %97, %cst_76 {dimension_numbers = #tpu.dot_dimension_numbers<[1], [0], [0], [1], [0, 0, 1, 1], [], []>} : vector<8x64xbf16>, vector<64x128xbf16>, vector<8x128xf32> -> vector<8x128xf32>
    %99 = arith.addf %94, %98 : vector<8x128xf32>
    %100 = vector.extract_strided_slice %0 {offsets = [2, 0], sizes = [1, 128], strides = [1, 1]} : vector<5x192xf32> to vector<1x128xf32>
    %101 = vector.broadcast %100 : vector<1x128xf32> to vector<8x128xf32>
    %102 = arith.addf %99, %101 : vector<8x128xf32>
    %cst_77 = arith.constant 0.000000e+00 : f32
    %103 = vector.broadcast %cst_77 : f32 to vector<8x128xf32>
    %104 = arith.maximumf %102, %103 : vector<8x128xf32>
    %105 = arith.truncf %104 : vector<8x128xf32> to vector<8x128xbf16>
    %c0_78 = arith.constant 0 : index
    %c0_79 = arith.constant 0 : index
    %106 = vector.load %arg5[%c0_78, %c0_79] : memref<128x128xbf16, #tpu.memory_space<vmem>>, vector<128x128xbf16>
    %cst_80 = arith.constant dense<0.000000e+00> : vector<8x128xf32>
    %107 = tpu.matmul %105, %106, %cst_80 {dimension_numbers = #tpu.dot_dimension_numbers<[1], [0], [0], [1], [0, 0, 1, 1], [], []>} : vector<8x128xbf16>, vector<128x128xbf16>, vector<8x128xf32> -> vector<8x128xf32>
    %108 = vector.extract_strided_slice %0 {offsets = [3, 0], sizes = [1, 128], strides = [1, 1]} : vector<5x192xf32> to vector<1x128xf32>
    %109 = vector.broadcast %108 : vector<1x128xf32> to vector<8x128xf32>
    %110 = arith.addf %107, %109 : vector<8x128xf32>
    %cst_81 = arith.constant 0.000000e+00 : f32
    %111 = vector.broadcast %cst_81 : f32 to vector<8x128xf32>
    %112 = arith.maximumf %110, %111 : vector<8x128xf32>
    %113 = arith.truncf %112 : vector<8x128xf32> to vector<8x128xbf16>
    %c0_82 = arith.constant 0 : index
    %c0_83 = arith.constant 0 : index
    %114 = vector.load %arg6[%c0_82, %c0_83] : memref<128x128xbf16, #tpu.memory_space<vmem>>, vector<128x128xbf16>
    %cst_84 = arith.constant dense<0.000000e+00> : vector<8x128xf32>
    %115 = tpu.matmul %113, %114, %cst_84 {dimension_numbers = #tpu.dot_dimension_numbers<[1], [0], [0], [1], [0, 0, 1, 1], [], []>} : vector<8x128xbf16>, vector<128x128xbf16>, vector<8x128xf32> -> vector<8x128xf32>
    %116 = vector.extract_strided_slice %0 {offsets = [4, 0], sizes = [1, 128], strides = [1, 1]} : vector<5x192xf32> to vector<1x128xf32>
    %117 = vector.broadcast %116 : vector<1x128xf32> to vector<8x128xf32>
    %118 = arith.addf %115, %117 : vector<8x128xf32>
    %119 = arith.addf %118, %112 : vector<8x128xf32>
    %c0_85 = arith.constant 0 : index
    %c0_86 = arith.constant 0 : index
    %120 = vector.load %arg12[%c0_85, %c0_86] : memref<8x128xf32, #tpu.memory_space<vmem>>, vector<8x128xf32>
    tpu.vector_store %arg12[%c0_85, %c0_86], %119 {strides = array<i32>} : memref<8x128xf32, #tpu.memory_space<vmem>>, vector<8x128xf32>,
    return
  }
  func.func @transform_0(%arg0: i32) -> (i32, i32) {
    %c0_i32 = arith.constant 0 : i32
    %c0_i32_0 = arith.constant 0 : i32
    return %arg0, %c0_i32 : i32, i32
  }
  func.func @transform_1(%arg0: i32) -> (i32, i32) {
    %c0_i32 = arith.constant 0 : i32
    %c0_i32_0 = arith.constant 0 : i32
    %c0_i32_1 = arith.constant 0 : i32
    return %c0_i32, %c0_i32_0 : i32, i32
  }
  func.func @transform_2(%arg0: i32) -> (i32, i32, i32) {
    %c0_i32 = arith.constant 0 : i32
    %c0_i32_0 = arith.constant 0 : i32
    %c0_i32_1 = arith.constant 0 : i32
    %c0_i32_2 = arith.constant 0 : i32
    return %c0_i32, %c0_i32_0, %c0_i32_1 : i32, i32, i32
  }
  func.func @transform_3(%arg0: i32) -> (i32, i32, i32) {
    %c0_i32 = arith.constant 0 : i32
    %c0_i32_0 = arith.constant 0 : i32
    %c0_i32_1 = arith.constant 0 : i32
    %c0_i32_2 = arith.constant 0 : i32
    return %c0_i32, %c0_i32_0, %c0_i32_1 : i32, i32, i32
  }
  func.func @transform_4(%arg0: i32) -> (i32, i32) {
    %c0_i32 = arith.constant 0 : i32
    %c0_i32_0 = arith.constant 0 : i32
    %c0_i32_1 = arith.constant 0 : i32
    return %c0_i32, %c0_i32_0 : i32, i32
  }
  func.func @transform_5(%arg0: i32) -> (i32, i32) {
    %c0_i32 = arith.constant 0 : i32
    %c0_i32_0 = arith.constant 0 : i32
    %c0_i32_1 = arith.constant 0 : i32
    return %c0_i32, %c0_i32_0 : i32, i32
  }
  func.func @transform_6(%arg0: i32) -> (i32, i32, i32) {
    %c0_i32 = arith.constant 0 : i32
    %c0_i32_0 = arith.constant 0 : i32
    %c0_i32_1 = arith.constant 0 : i32
    %c0_i32_2 = arith.constant 0 : i32
    return %c0_i32, %c0_i32_0, %c0_i32_1 : i32, i32, i32
  }
  func.func @transform_7(%arg0: i32) -> (i32, i32, i32) {
    %c0_i32 = arith.constant 0 : i32
    %c0_i32_0 = arith.constant 0 : i32
    %c0_i32_1 = arith.constant 0 : i32
    %c0_i32_2 = arith.constant 0 : i32
    return %c0_i32, %c0_i32_0, %c0_i32_1 : i32, i32, i32
  }
  func.func @transform_8(%arg0: i32) -> (i32, i32, i32) {
    %c0_i32 = arith.constant 0 : i32
    %c0_i32_0 = arith.constant 0 : i32
    %c0_i32_1 = arith.constant 0 : i32
    %c0_i32_2 = arith.constant 0 : i32
    return %c0_i32, %c0_i32_0, %c0_i32_1 : i32, i32, i32
  }
  func.func @transform_9(%arg0: i32) -> (i32, i32, i32) {
    %c0_i32 = arith.constant 0 : i32
    %c0_i32_0 = arith.constant 0 : i32
    %c0_i32_1 = arith.constant 0 : i32
    %c0_i32_2 = arith.constant 0 : i32
    return %c0_i32, %c0_i32_0, %c0_i32_1 : i32, i32, i32
  }
  func.func @transform_10(%arg0: i32) -> (i32, i32) {
    %c0_i32 = arith.constant 0 : i32
    %c0_i32_0 = arith.constant 0 : i32
    %c0_i32_1 = arith.constant 0 : i32
    return %c0_i32, %c0_i32_0 : i32, i32
  }
  func.func @transform_11(%arg0: i32) -> (i32, i32) {
    %c0_i32 = arith.constant 0 : i32
    %c0_i32_0 = arith.constant 0 : i32
    return %arg0, %c0_i32 : i32, i32
  }
}

</mosaic_0001>

<llo_original>
// kernel: _lambda_.1
$region0: #{_lambda_.1}
  #allocation0 [shape = 'u32[]', space=smem, size = 0x4, offset = 0x4, fixed_abs, tag = 'smem constant byte address 0x4 - core index']
  #allocation1 [shape = 'u32[144,128]{1,0:T(1,128)}', space=vmem, size = 0x12000, scoped, tag = 'internal scratch']
  %s0 = inlined_call_operand.vmem [shape: bf16[448,28], index: 0, kind: input, shape index: {}]
  %s1 = inlined_call_operand.vmem [shape: bf16[140,192], index: 1, kind: input, shape index: {}]
  %s2 = inlined_call_operand.vmem [shape: bf16[5,96,128], index: 2, kind: input, shape index: {}]
  %s3 = inlined_call_operand.vmem [shape: bf16[4,64,128], index: 3, kind: input, shape index: {}]
  %s4 = inlined_call_operand.vmem [shape: bf16[128,128], index: 4, kind: input, shape index: {}]
  %s5 = inlined_call_operand.vmem [shape: bf16[128,128], index: 5, kind: input, shape index: {}]
  %s6 = inlined_call_operand.vmem [shape: bf16[2,96,192], index: 6, kind: input, shape index: {}]
  %s7 = inlined_call_operand.vmem [shape: bf16[2,192,96], index: 7, kind: input, shape index: {}]
  %s8 = inlined_call_operand.vmem [shape: bf16[2,32,64], index: 8, kind: input, shape index: {}]
  %s9 = inlined_call_operand.vmem [shape: bf16[2,128,64], index: 9, kind: input, shape index: {}]
  %s10 = inlined_call_operand.vmem [shape: f32[5,192], index: 10, kind: input, shape index: {}]
  %s11 = inlined_call_operand.vmem [shape: f32[16,128], index: 11, kind: output, shape index: {}]
  %s12 = sld [smem:[#allocation0]]
  $region77: #{_lambda_.1} parent=0
    _
  %s14 = ssub.s32 1, %s12
  %s15 = scalar_select 0, %s14, %s12
  loop: start=0, step=1, limit=4
  $region2: #{_lambda_.1} parent=0 // loop_pre_header
    _
  $region3: #{_lambda_.1} parent=0 // loop_header
    %s17 = sphi 0, %s21
    %p18 = scmp.ge.s32.totalorder %s17, 4
    %s27 = sphi 0, %s29
    %s30 = sphi 0, %s27
    %s31 = sphi 0, %s30
    %s47 = sphi 0, %s31
    %s51 = sphi 0, %s51
    %s53 = sphi 0, %s51
    %s54 = sphi 0, %s53
    %s68 = sphi 0, %s54
    %s72 = sphi 0, %s72
    %s74 = sphi 0, %s72
    %s75 = sphi 0, %s74
    %s89 = sphi 0, %s75
    %s93 = sphi 0, %s93
    %s95 = sphi 0, %s93
    %s96 = sphi 0, %s95
    %s110 = sphi 0, %s96
    %s114 = sphi 0, %s114
    %s116 = sphi 0, %s114
    %s117 = sphi 0, %s116
    %s131 = sphi 0, %s117
    %s135 = sphi 0, %s135
    %s137 = sphi 0, %s135
    %s138 = sphi 0, %s137
    %s152 = sphi 0, %s138
    %s156 = sphi 0, %s156
    %s158 = sphi 0, %s156
    %s159 = sphi 0, %s158
    %s173 = sphi 0, %s159
    %s177 = sphi 0, %s177
    %s179 = sphi 0, %s177
    %s180 = sphi 0, %s179
    %s194 = sphi 0, %s180
    %s198 = sphi 0, %s198
    %s200 = sphi 0, %s198
    %s201 = sphi 0, %s200
    %s215 = sphi 0, %s201
    %s219 = sphi 0, %s219
    %s221 = sphi 0, %s219
    %s222 = sphi 0, %s221
    %s236 = sphi 0, %s222
    %s240 = sphi 0, %s240
    %s242 = sphi 0, %s240
    %s243 = sphi 0, %s242
    %s257 = sphi 0, %s243
    %s263 = sphi 0, %s265
    %s266 = sphi 0, %s263
    %s267 = sphi 0, %s266
    %s283 = sphi 0, %s267
  $region4: #{_lambda_.1} parent=0 // loop_header_branch
    %20 = sbr.rel (%p18) target = $region8
  $region5: #{_lambda_.1} parent=0 // loop_body
    %s22 = ssub.s32 %s17, 1
    %s23 = ssub.s32 %s17, 2
    %s24 = sadd.s32 %s17, 1
    %s25 = ssub.s32 %s17, %s24
    %p26 = scmp.eq.s32.totalorder %s25, 0
    %s28 = sadd.s32 %s27, 1
    %s29 = scalar_select %p26, %s27, %s28
    %p32 = pneg %p26
    %p33 = scmp.eq.s32.totalorder %s17, 1
    %p34 = por %p32, %p33
    %p35 = scmp.ne.s32.totalorder %s27, %s30
    %p36 = scmp.eq.s32.totalorder %s17, 0
    %p37 = por %p35, %p36
    %p38 = scmp.ne.s32.totalorder %s27, %s30
    %p39 = scmp.eq.s32.totalorder %s22, 1
    %p40 = por %p38, %p39
    %p41 = scmp.ne.s32.totalorder %s30, %s31
    %p42 = scmp.eq.s32.totalorder %s22, 0
    %p43 = por %p41, %p42
    %p44 = scmp.ne.s32.totalorder %s30, %s31
    %p45 = scmp.eq.s32.totalorder %s23, 1
    %p46 = por %p44, %p45
    %p48 = scmp.ne.s32.totalorder %s31, %s47
    %p49 = scmp.eq.s32.totalorder %s23, 0
    %p50 = por %p48, %p49
    %s52 = sadd.s32 %s51, 1
    %p55 = scmp.eq.s32.totalorder %s17, 1
    %p56 = scmp.ne.s32.totalorder %s51, %s53
    %p57 = scmp.eq.s32.totalorder %s17, 0
    %p58 = por %p56, %p57
    %p59 = scmp.ne.s32.totalorder %s51, %s53
    %p60 = scmp.eq.s32.totalorder %s22, 1
    %p61 = por %p59, %p60
    %p62 = scmp.ne.s32.totalorder %s53, %s54
    %p63 = scmp.eq.s32.totalorder %s22, 0
    %p64 = por %p62, %p63
    %p65 = scmp.ne.s32.totalorder %s53, %s54
    %p66 = scmp.eq.s32.totalorder %s23, 1
    %p67 = por %p65, %p66
    %p69 = scmp.ne.s32.totalorder %s54, %s68
    %p70 = scmp.eq.s32.totalorder %s23, 0
    %p71 = por %p69, %p70
    %s73 = sadd.s32 %s72, 1
    %p76 = scmp.eq.s32.totalorder %s17, 1
    %p77 = scmp.ne.s32.totalorder %s72, %s74
    %p78 = scmp.eq.s32.totalorder %s17, 0
    %p79 = por %p77, %p78
    %p80 = scmp.ne.s32.totalorder %s72, %s74
    %p81 = scmp.eq.s32.totalorder %s22, 1
    %p82 = por %p80, %p81
    %p83 = scmp.ne.s32.totalorder %s74, %s75
    %p84 = scmp.eq.s32.totalorder %s22, 0
    %p85 = por %p83, %p84
    %p86 = scmp.ne.s32.totalorder %s74, %s75
    %p87 = scmp.eq.s32.totalorder %s23, 1
    %p88 = por %p86, %p87
    %p90 = scmp.ne.s32.totalorder %s75, %s89
    %p91 = scmp.eq.s32.totalorder %s23, 0
    %p92 = por %p90, %p91
    %s94 = sadd.s32 %s93, 1
    %p97 = scmp.eq.s32.totalorder %s17, 1
    %p98 = scmp.ne.s32.totalorder %s93, %s95
    %p99 = scmp.eq.s32.totalorder %s17, 0
    %p100 = por %p98, %p99
    %p101 = scmp.ne.s32.totalorder %s93, %s95
    %p102 = scmp.eq.s32.totalorder %s22, 1
    %p103 = por %p101, %p102
    %p104 = scmp.ne.s32.totalorder %s95, %s96
    %p105 = scmp.eq.s32.totalorder %s22, 0
    %p106 = por %p104, %p105
    %p107 = scmp.ne.s32.totalorder %s95, %s96
    %p108 = scmp.eq.s32.totalorder %s23, 1
    %p109 = por %p107, %p108
    %p111 = scmp.ne.s32.totalorder %s96, %s110
    %p112 = scmp.eq.s32.totalorder %s23, 0
    %p113 = por %p111, %p112
    %s115 = sadd.s32 %s114, 1
    %p118 = scmp.eq.s32.totalorder %s17, 1
    %p119 = scmp.ne.s32.totalorder %s114, %s116
    %p120 = scmp.eq.s32.totalorder %s17, 0
    %p121 = por %p119, %p120
    %p122 = scmp.ne.s32.totalorder %s114, %s116
    %p123 = scmp.eq.s32.totalorder %s22, 1
    %p124 = por %p122, %p123
    %p125 = scmp.ne.s32.totalorder %s116, %s117
    %p126 = scmp.eq.s32.totalorder %s22, 0
    %p127 = por %p125, %p126
    %p128 = scmp.ne.s32.totalorder %s116, %s117
    %p129 = scmp.eq.s32.totalorder %s23, 1
    %p130 = por %p128, %p129
    %p132 = scmp.ne.s32.totalorder %s117, %s131
    %p133 = scmp.eq.s32.totalorder %s23, 0
    %p134 = por %p132, %p133
    %s136 = sadd.s32 %s135, 1
    %p139 = scmp.eq.s32.totalorder %s17, 1
    %p140 = scmp.ne.s32.totalorder %s135, %s137
    %p141 = scmp.eq.s32.totalorder %s17, 0
    %p142 = por %p140, %p141
    %p143 = scmp.ne.s32.totalorder %s135, %s137
    %p144 = scmp.eq.s32.totalorder %s22, 1
    %p145 = por %p143, %p144
    %p146 = scmp.ne.s32.totalorder %s137, %s138
    %p147 = scmp.eq.s32.totalorder %s22, 0
    %p148 = por %p146, %p147
    %p149 = scmp.ne.s32.totalorder %s137, %s138
    %p150 = scmp.eq.s32.totalorder %s23, 1
    %p151 = por %p149, %p150
    %p153 = scmp.ne.s32.totalorder %s138, %s152
    %p154 = scmp.eq.s32.totalorder %s23, 0
    %p155 = por %p153, %p154
    %s157 = sadd.s32 %s156, 1
    %p160 = scmp.eq.s32.totalorder %s17, 1
    %p161 = scmp.ne.s32.totalorder %s156, %s158
    %p162 = scmp.eq.s32.totalorder %s17, 0
    %p163 = por %p161, %p162
    %p164 = scmp.ne.s32.totalorder %s156, %s158
    %p165 = scmp.eq.s32.totalorder %s22, 1
    %p166 = por %p164, %p165
    %p167 = scmp.ne.s32.totalorder %s158, %s159
    %p168 = scmp.eq.s32.totalorder %s22, 0
    %p169 = por %p167, %p168
    %p170 = scmp.ne.s32.totalorder %s158, %s159
    %p171 = scmp.eq.s32.totalorder %s23, 1
    %p172 = por %p170, %p171
    %p174 = scmp.ne.s32.totalorder %s159, %s173
    %p175 = scmp.eq.s32.totalorder %s23, 0
    %p176 = por %p174, %p175
    %s178 = sadd.s32 %s177, 1
    %p181 = scmp.eq.s32.totalorder %s17, 1
    %p182 = scmp.ne.s32.totalorder %s177, %s179
    %p183 = scmp.eq.s32.totalorder %s17, 0
    %p184 = por %p182, %p183
    %p185 = scmp.ne.s32.totalorder %s177, %s179
    %p186 = scmp.eq.s32.totalorder %s22, 1
    %p187 = por %p185, %p186
    %p188 = scmp.ne.s32.totalorder %s179, %s180
    %p189 = scmp.eq.s32.totalorder %s22, 0
    %p190 = por %p188, %p189
    %p191 = scmp.ne.s32.totalorder %s179, %s180
    %p192 = scmp.eq.s32.totalorder %s23, 1
    %p193 = por %p191, %p192
    %p195 = scmp.ne.s32.totalorder %s180, %s194
    %p196 = scmp.eq.s32.totalorder %s23, 0
    %p197 = por %p195, %p196
    %s199 = sadd.s32 %s198, 1
    %p202 = scmp.eq.s32.totalorder %s17, 1
    %p203 = scmp.ne.s32.totalorder %s198, %s200
    %p204 = scmp.eq.s32.totalorder %s17, 0
    %p205 = por %p203, %p204
    %p206 = scmp.ne.s32.totalorder %s198, %s200
    %p207 = scmp.eq.s32.totalorder %s22, 1
    %p208 = por %p206, %p207
    %p209 = scmp.ne.s32.totalorder %s200, %s201
    %p210 = scmp.eq.s32.totalorder %s22, 0
    %p211 = por %p209, %p210
    %p212 = scmp.ne.s32.totalorder %s200, %s201
    %p213 = scmp.eq.s32.totalorder %s23, 1
    %p214 = por %p212, %p213
    %p216 = scmp.ne.s32.totalorder %s201, %s215
    %p217 = scmp.eq.s32.totalorder %s23, 0
    %p218 = por %p216, %p217
    %s220 = sadd.s32 %s219, 1
    %p223 = scmp.eq.s32.totalorder %s17, 1
    %p224 = scmp.ne.s32.totalorder %s219, %s221
    %p225 = scmp.eq.s32.totalorder %s17, 0
    %p226 = por %p224, %p225
    %p227 = scmp.ne.s32.totalorder %s219, %s221
    %p228 = scmp.eq.s32.totalorder %s22, 1
    %p229 = por %p227, %p228
    %p230 = scmp.ne.s32.totalorder %s221, %s222
    %p231 = scmp.eq.s32.totalorder %s22, 0
    %p232 = por %p230, %p231
    %p233 = scmp.ne.s32.totalorder %s221, %s222
    %p234 = scmp.eq.s32.totalorder %s23, 1
    %p235 = por %p233, %p234
    %p237 = scmp.ne.s32.totalorder %s222, %s236
    %p238 = scmp.eq.s32.totalorder %s23, 0
    %p239 = por %p237, %p238
    %s241 = sadd.s32 %s240, 1
    %p244 = scmp.eq.s32.totalorder %s17, 1
    %p245 = scmp.ne.s32.totalorder %s240, %s242
    %p246 = scmp.eq.s32.totalorder %s17, 0
    %p247 = por %p245, %p246
    %p248 = scmp.ne.s32.totalorder %s240, %s242
    %p249 = scmp.eq.s32.totalorder %s22, 1
    %p250 = por %p248, %p249
    %p251 = scmp.ne.s32.totalorder %s242, %s243
    %p252 = scmp.eq.s32.totalorder %s22, 0
    %p253 = por %p251, %p252
    %p254 = scmp.ne.s32.totalorder %s242, %s243
    %p255 = scmp.eq.s32.totalorder %s23, 1
    %p256 = por %p254, %p255
    %p258 = scmp.ne.s32.totalorder %s243, %s257
    %p259 = scmp.eq.s32.totalorder %s23, 0
    %p260 = por %p258, %p259
    %s261 = ssub.s32 %s17, %s24
    %p262 = scmp.eq.s32.totalorder %s261, 0
    %s264 = sadd.s32 %s263, 1
    %s265 = scalar_select %p262, %s263, %s264
    %p268 = pneg %p262
    %p269 = scmp.eq.s32.totalorder %s17, 1
    %p270 = por %p268, %p269
    %p271 = scmp.ne.s32.totalorder %s263, %s266
    %p272 = scmp.eq.s32.totalorder %s17, 0
    %p273 = por %p271, %p272
    %p274 = scmp.ne.s32.totalorder %s263, %s266
    %p275 = scmp.eq.s32.totalorder %s22, 1
    %p276 = por %p274, %p275
    %p277 = scmp.ne.s32.totalorder %s266, %s267
    %p278 = scmp.eq.s32.totalorder %s22, 0
    %p279 = por %p277, %p278
    %p280 = scmp.ne.s32.totalorder %s266, %s267
    %p281 = scmp.eq.s32.totalorder %s23, 1
    %p282 = por %p280, %p281
    %p284 = scmp.ne.s32.totalorder %s267, %s283
    %p285 = scmp.eq.s32.totalorder %s23, 0
    %p286 = por %p284, %p285
    %p287 = scmp.le.s32.totalorder 1, %s17
    %p288 = scmp.lt.s32.totalorder %s17, 3
    %p289 = pnand %p287, %p288
    %p290 = pneg %p289
    // Predicated region
    $region9: #{_lambda_.1} parent=5 // pred_check
      _
    $region10: #{_lambda_.1} parent=5 // pred_check_branch
      %292 = sbr.rel (%p289) target = $region12
    $region11: #{_lambda_.1} parent=5 // pred_region
      %s293 = ssub.s32 %s17, 1
      // Predicated region
      $region13: #{_lambda_.1} parent=11 // pred_check
        %p294 = pneg %p64
      $region14: #{_lambda_.1} parent=11 // pred_check_branch
        %296 = sbr.rel (%p294) target = $region16
      $region15: #{_lambda_.1} parent=11 // pred_region
        _
      $region16: #{_lambda_.1} parent=11 // pred_fallthru
        _
      // Predicated region
      $region17: #{_lambda_.1} parent=11 // pred_check
        %p297 = pneg %p85
      $region18: #{_lambda_.1} parent=11 // pred_check_branch
        %299 = sbr.rel (%p297) target = $region20
      $region19: #{_lambda_.1} parent=11 // pred_region
        _
      $region20: #{_lambda_.1} parent=11 // pred_fallthru
        _
      // Predicated region
      $region21: #{_lambda_.1} parent=11 // pred_check
        %p300 = pneg %p106
      $region22: #{_lambda_.1} parent=11 // pred_check_branch
        %302 = sbr.rel (%p300) target = $region24
      $region23: #{_lambda_.1} parent=11 // pred_region
        _
      $region24: #{_lambda_.1} parent=11 // pred_fallthru
        _
      // Predicated region
      $region25: #{_lambda_.1} parent=11 // pred_check
        %p303 = pneg %p127
      $region26: #{_lambda_.1} parent=11 // pred_check_branch
        %305 = sbr.rel (%p303) target = $region28
      $region27: #{_lambda_.1} parent=11 // pred_region
        _
      $region28: #{_lambda_.1} parent=11 // pred_fallthru
        _
      // Predicated region
      $region29: #{_lambda_.1} parent=11 // pred_check
        %p306 = pneg %p148
      $region30: #{_lambda_.1} parent=11 // pred_check_branch
        %308 = sbr.rel (%p306) target = $region32
      $region31: #{_lambda_.1} parent=11 // pred_region
        _
      $region32: #{_lambda_.1} parent=11 // pred_fallthru
        _
      // Predicated region
      $region33: #{_lambda_.1} parent=11 // pred_check
        %p309 = pneg %p169
      $region34: #{_lambda_.1} parent=11 // pred_check_branch
        %311 = sbr.rel (%p309) target = $region36
      $region35: #{_lambda_.1} parent=11 // pred_region
        _
      $region36: #{_lambda_.1} parent=11 // pred_fallthru
        _
      // Predicated region
      $region37: #{_lambda_.1} parent=11 // pred_check
        %p312 = pneg %p190
      $region38: #{_lambda_.1} parent=11 // pred_check_branch
        %314 = sbr.rel (%p312) target = $region40
      $region39: #{_lambda_.1} parent=11 // pred_region
        _
      $region40: #{_lambda_.1} parent=11 // pred_fallthru
        _
      // Predicated region
      $region41: #{_lambda_.1} parent=11 // pred_check
        %p315 = pneg %p211
      $region42: #{_lambda_.1} parent=11 // pred_check_branch
        %317 = sbr.rel (%p315) target = $region44
      $region43: #{_lambda_.1} parent=11 // pred_region
        _
      $region44: #{_lambda_.1} parent=11 // pred_fallthru
        _
      // Predicated region
      $region45: #{_lambda_.1} parent=11 // pred_check
        %p318 = pneg %p232
      $region46: #{_lambda_.1} parent=11 // pred_check_branch
        %320 = sbr.rel (%p318) target = $region48
      $region47: #{_lambda_.1} parent=11 // pred_region
        _
      $region48: #{_lambda_.1} parent=11 // pred_fallthru
        _
      // Predicated region
      $region49: #{_lambda_.1} parent=11 // pred_check
        %p321 = pneg %p253
      $region50: #{_lambda_.1} parent=11 // pred_check_branch
        %323 = sbr.rel (%p321) target = $region52
      $region51: #{_lambda_.1} parent=11 // pred_region
        _
      $region52: #{_lambda_.1} parent=11 // pred_fallthru
        _
    $region12: #{_lambda_.1} parent=5 // pred_fallthru
      _
    %p324 = scmp.lt.s32.totalorder %s17, 2
    // Predicated region
    $region53: #{_lambda_.1} parent=5 // pred_check
      %p325 = pneg %p324
    $region54: #{_lambda_.1} parent=5 // pred_check_branch
      %327 = sbr.rel (%p325) target = $region56
    $region55: #{_lambda_.1} parent=5 // pred_region
      // Predicated region
      $region57: #{_lambda_.1} parent=55 // pred_check
        %p328 = pneg %p37
      $region58: #{_lambda_.1} parent=55 // pred_check_branch
        %330 = sbr.rel (%p328) target = $region60
      $region59: #{_lambda_.1} parent=55 // pred_region
        %s331 = smul.u32 28, %s17
        %p332 = scmp.lt.s32.totalorder %s331, 55
        %s333 = scalar_select %p332, %s331, 55
        %s334 = smul.addr %s333, 4
        %s335 = scalar_lea.vmem %s0, %s334
        %s336 = smul.u32 28, %s17
      $region60: #{_lambda_.1} parent=55 // pred_fallthru
        _
    $region56: #{_lambda_.1} parent=5 // pred_fallthru
      _
    %p337 = scmp.le.s32.totalorder 1, %s17
    %p338 = scmp.lt.s32.totalorder %s17, 3
    %p339 = pnand %p337, %p338
    %p340 = pneg %p339
    // Predicated region
    $region61: #{_lambda_.1} parent=5 // pred_check
      _
    $region62: #{_lambda_.1} parent=5 // pred_check_branch
      %342 = sbr.rel (%p339) target = $region64
    $region63: #{_lambda_.1} parent=5 // pred_region
      %s343 = ssub.s32 %s17, 1
      %s344 = smul.u32 28, %s22
      %p345 = scmp.lt.s32.totalorder %s344, 55
      %s346 = scalar_select %p345, %s344, 55
      %s347 = smul.addr %s346, 4
      %s348 = scalar_lea.vmem %s0, %s347
      %p349 = pneg %p43
      %p350 = pneg %p40
      %p351 = pneg %p64
      %p352 = pneg %p61
      %p353 = pneg %p85
      %p354 = pneg %p82
      %p355 = pneg %p106
      %p356 = pneg %p103
      %p357 = pneg %p127
      %p358 = pneg %p124
      %p359 = pneg %p148
      %p360 = pneg %p145
      %p361 = pneg %p169
      %p362 = pneg %p166
      %p363 = pneg %p190
      %p364 = pneg %p187
      %p365 = pneg %p211
      %p366 = pneg %p208
      %p367 = pneg %p232
      %p368 = pneg %p229
      %p369 = pneg %p253
      %p370 = pneg %p250
      %p371 = pneg %p279
      %p372 = pneg %p276
      %p373 = scmp.lt.s32.totalorder %s22, 1
      %s374 = scalar_select %p373, %s22, 1
      %s375 = smul.addr %s374, 8
      %s376 = scalar_lea.vmem %s11, %s375
      %s377 = smul.u32 28, %s22
      %p378 = scmp.lt.s32.totalorder %s377, 55
      %s379 = scalar_select %p378, %s377, 55
      %s380 = smul.addr %s379, 4
      %s381 = scalar_lea.vmem %s0, %s380
      %s382 = smul.u32 28, %s22
      %p383 = scmp.lt.s32.totalorder %s22, 1
      %s384 = scalar_select %p383, %s22, 1
      %s385 = smul.addr %s384, 8
      %s386 = scalar_lea.vmem %s11, %s385
      %v388 = vld [vmem:[%s10] sm:$0x1f]
      %v389 = vld [vmem:[%s10 + $0x8] sm:$0x1f]
      %v390 = vld [vmem:[%s381] sm:$0xf]
      %v391 = vld [vmem:[%s381 + $0x4] sm:$0xf]
      %v392 = vld [vmem:[%s381 + $0x8] sm:$0xf]
      %v393 = vld [vmem:[%s381 + $0xc] sm:$0xf]
      %v394 = vld [vmem:[%s381 + $0x10] sm:$0xf]
      %v395 = vld [vmem:[%s381 + $0x14] sm:$0xf]
      %v396 = vld [vmem:[%s381 + $0x18] sm:$0xf]
      %v397 = vld [vmem:[%s381 + $0x1c] sm:$0xf]
      %v398 = vld [vmem:[%s381 + $0x20] sm:$0xf]
      %v399 = vld [vmem:[%s381 + $0x24] sm:$0xf]
      %v400 = vld [vmem:[%s381 + $0x28] sm:$0xf]
      %v401 = vld [vmem:[%s381 + $0x2c] sm:$0xf]
      %v402 = vld [vmem:[%s381 + $0x30] sm:$0xf]
      %v403 = vld [vmem:[%s381 + $0x34] sm:$0xf]
      %v404 = vld [vmem:[%s381 + $0x38] sm:$0xf]
      %v405 = vld [vmem:[%s381 + $0x3c] sm:$0xf]
      %v406 = vld [vmem:[%s381 + $0x40] sm:$0xf]
      %v407 = vld [vmem:[%s381 + $0x44] sm:$0xf]
      %v408 = vld [vmem:[%s381 + $0x48] sm:$0xf]
      %v409 = vld [vmem:[%s381 + $0x4c] sm:$0xf]
      %v410 = vld [vmem:[%s381 + $0x50] sm:$0xf]
      %v411 = vld [vmem:[%s381 + $0x54] sm:$0xf]
      %v412 = vld [vmem:[%s381 + $0x58] sm:$0xf]
      %v413 = vld [vmem:[%s381 + $0x5c] sm:$0xf]
      %v414 = vld [vmem:[%s381 + $0x60] sm:$0xf]
      %v415 = vld [vmem:[%s381 + $0x64] sm:$0xf]
      %v416 = vld [vmem:[%s381 + $0x68] sm:$0xf]
      %v417 = vld [vmem:[%s381 + $0x6c] sm:$0xf]
      %v442 = vunpack.c.l.b16 %v390
      %v443 = vunpack.c.l.b16 %v391
      %v444 = vunpack.c.l.b16 %v392
      %v445 = vunpack.c.l.b16 %v393
      %v446 = vunpack.c.l.b16 %v394
      %v447 = vunpack.c.l.b16 %v395
      %v448 = vunpack.c.l.b16 %v396
      %v449 = vunpack.c.l.b16 %v397
      %v450 = vunpack.c.l.b16 %v398
      %v451 = vunpack.c.l.b16 %v399
      %v452 = vunpack.c.l.b16 %v400
      %v453 = vunpack.c.l.b16 %v401
      %v454 = vunpack.c.l.b16 %v402
      %v455 = vunpack.c.l.b16 %v403
      %v456 = vunpack.c.l.b16 %v404
      %v457 = vunpack.c.l.b16 %v405
      %v458 = vunpack.c.l.b16 %v406
      %v459 = vunpack.c.l.b16 %v407
      %v460 = vunpack.c.l.b16 %v408
      %v461 = vunpack.c.l.b16 %v409
      %v462 = vunpack.c.l.b16 %v410
      %v463 = vunpack.c.l.b16 %v411
      %v464 = vunpack.c.l.b16 %v412
      %v465 = vunpack.c.l.b16 %v413
      %v466 = vpack.c.b16 %v443, %v442
      %v467 = vpack.c.b16 %v445, %v444
      %v468 = vpack.c.b16 %v447, %v446
      %v469 = vpack.c.b16 %v449, %v448
      %v470 = vpack.c.b16 %v451, %v450
      %v471 = vpack.c.b16 %v453, %v452
      %v472 = vpack.c.b16 %v455, %v454
      %v473 = vpack.c.b16 %v457, %v456
      %v474 = vpack.c.b16 %v459, %v458
      %v475 = vpack.c.b16 %v461, %v460
      %v476 = vpack.c.b16 %v463, %v462
      %v477 = vpack.c.b16 %v465, %v464
      %v479 = vunpack.c.l.b16 %v414
      %v480 = vpack.c.b16 %v444, %v443
      %v481 = vpack.c.b16 %v446, %v445
      %v482 = vpack.c.b16 %v448, %v447
      %v483 = vpack.c.b16 %v450, %v449
      %v484 = vpack.c.b16 %v452, %v451
      %v485 = vpack.c.b16 %v454, %v453
      %v486 = vpack.c.b16 %v456, %v455
      %v487 = vpack.c.b16 %v458, %v457
      %v488 = vpack.c.b16 %v460, %v459
      %v489 = vpack.c.b16 %v462, %v461
      %v490 = vpack.c.b16 %v464, %v463
      %v491 = vpack.c.b16 %v479, %v465
      %492 = vrot.lane.b32.xlu0 %v480, 28
      %v493 = vpop.permute.xlu0 %492
      %494 = vrot.lane.b32.xlu0 %v481, 28
      %v495 = vpop.permute.xlu0 %494
      %496 = vrot.lane.b32.xlu0 %v482, 28
      %v497 = vpop.permute.xlu0 %496
      %498 = vrot.lane.b32.xlu0 %v483, 28
      %v499 = vpop.permute.xlu0 %498
      %500 = vrot.lane.b32.xlu0 %v484, 28
      %v501 = vpop.permute.xlu0 %500
      %502 = vrot.lane.b32.xlu0 %v485, 28
      %v503 = vpop.permute.xlu0 %502
      %504 = vrot.lane.b32.xlu0 %v486, 28
      %v505 = vpop.permute.xlu0 %504
      %506 = vrot.lane.b32.xlu0 %v487, 28
      %v507 = vpop.permute.xlu0 %506
      %508 = vrot.lane.b32.xlu0 %v488, 28
      %v509 = vpop.permute.xlu0 %508
      %510 = vrot.lane.b32.xlu0 %v489, 28
      %v511 = vpop.permute.xlu0 %510
      %512 = vrot.lane.b32.xlu0 %v490, 28
      %v513 = vpop.permute.xlu0 %512
      %514 = vrot.lane.b32.xlu0 %v491, 28
      %v515 = vpop.permute.xlu0 %514
      %v517 = vunpack.c.l.b16 %v415
      %v518 = vpack.c.b16 %v517, %v479
      %519 = vrot.lane.b32.xlu0 %v467, 56
      %v520 = vpop.permute.xlu0 %519
      %521 = vrot.lane.b32.xlu0 %v468, 56
      %v522 = vpop.permute.xlu0 %521
      %523 = vrot.lane.b32.xlu0 %v469, 56
      %v524 = vpop.permute.xlu0 %523
      %525 = vrot.lane.b32.xlu0 %v470, 56
      %v526 = vpop.permute.xlu0 %525
      %527 = vrot.lane.b32.xlu0 %v471, 56
      %v528 = vpop.permute.xlu0 %527
      %529 = vrot.lane.b32.xlu0 %v472, 56
      %v530 = vpop.permute.xlu0 %529
      %531 = vrot.lane.b32.xlu0 %v473, 56
      %v532 = vpop.permute.xlu0 %531
      %533 = vrot.lane.b32.xlu0 %v474, 56
      %v534 = vpop.permute.xlu0 %533
      %535 = vrot.lane.b32.xlu0 %v475, 56
      %v536 = vpop.permute.xlu0 %535
      %537 = vrot.lane.b32.xlu0 %v476, 56
      %v538 = vpop.permute.xlu0 %537
      %539 = vrot.lane.b32.xlu0 %v477, 56
      %v540 = vpop.permute.xlu0 %539
      %541 = vrot.lane.b32.xlu0 %v518, 56
      %v542 = vpop.permute.xlu0 %541
      %v544 = vunpack.c.l.b16 %v416
      %v545 = vpack.c.b16 %v544, %v517
      %546 = vrot.lane.b32.xlu0 %v481, 84
      %v547 = vpop.permute.xlu0 %546
      %548 = vrot.lane.b32.xlu0 %v482, 84
      %v549 = vpop.permute.xlu0 %548
      %550 = vrot.lane.b32.xlu0 %v483, 84
      %v551 = vpop.permute.xlu0 %550
      %552 = vrot.lane.b32.xlu0 %v484, 84
      %v553 = vpop.permute.xlu0 %552
      %554 = vrot.lane.b32.xlu0 %v485, 84
      %v555 = vpop.permute.xlu0 %554
      %556 = vrot.lane.b32.xlu0 %v486, 84
      %v557 = vpop.permute.xlu0 %556
      %558 = vrot.lane.b32.xlu0 %v487, 84
      %v559 = vpop.permute.xlu0 %558
      %560 = vrot.lane.b32.xlu0 %v488, 84
      %v561 = vpop.permute.xlu0 %560
      %562 = vrot.lane.b32.xlu0 %v489, 84
      %v563 = vpop.permute.xlu0 %562
      %564 = vrot.lane.b32.xlu0 %v490, 84
      %v565 = vpop.permute.xlu0 %564
      %566 = vrot.lane.b32.xlu0 %v491, 84
      %v567 = vpop.permute.xlu0 %566
      %568 = vrot.lane.b32.xlu0 %v545, 84
      %v569 = vpop.permute.xlu0 %568
      %v571 = vunpack.c.l.b16 %v417
      %v572 = vpack.c.b16 %v571, %v544
      %573 = vrot.lane.b32.xlu0 %v468, 112
      %v574 = vpop.permute.xlu0 %573
      %575 = vrot.lane.b32.xlu0 %v469, 112
      %v576 = vpop.permute.xlu0 %575
      %577 = vrot.lane.b32.xlu0 %v470, 112
      %v578 = vpop.permute.xlu0 %577
      %579 = vrot.lane.b32.xlu0 %v471, 112
      %v580 = vpop.permute.xlu0 %579
      %581 = vrot.lane.b32.xlu0 %v472, 112
      %v582 = vpop.permute.xlu0 %581
      %583 = vrot.lane.b32.xlu0 %v473, 112
      %v584 = vpop.permute.xlu0 %583
      %585 = vrot.lane.b32.xlu0 %v474, 112
      %v586 = vpop.permute.xlu0 %585
      %587 = vrot.lane.b32.xlu0 %v475, 112
      %v588 = vpop.permute.xlu0 %587
      %589 = vrot.lane.b32.xlu0 %v476, 112
      %v590 = vpop.permute.xlu0 %589
      %591 = vrot.lane.b32.xlu0 %v477, 112
      %v592 = vpop.permute.xlu0 %591
      %593 = vrot.lane.b32.xlu0 %v518, 112
      %v594 = vpop.permute.xlu0 %593
      %595 = vrot.lane.b32.xlu0 %v572, 112
      %v596 = vpop.permute.xlu0 %595
      %vm597 = vcmask 228352
      %v600 = vsel %vm597, %v466, %v493
      %v603 = vsel %vm597, %v467, %v495
      %v606 = vsel %vm597, %v468, %v497
      %v609 = vsel %vm597, %v469, %v499
      %v612 = vsel %vm597, %v470, %v501
      %v615 = vsel %vm597, %v471, %v503
      %v618 = vsel %vm597, %v472, %v505
      %v621 = vsel %vm597, %v473, %v507
      %v624 = vsel %vm597, %v474, %v509
      %v627 = vsel %vm597, %v475, %v511
      %v630 = vsel %vm597, %v476, %v513
      %v633 = vsel %vm597, %v477, %v515
      %vm634 = vcmask 457728
      %v636 = vsel %vm634, %v600, %v520
      %v638 = vsel %vm634, %v603, %v522
      %v640 = vsel %vm634, %v606, %v524
      %v642 = vsel %vm634, %v609, %v526
      %v644 = vsel %vm634, %v612, %v528
      %v646 = vsel %vm634, %v615, %v530
      %v648 = vsel %vm634, %v618, %v532
      %v650 = vsel %vm634, %v621, %v534
      %v652 = vsel %vm634, %v624, %v536
      %v654 = vsel %vm634, %v627, %v538
      %v656 = vsel %vm634, %v630, %v540
      %v658 = vsel %vm634, %v633, %v542
      %vm659 = vcmask 687104
      %v661 = vsel %vm659, %v636, %v547
      %v663 = vsel %vm659, %v638, %v549
      %v665 = vsel %vm659, %v640, %v551
      %v667 = vsel %vm659, %v642, %v553
      %v669 = vsel %vm659, %v644, %v555
      %v671 = vsel %vm659, %v646, %v557
      %v673 = vsel %vm659, %v648, %v559
      %v675 = vsel %vm659, %v650, %v561
      %v677 = vsel %vm659, %v652, %v563
      %v679 = vsel %vm659, %v654, %v565
      %v681 = vsel %vm659, %v656, %v567
      %v683 = vsel %vm659, %v658, %v569
      %vm684 = vcmask 916480
      %v686 = vsel %vm684, %v661, %v574
      %v689 = vsel %vm684, %v663, %v576
      %v692 = vsel %vm684, %v665, %v578
      %v695 = vsel %vm684, %v667, %v580
      %v698 = vsel %vm684, %v669, %v582
      %v701 = vsel %vm684, %v671, %v584
      %v704 = vsel %vm684, %v673, %v586
      %v707 = vsel %vm684, %v675, %v588
      %v710 = vsel %vm684, %v677, %v590
      %v713 = vsel %vm684, %v679, %v592
      %v716 = vsel %vm684, %v681, %v594
      %v719 = vsel %vm684, %v683, %v596
      %v721 = vld [vmem:[%s1] sm:$0xff]
      %v722 = vld [vmem:[%s1 + $0x8] sm:$0xff]
      %v723 = vld [vmem:[%s1 + $0x10] sm:$0xff]
      %v724 = vld [vmem:[%s1 + $0x18] sm:$0xff]
      %v725 = vld [vmem:[%s1 + $0x20] sm:$0xff]
      %v726 = vld [vmem:[%s1 + $0x28] sm:$0xff]
      %v727 = vld [vmem:[%s1 + $0x30] sm:$0xff]
      %v728 = vld [vmem:[%s1 + $0x38] sm:$0xff]
      %v729 = vld [vmem:[%s1 + $0x40] sm:$0xff]
      %v730 = vld [vmem:[%s1 + $0x48] sm:$0xff]
      %v731 = vld [vmem:[%s1 + $0x50] sm:$0xff]
      %v732 = vld [vmem:[%s1 + $0x58] sm:$0xff]
      %v733 = vld [vmem:[%s1 + $0x60] sm:$0xff]
      %v734 = vld [vmem:[%s1 + $0x68] sm:$0xff]
      %v735 = vld [vmem:[%s1 + $0x70] sm:$0xff]
      %v736 = vld [vmem:[%s1 + $0x78] sm:$0xff]
      %v737 = vld [vmem:[%s1 + $0x80] sm:$0xff]
      %v738 = vld [vmem:[%s1 + $0x88] sm:$0x33]
      %v739 = vlaneseq
      %v740 = vshrl.u32 %v739, 7
      %v741 = vsub.s32 0, %v740
      %v742 = vrot.slane %v388, %v741
      %v743 = vlaneseq
      %v744 = vshrl.u32 %v743, 7
      %v745 = vsub.s32 0, %v744
      %v746 = vrot.slane %v389, %v745
      %v765 = vunpack.c.l.b16 %v721
      %v766 = vunpack.c.h.b16 %v721
      %v767 = vunpack.c.l.b16 %v722
      %v768 = vunpack.c.h.b16 %v722
      %v769 = vunpack.c.l.b16 %v723
      %v770 = vunpack.c.h.b16 %v723
      %v771 = vunpack.c.l.b16 %v724
      %v772 = vunpack.c.h.b16 %v724
      %v773 = vunpack.c.l.b16 %v725
      %v774 = vunpack.c.h.b16 %v725
      %v775 = vunpack.c.l.b16 %v726
      %v776 = vunpack.c.h.b16 %v726
      %v777 = vunpack.c.l.b16 %v727
      %v778 = vunpack.c.h.b16 %v727
      %v779 = vunpack.c.l.b16 %v728
      %v780 = vunpack.c.h.b16 %v728
      %v781 = vunpack.c.l.b16 %v729
      %v782 = vunpack.c.h.b16 %v729
      %v783 = vunpack.c.l.b16 %v730
      %v784 = vunpack.c.h.b16 %v730
      %v785 = vunpack.c.l.b16 %v731
      %v786 = vunpack.c.h.b16 %v731
      %v787 = vunpack.c.l.b16 %v732
      %v788 = vunpack.c.h.b16 %v732
      %v789 = vunpack.c.l.b16 %v733
      %v790 = vunpack.c.h.b16 %v733
      %v791 = vunpack.c.l.b16 %v734
      %v792 = vunpack.c.h.b16 %v734
      %v793 = vunpack.c.l.b16 %v735
      %v794 = vunpack.c.h.b16 %v735
      %v795 = vunpack.c.l.b16 %v736
      %v796 = vunpack.c.h.b16 %v736
      %v797 = vunpack.c.l.b16 %v737
      %v798 = vunpack.c.h.b16 %v737
      %v799 = vunpack.c.l.b16 %v738
      %v800 = vunpack.c.h.b16 %v738
      %v801 = vpack.c.b16 %v767, %v765
      %v802 = vpack.c.b16 %v768, %v766
      %v803 = vpack.c.b16 %v771, %v769
      %v804 = vpack.c.b16 %v772, %v770
      %v805 = vpack.c.b16 %v775, %v773
      %v806 = vpack.c.b16 %v776, %v774
      %v807 = vpack.c.b16 %v779, %v777
      %v808 = vpack.c.b16 %v780, %v778
      %v809 = vpack.c.b16 %v783, %v781
      %v810 = vpack.c.b16 %v784, %v782
      %v811 = vpack.c.b16 %v787, %v785
      %v812 = vpack.c.b16 %v788, %v786
      %v813 = vpack.c.b16 %v791, %v789
      %v814 = vpack.c.b16 %v792, %v790
      %v815 = vpack.c.b16 %v795, %v793
      %v816 = vpack.c.b16 %v796, %v794
      %v817 = vpack.c.b16 %v799, %v797
      %v818 = vpack.c.b16 %v800, %v798
      %vm835 = vcmask 97280
      %v836 = vsel %vm835, %v574, 0
      %v838 = vsel %vm835, %v576, 0
      %v840 = vsel %vm835, %v578, 0
      %v842 = vsel %vm835, %v580, 0
      %v844 = vsel %vm835, %v582, 0
      %v846 = vsel %vm835, %v584, 0
      %v848 = vsel %vm835, %v586, 0
      %v850 = vsel %vm835, %v588, 0
      %v852 = vsel %vm835, %v590, 0
      %v854 = vsel %vm835, %v592, 0
      %v856 = vsel %vm835, %v594, 0
      %v858 = vsel %vm835, %v596, 0
      %vm860 = vcmask 1045504
      %v862 = vsel %vm860, %v817, 0
      %v865 = vsel %vm860, %v818, 0
      %867 = vmatprep.subr.bf16.mxu0 %v802
      %868 = vmatpush1.bf16.msra.mxu0 %v801
      %869 = vmatprep.subr.bf16.mxu0 %v804
      %870 = vmatpush1.bf16.msra.mxu0 %v803
      %871 = vmatprep.subr.bf16.mxu0 %v806
      %872 = vmatpush1.bf16.msra.mxu0 %v805
      %873 = vmatprep.subr.bf16.mxu0 %v808
      %874 = vmatpush1.bf16.msra.mxu0 %v807
      %875 = vmatprep.subr.bf16.mxu0 %v810
      %876 = vmatpush1.bf16.msra.mxu0 %v809
      %877 = vmatprep.subr.bf16.mxu0 %v812
      %878 = vmatpush1.bf16.msra.mxu0 %v811
      %879 = vmatprep.subr.bf16.mxu0 %v814
      %880 = vmatpush1.bf16.msra.mxu0 %v813
      %881 = vmatprep.subr.bf16.mxu0 %v816
      %882 = vmatpush1.bf16.msra.mxu0 %v815
      %883 = vmatprep.subr.bf16.mxu0 %v865
      %884 = vmatpush1.bf16.msra.mxu0 %v862
      %885 = vmatprep.subr.bf16.mxu0 0
      %886 = vmatpush1.bf16.msra.mxu0 0
      %887 = vmatprep.subr.bf16.mxu0 0
      %888 = vmatpush1.bf16.msra.mxu0 0
      %889 = vmatprep.subr.bf16.mxu0 0
      %890 = vmatpush1.bf16.msra.mxu0 0
      %891 = vmatprep.subr.bf16.mxu0 0
      %892 = vmatpush1.bf16.msra.mxu0 0
      %893 = vmatprep.subr.bf16.mxu0 0
      %894 = vmatpush1.bf16.msra.mxu0 0
      %895 = vmatprep.subr.bf16.mxu0 0
      %896 = vmatpush1.bf16.msra.mxu0 0
      %897 = vmatprep.subr.bf16.mxu0 0
      %898 = vmatpush1.bf16.msra.mxu0 0
      %899 = vmatprep.mubr.bf16.mxu0 %v836
      %900 = vmatmul.mubr.bf16.gmra.mrb[0].mxu0 %v686
      %v901 = vpop.f32.mrb[0].mxu0
      %v902 = vadd.f32 %v742, %v901
      %v903 = vpop.f32.mrb[0].mxu0
      %v904 = vadd.f32 %v746, %v903
      %v905 = vpop.f32.mrb[0].mxu0
      %v906 = vadd.f32 %v742, %v905
      %v907 = vpop.f32.mrb[0].mxu0
      %v908 = vadd.f32 %v746, %v907
      %909 = vmatprep.mubr.bf16.mxu0 %v838
      %910 = vmatmul.mubr.bf16.gmra.mrb[0].mxu0 %v689
      %v911 = vpop.f32.mrb[0].mxu0
      %v912 = vadd.f32 %v742, %v911
      %v913 = vpop.f32.mrb[0].mxu0
      %v914 = vadd.f32 %v746, %v913
      %v915 = vpop.f32.mrb[0].mxu0
      %v916 = vadd.f32 %v742, %v915
      %v917 = vpop.f32.mrb[0].mxu0
      %v918 = vadd.f32 %v746, %v917
      %919 = vmatprep.mubr.bf16.mxu0 %v840
      %920 = vmatmul.mubr.bf16.gmra.mrb[0].mxu0 %v692
      %v921 = vpop.f32.mrb[0].mxu0
      %v922 = vadd.f32 %v742, %v921
      %v923 = vpop.f32.mrb[0].mxu0
      %v924 = vadd.f32 %v746, %v923
      %v925 = vpop.f32.mrb[0].mxu0
      %v926 = vadd.f32 %v742, %v925
      %v927 = vpop.f32.mrb[0].mxu0
      %v928 = vadd.f32 %v746, %v927
      %929 = vmatprep.mubr.bf16.mxu0 %v842
      %930 = vmatmul.mubr.bf16.gmra.mrb[0].mxu0 %v695
      %v931 = vpop.f32.mrb[0].mxu0
      %v932 = vadd.f32 %v742, %v931
      %v933 = vpop.f32.mrb[0].mxu0
      %v934 = vadd.f32 %v746, %v933
      %v935 = vpop.f32.mrb[0].mxu0
      %v936 = vadd.f32 %v742, %v935
      %v937 = vpop.f32.mrb[0].mxu0
      %v938 = vadd.f32 %v746, %v937
      %939 = vmatprep.mubr.bf16.mxu0 %v844
      %940 = vmatmul.mubr.bf16.gmra.mrb[0].mxu0 %v698
      %v941 = vpop.f32.mrb[0].mxu0
      %v942 = vadd.f32 %v742, %v941
      %v943 = vpop.f32.mrb[0].mxu0
      %v944 = vadd.f32 %v746, %v943
      %v945 = vpop.f32.mrb[0].mxu0
      %v946 = vadd.f32 %v742, %v945
      %v947 = vpop.f32.mrb[0].mxu0
      %v948 = vadd.f32 %v746, %v947
      %949 = vmatprep.mubr.bf16.mxu0 %v846
      %950 = vmatmul.mubr.bf16.gmra.mrb[0].mxu0 %v701
      %v951 = vpop.f32.mrb[0].mxu0
      %v952 = vadd.f32 %v742, %v951
      %v953 = vpop.f32.mrb[0].mxu0
      %v954 = vadd.f32 %v746, %v953
      %v955 = vpop.f32.mrb[0].mxu0
      %v956 = vadd.f32 %v742, %v955
      %v957 = vpop.f32.mrb[0].mxu0
      %v958 = vadd.f32 %v746, %v957
      %959 = vmatprep.mubr.bf16.mxu0 %v848
      %960 = vmatmul.mubr.bf16.gmra.mrb[0].mxu0 %v704
      %v961 = vpop.f32.mrb[0].mxu0
      %v962 = vadd.f32 %v742, %v961
      %v963 = vpop.f32.mrb[0].mxu0
      %v964 = vadd.f32 %v746, %v963
      %v965 = vpop.f32.mrb[0].mxu0
      %v966 = vadd.f32 %v742, %v965
      %v967 = vpop.f32.mrb[0].mxu0
      %v968 = vadd.f32 %v746, %v967
      %969 = vmatprep.mubr.bf16.mxu0 %v850
      %970 = vmatmul.mubr.bf16.gmra.mrb[0].mxu0 %v707
      %v971 = vpop.f32.mrb[0].mxu0
      %v972 = vadd.f32 %v742, %v971
      %v973 = vpop.f32.mrb[0].mxu0
      %v974 = vadd.f32 %v746, %v973
      %v975 = vpop.f32.mrb[0].mxu0
      %v976 = vadd.f32 %v742, %v975
      %v977 = vpop.f32.mrb[0].mxu0
      %v978 = vadd.f32 %v746, %v977
      %979 = vmatprep.mubr.bf16.mxu0 %v852
      %980 = vmatmul.mubr.bf16.gmra.mrb[0].mxu0 %v710
      %v981 = vpop.f32.mrb[0].mxu0
      %v982 = vadd.f32 %v742, %v981
      %v983 = vpop.f32.mrb[0].mxu0
      %v984 = vadd.f32 %v746, %v983
      %v985 = vpop.f32.mrb[0].mxu0
      %v986 = vadd.f32 %v742, %v985
      %v987 = vpop.f32.mrb[0].mxu0
      %v988 = vadd.f32 %v746, %v987
      %989 = vmatprep.mubr.bf16.mxu0 %v854
      %990 = vmatmul.mubr.bf16.gmra.mrb[0].mxu0 %v713
      %v991 = vpop.f32.mrb[0].mxu0
      %v992 = vadd.f32 %v742, %v991
      %v993 = vpop.f32.mrb[0].mxu0
      %v994 = vadd.f32 %v746, %v993
      %v995 = vpop.f32.mrb[0].mxu0
      %v996 = vadd.f32 %v742, %v995
      %v997 = vpop.f32.mrb[0].mxu0
      %v998 = vadd.f32 %v746, %v997
      %999 = vmatprep.mubr.bf16.mxu0 %v856
      %1000 = vmatmul.mubr.bf16.gmra.mrb[0].mxu0 %v716
      %v1001 = vpop.f32.mrb[0].mxu0
      %v1002 = vadd.f32 %v742, %v1001
      %v1003 = vpop.f32.mrb[0].mxu0
      %v1004 = vadd.f32 %v746, %v1003
      %v1005 = vpop.f32.mrb[0].mxu0
      %v1006 = vadd.f32 %v742, %v1005
      %v1007 = vpop.f32.mrb[0].mxu0
      %v1008 = vadd.f32 %v746, %v1007
      %1009 = vmatprep.mubr.bf16.mxu0 %v858
      %1010 = vmatmul.mubr.bf16.gmra.mrb[0].mxu0 %v719
      %v1011 = vpop.f32.mrb[0].mxu0
      %v1012 = vadd.f32 %v742, %v1011
      %v1013 = vpop.f32.mrb[0].mxu0
      %v1014 = vadd.f32 %v746, %v1013
      %v1015 = vpop.f32.mrb[0].mxu0
      %v1016 = vadd.f32 %v742, %v1015
      %v1017 = vpop.f32.mrb[0].mxu0
      %v1018 = vadd.f32 %v746, %v1017
      %1019 = vdwg.mxu0
      %v1020 = vmax.f32 %v902, 0.0
      %v1021 = vmax.f32 %v904, 0.0
      %v1022 = vmax.f32 %v906, 0.0
      %v1023 = vmax.f32 %v908, 0.0
      %v1024 = vmax.f32 %v912, 0.0
      %v1025 = vmax.f32 %v914, 0.0
      %v1026 = vmax.f32 %v916, 0.0
      %v1027 = vmax.f32 %v918, 0.0
      %v1028 = vmax.f32 %v922, 0.0
      %v1029 = vmax.f32 %v924, 0.0
      %v1030 = vmax.f32 %v926, 0.0
      %v1031 = vmax.f32 %v928, 0.0
      %v1032 = vmax.f32 %v932, 0.0
      %v1033 = vmax.f32 %v934, 0.0
      %v1034 = vmax.f32 %v936, 0.0
      %v1035 = vmax.f32 %v938, 0.0
      %v1036 = vmax.f32 %v942, 0.0
      %v1037 = vmax.f32 %v944, 0.0
      %v1038 = vmax.f32 %v946, 0.0
      %v1039 = vmax.f32 %v948, 0.0
      %v1040 = vmax.f32 %v952, 0.0
      %v1041 = vmax.f32 %v954, 0.0
      %v1042 = vmax.f32 %v956, 0.0
      %v1043 = vmax.f32 %v958, 0.0
      %v1044 = vmax.f32 %v962, 0.0
      %v1045 = vmax.f32 %v964, 0.0
      %v1046 = vmax.f32 %v966, 0.0
      %v1047 = vmax.f32 %v968, 0.0
      %v1048 = vmax.f32 %v972, 0.0
      %v1049 = vmax.f32 %v974, 0.0
      %v1050 = vmax.f32 %v976, 0.0
      %v1051 = vmax.f32 %v978, 0.0
      %v1052 = vmax.f32 %v982, 0.0
      %v1053 = vmax.f32 %v984, 0.0
      %v1054 = vmax.f32 %v986, 0.0
      %v1055 = vmax.f32 %v988, 0.0
      %v1056 = vmax.f32 %v992, 0.0
      %v1057 = vmax.f32 %v994, 0.0
      %v1058 = vmax.f32 %v996, 0.0
      %v1059 = vmax.f32 %v998, 0.0
      %v1060 = vmax.f32 %v1002, 0.0
      %v1061 = vmax.f32 %v1004, 0.0
      %v1062 = vmax.f32 %v1006, 0.0
      %v1063 = vmax.f32 %v1008, 0.0
      %v1064 = vmax.f32 %v1012, 0.0
      %v1065 = vmax.f32 %v1014, 0.0
      %v1066 = vmax.f32 %v1016, 0.0
      %v1067 = vmax.f32 %v1018, 0.0
      %v1068 = vpack.c.bf16 %v1022, %v1020
      %v1069 = vpack.c.bf16 %v1023, %v1021
      %v1070 = vpack.c.bf16 %v1026, %v1024
      %v1071 = vpack.c.bf16 %v1027, %v1025
      %v1072 = vpack.c.bf16 %v1030, %v1028
      %v1073 = vpack.c.bf16 %v1031, %v1029
      %v1074 = vpack.c.bf16 %v1034, %v1032
      %v1075 = vpack.c.bf16 %v1035, %v1033
      %v1076 = vpack.c.bf16 %v1038, %v1036
      %v1077 = vpack.c.bf16 %v1039, %v1037
      %v1078 = vpack.c.bf16 %v1042, %v1040
      %v1079 = vpack.c.bf16 %v1043, %v1041
      %v1080 = vpack.c.bf16 %v1046, %v1044
      %v1081 = vpack.c.bf16 %v1047, %v1045
      %v1082 = vpack.c.bf16 %v1050, %v1048
      %v1083 = vpack.c.bf16 %v1051, %v1049
      %v1084 = vpack.c.bf16 %v1054, %v1052
      %v1085 = vpack.c.bf16 %v1055, %v1053
      %v1086 = vpack.c.bf16 %v1058, %v1056
      %v1087 = vpack.c.bf16 %v1059, %v1057
      %v1088 = vpack.c.bf16 %v1062, %v1060
      %v1089 = vpack.c.bf16 %v1063, %v1061
      %v1090 = vpack.c.bf16 %v1066, %v1064
      %v1091 = vpack.c.bf16 %v1067, %v1065
      %v1092 = vld [vmem:[%s6] sm:$0xff]
      %v1093 = vld [vmem:[%s6 + $0x8] sm:$0xff]
      %v1094 = vld [vmem:[%s6 + $0x10] sm:$0xff]
      %v1095 = vld [vmem:[%s6 + $0x18] sm:$0xff]
      %v1096 = vld [vmem:[%s6 + $0x20] sm:$0xff]
      %v1097 = vld [vmem:[%s6 + $0x28] sm:$0xff]
      %v1098 = vld [vmem:[%s6 + $0x30] sm:$0xff]
      %v1099 = vld [vmem:[%s6 + $0x38] sm:$0xff]
      %v1100 = vld [vmem:[%s6 + $0x40] sm:$0xff]
      %v1101 = vld [vmem:[%s6 + $0x48] sm:$0xff]
      %v1102 = vld [vmem:[%s6 + $0x50] sm:$0xff]
      %v1103 = vld [vmem:[%s6 + $0x58] sm:$0xff]
      %v1116 = vunpack.c.l.b16 %v1092
      %v1117 = vunpack.c.h.b16 %v1092
      %v1118 = vunpack.c.l.b16 %v1093
      %v1119 = vunpack.c.h.b16 %v1093
      %v1120 = vunpack.c.l.b16 %v1094
      %v1121 = vunpack.c.h.b16 %v1094
      %v1122 = vunpack.c.l.b16 %v1095
      %v1123 = vunpack.c.h.b16 %v1095
      %v1124 = vunpack.c.l.b16 %v1096
      %v1125 = vunpack.c.h.b16 %v1096
      %v1126 = vunpack.c.l.b16 %v1097
      %v1127 = vunpack.c.h.b16 %v1097
      %v1128 = vunpack.c.l.b16 %v1098
      %v1129 = vunpack.c.h.b16 %v1098
      %v1130 = vunpack.c.l.b16 %v1099
      %v1131 = vunpack.c.h.b16 %v1099
      %v1132 = vunpack.c.l.b16 %v1100
      %v1133 = vunpack.c.h.b16 %v1100
      %v1134 = vunpack.c.l.b16 %v1101
      %v1135 = vunpack.c.h.b16 %v1101
      %v1136 = vunpack.c.l.b16 %v1102
      %v1137 = vunpack.c.h.b16 %v1102
      %v1138 = vunpack.c.l.b16 %v1103
      %v1139 = vunpack.c.h.b16 %v1103
      %v1140 = vpack.c.b16 %v1118, %v1116
      %v1141 = vpack.c.b16 %v1119, %v1117
      %v1142 = vpack.c.b16 %v1122, %v1120
      %v1143 = vpack.c.b16 %v1123, %v1121
      %v1144 = vpack.c.b16 %v1126, %v1124
      %v1145 = vpack.c.b16 %v1127, %v1125
      %v1146 = vpack.c.b16 %v1130, %v1128
      %v1147 = vpack.c.b16 %v1131, %v1129
      %v1148 = vpack.c.b16 %v1134, %v1132
      %v1149 = vpack.c.b16 %v1135, %v1133
      %v1150 = vpack.c.b16 %v1138, %v1136
      %v1151 = vpack.c.b16 %v1139, %v1137
      %vm1158 = vcmask 523264
      %v1160 = vsel %vm1158, %v1141, 0
      %v1163 = vsel %vm1158, %v1143, 0
      %v1166 = vsel %vm1158, %v1145, 0
      %v1169 = vsel %vm1158, %v1147, 0
      %v1172 = vsel %vm1158, %v1149, 0
      %v1175 = vsel %vm1158, %v1151, 0
      %1177 = vmatprep.subr.bf16.mxu0 %v1069
      %1178 = vmatpush1.bf16.msra.mxu0 %v1068
      %1179 = vmatprep.subr.bf16.mxu0 %v1071
      %1180 = vmatpush1.bf16.msra.mxu0 %v1070
      %1181 = vmatprep.subr.bf16.mxu0 %v1073
      %1182 = vmatpush1.bf16.msra.mxu0 %v1072
      %1183 = vmatprep.subr.bf16.mxu0 %v1075
      %1184 = vmatpush1.bf16.msra.mxu0 %v1074
      %1185 = vmatprep.subr.bf16.mxu0 %v1077
      %1186 = vmatpush1.bf16.msra.mxu0 %v1076
      %1187 = vmatprep.subr.bf16.mxu0 %v1079
      %1188 = vmatpush1.bf16.msra.mxu0 %v1078
      %1189 = vmatprep.subr.bf16.mxu0 %v1081
      %1190 = vmatpush1.bf16.msra.mxu0 %v1080
      %1191 = vmatprep.subr.bf16.mxu0 %v1083
      %1192 = vmatpush1.bf16.msra.mxu0 %v1082
      %1193 = vmatprep.subr.bf16.mxu0 %v1085
      %1194 = vmatpush1.bf16.msra.mxu0 %v1084
      %1195 = vmatprep.subr.bf16.mxu0 %v1087
      %1196 = vmatpush1.bf16.msra.mxu0 %v1086
      %1197 = vmatprep.subr.bf16.mxu0 %v1089
      %1198 = vmatpush1.bf16.msra.mxu0 %v1088
      %1199 = vmatprep.subr.bf16.mxu0 %v1091
      %1200 = vmatpush1.bf16.msra.mxu0 %v1090
      %1201 = vmatprep.subr.bf16.mxu0 0
      %1202 = vmatpush1.bf16.msra.mxu0 0
      %1203 = vmatprep.subr.bf16.mxu0 0
      %1204 = vmatpush1.bf16.msra.mxu0 0
      %1205 = vmatprep.subr.bf16.mxu0 0
      %1206 = vmatpush1.bf16.msra.mxu0 0
      %1207 = vmatprep.subr.bf16.mxu0 0
      %1208 = vmatpush1.bf16.msra.mxu0 0
      %1209 = vmatprep.mubr.bf16.mxu0 %v1160
      %1210 = vmatmul.mubr.bf16.gmra.mrb[0].mxu0 %v1140
      %v1211 = vpop.f32.mrb[0].mxu0
      %v1212 = vadd.f32 0.0, %v1211
      %v1213 = vpop.f32.mrb[0].mxu0
      %v1214 = vadd.f32 0.0, %v1213
      %v1215 = vpop.f32.mrb[0].mxu0
      %v1216 = vadd.f32 0.0, %v1215
      %v1217 = vpop.f32.mrb[0].mxu0
      %v1218 = vadd.f32 0.0, %v1217
      %1219 = vmatprep.mubr.bf16.mxu0 %v1163
      %1220 = vmatmul.mubr.bf16.gmra.mrb[0].mxu0 %v1142
      %v1221 = vpop.f32.mrb[0].mxu0
      %v1222 = vadd.f32 0.0, %v1221
      %v1223 = vpop.f32.mrb[0].mxu0
      %v1224 = vadd.f32 0.0, %v1223
      %v1225 = vpop.f32.mrb[0].mxu0
      %v1226 = vadd.f32 0.0, %v1225
      %v1227 = vpop.f32.mrb[0].mxu0
      %v1228 = vadd.f32 0.0, %v1227
      %1229 = vmatprep.mubr.bf16.mxu0 %v1166
      %1230 = vmatmul.mubr.bf16.gmra.mrb[0].mxu0 %v1144
      %v1231 = vpop.f32.mrb[0].mxu0
      %v1232 = vadd.f32 0.0, %v1231
      %v1233 = vpop.f32.mrb[0].mxu0
      %v1234 = vadd.f32 0.0, %v1233
      %v1235 = vpop.f32.mrb[0].mxu0
      %v1236 = vadd.f32 0.0, %v1235
      %v1237 = vpop.f32.mrb[0].mxu0
      %v1238 = vadd.f32 0.0, %v1237
      %1239 = vmatprep.mubr.bf16.mxu0 %v1169
      %1240 = vmatmul.mubr.bf16.gmra.mrb[0].mxu0 %v1146
      %v1241 = vpop.f32.mrb[0].mxu0
      %v1242 = vadd.f32 0.0, %v1241
      %v1243 = vpop.f32.mrb[0].mxu0
      %v1244 = vadd.f32 0.0, %v1243
      %v1245 = vpop.f32.mrb[0].mxu0
      %v1246 = vadd.f32 0.0, %v1245
      %v1247 = vpop.f32.mrb[0].mxu0
      %v1248 = vadd.f32 0.0, %v1247
      %1249 = vmatprep.mubr.bf16.mxu0 %v1172
      %1250 = vmatmul.mubr.bf16.gmra.mrb[0].mxu0 %v1148
      %v1251 = vpop.f32.mrb[0].mxu0
      %v1252 = vadd.f32 0.0, %v1251
      %v1253 = vpop.f32.mrb[0].mxu0
      %v1254 = vadd.f32 0.0, %v1253
      %v1255 = vpop.f32.mrb[0].mxu0
      %v1256 = vadd.f32 0.0, %v1255
      %v1257 = vpop.f32.mrb[0].mxu0
      %v1258 = vadd.f32 0.0, %v1257
      %1259 = vmatprep.mubr.bf16.mxu0 %v1175
      %1260 = vmatmul.mubr.bf16.gmra.mrb[0].mxu0 %v1150
      %v1261 = vpop.f32.mrb[0].mxu0
      %v1262 = vadd.f32 0.0, %v1261
      %v1263 = vpop.f32.mrb[0].mxu0
      %v1264 = vadd.f32 0.0, %v1263
      %v1265 = vpop.f32.mrb[0].mxu0
      %v1266 = vadd.f32 0.0, %v1265
      %v1267 = vpop.f32.mrb[0].mxu0
      %v1268 = vadd.f32 0.0, %v1267
      %1269 = vdwg.mxu0
      %s1270 = scalar_lea.vmem %s6, 96
      %v1271 = vld [vmem:[%s1270] sm:$0xff]
      %v1272 = vld [vmem:[%s1270 + $0x8] sm:$0xff]
      %v1273 = vld [vmem:[%s1270 + $0x10] sm:$0xff]
      %v1274 = vld [vmem:[%s1270 + $0x18] sm:$0xff]
      %v1275 = vld [vmem:[%s1270 + $0x20] sm:$0xff]
      %v1276 = vld [vmem:[%s1270 + $0x28] sm:$0xff]
      %v1277 = vld [vmem:[%s1270 + $0x30] sm:$0xff]
      %v1278 = vld [vmem:[%s1270 + $0x38] sm:$0xff]
      %v1279 = vld [vmem:[%s1270 + $0x40] sm:$0xff]
      %v1280 = vld [vmem:[%s1270 + $0x48] sm:$0xff]
      %v1281 = vld [vmem:[%s1270 + $0x50] sm:$0xff]
      %v1282 = vld [vmem:[%s1270 + $0x58] sm:$0xff]
      %v1295 = vunpack.c.l.b16 %v1271
      %v1296 = vunpack.c.h.b16 %v1271
      %v1297 = vunpack.c.l.b16 %v1272
      %v1298 = vunpack.c.h.b16 %v1272
      %v1299 = vunpack.c.l.b16 %v1273
      %v1300 = vunpack.c.h.b16 %v1273
      %v1301 = vunpack.c.l.b16 %v1274
      %v1302 = vunpack.c.h.b16 %v1274
      %v1303 = vunpack.c.l.b16 %v1275
      %v1304 = vunpack.c.h.b16 %v1275
      %v1305 = vunpack.c.l.b16 %v1276
      %v1306 = vunpack.c.h.b16 %v1276
      %v1307 = vunpack.c.l.b16 %v1277
      %v1308 = vunpack.c.h.b16 %v1277
      %v1309 = vunpack.c.l.b16 %v1278
      %v1310 = vunpack.c.h.b16 %v1278
      %v1311 = vunpack.c.l.b16 %v1279
      %v1312 = vunpack.c.h.b16 %v1279
      %v1313 = vunpack.c.l.b16 %v1280
      %v1314 = vunpack.c.h.b16 %v1280
      %v1315 = vunpack.c.l.b16 %v1281
      %v1316 = vunpack.c.h.b16 %v1281
      %v1317 = vunpack.c.l.b16 %v1282
      %v1318 = vunpack.c.h.b16 %v1282
      %v1319 = vpack.c.b16 %v1297, %v1295
      %v1320 = vpack.c.b16 %v1298, %v1296
      %v1321 = vpack.c.b16 %v1301, %v1299
      %v1322 = vpack.c.b16 %v1302, %v1300
      %v1323 = vpack.c.b16 %v1305, %v1303
      %v1324 = vpack.c.b16 %v1306, %v1304
      %v1325 = vpack.c.b16 %v1309, %v1307
      %v1326 = vpack.c.b16 %v1310, %v1308
      %v1327 = vpack.c.b16 %v1313, %v1311
      %v1328 = vpack.c.b16 %v1314, %v1312
      %v1329 = vpack.c.b16 %v1317, %v1315
      %v1330 = vpack.c.b16 %v1318, %v1316
      %v1338 = vsel %vm1158, %v1320, 0
      %v1341 = vsel %vm1158, %v1322, 0
      %v1344 = vsel %vm1158, %v1324, 0
      %v1347 = vsel %vm1158, %v1326, 0
      %v1350 = vsel %vm1158, %v1328, 0
      %v1353 = vsel %vm1158, %v1330, 0
      %1355 = vmatprep.subr.bf16.mxu0 %v1069
      %1356 = vmatpush1.bf16.msra.mxu0 %v1068
      %1357 = vmatprep.subr.bf16.mxu0 %v1071
      %1358 = vmatpush1.bf16.msra.mxu0 %v1070
      %1359 = vmatprep.subr.bf16.mxu0 %v1073
      %1360 = vmatpush1.bf16.msra.mxu0 %v1072
      %1361 = vmatprep.subr.bf16.mxu0 %v1075
      %1362 = vmatpush1.bf16.msra.mxu0 %v1074
      %1363 = vmatprep.subr.bf16.mxu0 %v1077
      %1364 = vmatpush1.bf16.msra.mxu0 %v1076
      %1365 = vmatprep.subr.bf16.mxu0 %v1079
      %1366 = vmatpush1.bf16.msra.mxu0 %v1078
      %1367 = vmatprep.subr.bf16.mxu0 %v1081
      %1368 = vmatpush1.bf16.msra.mxu0 %v1080
      %1369 = vmatprep.subr.bf16.mxu0 %v1083
      %1370 = vmatpush1.bf16.msra.mxu0 %v1082
      %1371 = vmatprep.subr.bf16.mxu0 %v1085
      %1372 = vmatpush1.bf16.msra.mxu0 %v1084
      %1373 = vmatprep.subr.bf16.mxu0 %v1087
      %1374 = vmatpush1.bf16.msra.mxu0 %v1086
      %1375 = vmatprep.subr.bf16.mxu0 %v1089
      %1376 = vmatpush1.bf16.msra.mxu0 %v1088
      %1377 = vmatprep.subr.bf16.mxu0 %v1091
      %1378 = vmatpush1.bf16.msra.mxu0 %v1090
      %1379 = vmatprep.subr.bf16.mxu0 0
      %1380 = vmatpush1.bf16.msra.mxu0 0
      %1381 = vmatprep.subr.bf16.mxu0 0
      %1382 = vmatpush1.bf16.msra.mxu0 0
      %1383 = vmatprep.subr.bf16.mxu0 0
      %1384 = vmatpush1.bf16.msra.mxu0 0
      %1385 = vmatprep.subr.bf16.mxu0 0
      %1386 = vmatpush1.bf16.msra.mxu0 0
      %1387 = vmatprep.mubr.bf16.mxu0 %v1338
      %1388 = vmatmul.mubr.bf16.gmra.mrb[0].mxu0 %v1319
      %v1389 = vpop.f32.mrb[0].mxu0
      %v1390 = vadd.f32 0.0, %v1389
      %v1391 = vpop.f32.mrb[0].mxu0
      %v1392 = vadd.f32 0.0, %v1391
      %v1393 = vpop.f32.mrb[0].mxu0
      %v1394 = vadd.f32 0.0, %v1393
      %v1395 = vpop.f32.mrb[0].mxu0
      %v1396 = vadd.f32 0.0, %v1395
      %1397 = vmatprep.mubr.bf16.mxu0 %v1341
      %1398 = vmatmul.mubr.bf16.gmra.mrb[0].mxu0 %v1321
      %v1399 = vpop.f32.mrb[0].mxu0
      %v1400 = vadd.f32 0.0, %v1399
      %v1401 = vpop.f32.mrb[0].mxu0
      %v1402 = vadd.f32 0.0, %v1401
      %v1403 = vpop.f32.mrb[0].mxu0
      %v1404 = vadd.f32 0.0, %v1403
      %v1405 = vpop.f32.mrb[0].mxu0
      %v1406 = vadd.f32 0.0, %v1405
      %1407 = vmatprep.mubr.bf16.mxu0 %v1344
      %1408 = vmatmul.mubr.bf16.gmra.mrb[0].mxu0 %v1323
      %v1409 = vpop.f32.mrb[0].mxu0
      %v1410 = vadd.f32 0.0, %v1409
      %v1411 = vpop.f32.mrb[0].mxu0
      %v1412 = vadd.f32 0.0, %v1411
      %v1413 = vpop.f32.mrb[0].mxu0
      %v1414 = vadd.f32 0.0, %v1413
      %v1415 = vpop.f32.mrb[0].mxu0
      %v1416 = vadd.f32 0.0, %v1415
      %1417 = vmatprep.mubr.bf16.mxu0 %v1347
      %1418 = vmatmul.mubr.bf16.gmra.mrb[0].mxu0 %v1325
      %v1419 = vpop.f32.mrb[0].mxu0
      %v1420 = vadd.f32 0.0, %v1419
      %v1421 = vpop.f32.mrb[0].mxu0
      %v1422 = vadd.f32 0.0, %v1421
      %v1423 = vpop.f32.mrb[0].mxu0
      %v1424 = vadd.f32 0.0, %v1423
      %v1425 = vpop.f32.mrb[0].mxu0
      %v1426 = vadd.f32 0.0, %v1425
      %1427 = vmatprep.mubr.bf16.mxu0 %v1350
      %1428 = vmatmul.mubr.bf16.gmra.mrb[0].mxu0 %v1327
      %v1429 = vpop.f32.mrb[0].mxu0
      %v1430 = vadd.f32 0.0, %v1429
      %v1431 = vpop.f32.mrb[0].mxu0
      %v1432 = vadd.f32 0.0, %v1431
      %v1433 = vpop.f32.mrb[0].mxu0
      %v1434 = vadd.f32 0.0, %v1433
      %v1435 = vpop.f32.mrb[0].mxu0
      %v1436 = vadd.f32 0.0, %v1435
      %1437 = vmatprep.mubr.bf16.mxu0 %v1353
      %1438 = vmatmul.mubr.bf16.gmra.mrb[0].mxu0 %v1329
      %v1439 = vpop.f32.mrb[0].mxu0
      %v1440 = vadd.f32 0.0, %v1439
      %v1441 = vpop.f32.mrb[0].mxu0
      %v1442 = vadd.f32 0.0, %v1441
      %v1443 = vpop.f32.mrb[0].mxu0
      %v1444 = vadd.f32 0.0, %v1443
      %v1445 = vpop.f32.mrb[0].mxu0
      %v1446 = vadd.f32 0.0, %v1445
      %1447 = vdwg.mxu0
      %v1448 = vmax.f32 %v1212, %v1390
      %v1449 = vmax.f32 %v1214, %v1392
      %v1450 = vmax.f32 %v1216, %v1394
      %v1451 = vmax.f32 %v1218, %v1396
      %v1452 = vmax.f32 %v1222, %v1400
      %v1453 = vmax.f32 %v1224, %v1402
      %v1454 = vmax.f32 %v1226, %v1404
      %v1455 = vmax.f32 %v1228, %v1406
      %v1456 = vmax.f32 %v1232, %v1410
      %v1457 = vmax.f32 %v1234, %v1412
      %v1458 = vmax.f32 %v1236, %v1414
      %v1459 = vmax.f32 %v1238, %v1416
      %v1460 = vmax.f32 %v1242, %v1420
      %v1461 = vmax.f32 %v1244, %v1422
      %v1462 = vmax.f32 %v1246, %v1424
      %v1463 = vmax.f32 %v1248, %v1426
      %v1464 = vmax.f32 %v1252, %v1430
      %v1465 = vmax.f32 %v1254, %v1432
      %v1466 = vmax.f32 %v1256, %v1434
      %v1467 = vmax.f32 %v1258, %v1436
      %v1468 = vmax.f32 %v1262, %v1440
      %v1469 = vmax.f32 %v1264, %v1442
      %v1470 = vmax.f32 %v1266, %v1444
      %v1471 = vmax.f32 %v1268, %v1446
      %v1472 = vpack.c.bf16 %v1450, %v1448
      %v1473 = vpack.c.bf16 %v1451, %v1449
      %v1474 = vpack.c.bf16 %v1454, %v1452
      %v1475 = vpack.c.bf16 %v1455, %v1453
      %v1476 = vpack.c.bf16 %v1458, %v1456
      %v1477 = vpack.c.bf16 %v1459, %v1457
      %v1478 = vpack.c.bf16 %v1462, %v1460
      %v1479 = vpack.c.bf16 %v1463, %v1461
      %v1480 = vpack.c.bf16 %v1466, %v1464
      %v1481 = vpack.c.bf16 %v1467, %v1465
      %v1482 = vpack.c.bf16 %v1470, %v1468
      %v1483 = vpack.c.bf16 %v1471, %v1469
      %v1484 = vld [vmem:[%s7] sm:$0xf]
      %v1485 = vld [vmem:[%s7 + $0x4] sm:$0xf]
      %v1486 = vld [vmem:[%s7 + $0x8] sm:$0xf]
      %v1487 = vld [vmem:[%s7 + $0xc] sm:$0xf]
      %v1488 = vld [vmem:[%s7 + $0x10] sm:$0xf]
      %v1489 = vld [vmem:[%s7 + $0x14] sm:$0xf]
      %v1490 = vld [vmem:[%s7 + $0x18] sm:$0xf]
      %v1491 = vld [vmem:[%s7 + $0x1c] sm:$0xf]
      %v1492 = vld [vmem:[%s7 + $0x20] sm:$0xf]
      %v1493 = vld [vmem:[%s7 + $0x24] sm:$0xf]
      %v1494 = vld [vmem:[%s7 + $0x28] sm:$0xf]
      %v1495 = vld [vmem:[%s7 + $0x2c] sm:$0xf]
      %v1496 = vld [vmem:[%s7 + $0x30] sm:$0xf]
      %v1497 = vld [vmem:[%s7 + $0x34] sm:$0xf]
      %v1498 = vld [vmem:[%s7 + $0x38] sm:$0xf]
      %v1499 = vld [vmem:[%s7 + $0x3c] sm:$0xf]
      %v1500 = vld [vmem:[%s7 + $0x40] sm:$0xf]
      %v1501 = vld [vmem:[%s7 + $0x44] sm:$0xf]
      %v1502 = vld [vmem:[%s7 + $0x48] sm:$0xf]
      %v1503 = vld [vmem:[%s7 + $0x4c] sm:$0xf]
      %v1504 = vld [vmem:[%s7 + $0x50] sm:$0xf]
      %v1505 = vld [vmem:[%s7 + $0x54] sm:$0xf]
      %v1506 = vld [vmem:[%s7 + $0x58] sm:$0xf]
      %v1507 = vld [vmem:[%s7 + $0x5c] sm:$0xf]
      %v1532 = vunpack.c.l.b16 %v1484
      %v1533 = vunpack.c.l.b16 %v1485
      %v1534 = vunpack.c.l.b16 %v1486
      %v1535 = vunpack.c.l.b16 %v1487
      %v1536 = vunpack.c.l.b16 %v1488
      %v1537 = vunpack.c.l.b16 %v1489
      %v1538 = vunpack.c.l.b16 %v1490
      %v1539 = vunpack.c.l.b16 %v1491
      %v1540 = vunpack.c.l.b16 %v1492
      %v1541 = vunpack.c.l.b16 %v1493
      %v1542 = vunpack.c.l.b16 %v1494
      %v1543 = vunpack.c.l.b16 %v1495
      %v1544 = vunpack.c.l.b16 %v1496
      %v1545 = vunpack.c.l.b16 %v1497
      %v1546 = vunpack.c.l.b16 %v1498
      %v1547 = vunpack.c.l.b16 %v1499
      %v1548 = vunpack.c.l.b16 %v1500
      %v1549 = vunpack.c.l.b16 %v1501
      %v1550 = vunpack.c.l.b16 %v1502
      %v1551 = vunpack.c.l.b16 %v1503
      %v1552 = vunpack.c.l.b16 %v1504
      %v1553 = vunpack.c.l.b16 %v1505
      %v1554 = vunpack.c.l.b16 %v1506
      %v1555 = vunpack.c.l.b16 %v1507
      %v1556 = vpack.c.b16 %v1533, %v1532
      %v1557 = vpack.c.b16 %v1535, %v1534
      %v1558 = vpack.c.b16 %v1537, %v1536
      %v1559 = vpack.c.b16 %v1539, %v1538
      %v1560 = vpack.c.b16 %v1541, %v1540
      %v1561 = vpack.c.b16 %v1543, %v1542
      %v1562 = vpack.c.b16 %v1545, %v1544
      %v1563 = vpack.c.b16 %v1547, %v1546
      %v1564 = vpack.c.b16 %v1549, %v1548
      %v1565 = vpack.c.b16 %v1551, %v1550
      %v1566 = vpack.c.b16 %v1553, %v1552
      %v1567 = vpack.c.b16 %v1555, %v1554
      %v1581 = vsel %vm1158, %v1473, 0
      %v1584 = vsel %vm1158, %v1475, 0
      %v1587 = vsel %vm1158, %v1477, 0
      %v1590 = vsel %vm1158, %v1479, 0
      %v1593 = vsel %vm1158, %v1481, 0
      %v1596 = vsel %vm1158, %v1483, 0
      %1598 = vmatprep.subr.bf16.mxu0 0
      %1599 = vmatpush1.bf16.msra.mxu0 %v1556
      %1600 = vmatprep.subr.bf16.mxu0 0
      %1601 = vmatpush1.bf16.msra.mxu0 %v1557
      %1602 = vmatprep.subr.bf16.mxu0 0
      %1603 = vmatpush1.bf16.msra.mxu0 %v1558
      %1604 = vmatprep.subr.bf16.mxu0 0
      %1605 = vmatpush1.bf16.msra.mxu0 %v1559
      %1606 = vmatprep.subr.bf16.mxu0 0
      %1607 = vmatpush1.bf16.msra.mxu0 %v1560
      %1608 = vmatprep.subr.bf16.mxu0 0
      %1609 = vmatpush1.bf16.msra.mxu0 %v1561
      %1610 = vmatprep.subr.bf16.mxu0 0
      %1611 = vmatpush1.bf16.msra.mxu0 %v1562
      %1612 = vmatprep.subr.bf16.mxu0 0
      %1613 = vmatpush1.bf16.msra.mxu0 %v1563
      %1614 = vmatprep.subr.bf16.mxu0 0
      %1615 = vmatpush1.bf16.msra.mxu0 %v1564
      %1616 = vmatprep.subr.bf16.mxu0 0
      %1617 = vmatpush1.bf16.msra.mxu0 %v1565
      %1618 = vmatprep.subr.bf16.mxu0 0
      %1619 = vmatpush1.bf16.msra.mxu0 %v1566
      %1620 = vmatprep.subr.bf16.mxu0 0
      %1621 = vmatpush1.bf16.msra.mxu0 %v1567
      %1622 = vmatprep.subr.bf16.mxu0 0
      %1623 = vmatpush1.bf16.msra.mxu0 0
      %1624 = vmatprep.subr.bf16.mxu0 0
      %1625 = vmatpush1.bf16.msra.mxu0 0
      %1626 = vmatprep.subr.bf16.mxu0 0
      %1627 = vmatpush1.bf16.msra.mxu0 0
      %1628 = vmatprep.subr.bf16.mxu0 0
      %1629 = vmatpush1.bf16.msra.mxu0 0
      %1630 = vmatprep.mubr.bf16.mxu0 %v1581
      %1631 = vmatmul.mubr.bf16.gmra.mrb[0].mxu0 %v1472
      %v1632 = vpop.f32.mrb[0].mxu0
      %v1633 = vadd.f32 0.0, %v1632
      %v1634 = vpop.f32.mrb[0].mxu0
      %v1635 = vpop.f32.mrb[0].mxu0
      %v1636 = vadd.f32 0.0, %v1635
      %v1637 = vpop.f32.mrb[0].mxu0
      %1638 = vmatprep.mubr.bf16.mxu0 %v1584
      %1639 = vmatmul.mubr.bf16.gmra.mrb[0].mxu0 %v1474
      %v1640 = vpop.f32.mrb[0].mxu0
      %v1641 = vadd.f32 0.0, %v1640
      %v1642 = vpop.f32.mrb[0].mxu0
      %v1643 = vpop.f32.mrb[0].mxu0
      %v1644 = vadd.f32 0.0, %v1643
      %v1645 = vpop.f32.mrb[0].mxu0
      %1646 = vmatprep.mubr.bf16.mxu0 %v1587
      %1647 = vmatmul.mubr.bf16.gmra.mrb[0].mxu0 %v1476
      %v1648 = vpop.f32.mrb[0].mxu0
      %v1649 = vadd.f32 0.0, %v1648
      %v1650 = vpop.f32.mrb[0].mxu0
      %v1651 = vpop.f32.mrb[0].mxu0
      %v1652 = vadd.f32 0.0, %v1651
      %v1653 = vpop.f32.mrb[0].mxu0
      %1654 = vmatprep.mubr.bf16.mxu0 %v1590
      %1655 = vmatmul.mubr.bf16.gmra.mrb[0].mxu0 %v1478
      %v1656 = vpop.f32.mrb[0].mxu0
      %v1657 = vadd.f32 0.0, %v1656
      %v1658 = vpop.f32.mrb[0].mxu0
      %v1659 = vpop.f32.mrb[0].mxu0
      %v1660 = vadd.f32 0.0, %v1659
      %v1661 = vpop.f32.mrb[0].mxu0
      %1662 = vmatprep.mubr.bf16.mxu0 %v1593
      %1663 = vmatmul.mubr.bf16.gmra.mrb[0].mxu0 %v1480
      %v1664 = vpop.f32.mrb[0].mxu0
      %v1665 = vadd.f32 0.0, %v1664
      %v1666 = vpop.f32.mrb[0].mxu0
      %v1667 = vpop.f32.mrb[0].mxu0
      %v1668 = vadd.f32 0.0, %v1667
      %v1669 = vpop.f32.mrb[0].mxu0
      %1670 = vmatprep.mubr.bf16.mxu0 %v1596
      %1671 = vmatmul.mubr.bf16.gmra.mrb[0].mxu0 %v1482
      %v1672 = vpop.f32.mrb[0].mxu0
      %v1673 = vadd.f32 0.0, %v1672
      %v1674 = vpop.f32.mrb[0].mxu0
      %v1675 = vpop.f32.mrb[0].mxu0
      %v1676 = vadd.f32 0.0, %v1675
      %v1677 = vpop.f32.mrb[0].mxu0
      %1678 = vdwg.mxu0
      %s1679 = scalar_lea.vmem %s7, 96
      %v1680 = vld [vmem:[%s1679] sm:$0xf]
      %v1681 = vld [vmem:[%s1679 + $0x4] sm:$0xf]
      %v1682 = vld [vmem:[%s1679 + $0x8] sm:$0xf]
      %v1683 = vld [vmem:[%s1679 + $0xc] sm:$0xf]
      %v1684 = vld [vmem:[%s1679 + $0x10] sm:$0xf]
      %v1685 = vld [vmem:[%s1679 + $0x14] sm:$0xf]
      %v1686 = vld [vmem:[%s1679 + $0x18] sm:$0xf]
      %v1687 = vld [vmem:[%s1679 + $0x1c] sm:$0xf]
      %v1688 = vld [vmem:[%s1679 + $0x20] sm:$0xf]
      %v1689 = vld [vmem:[%s1679 + $0x24] sm:$0xf]
      %v1690 = vld [vmem:[%s1679 + $0x28] sm:$0xf]
      %v1691 = vld [vmem:[%s1679 + $0x2c] sm:$0xf]
      %v1692 = vld [vmem:[%s1679 + $0x30] sm:$0xf]
      %v1693 = vld [vmem:[%s1679 + $0x34] sm:$0xf]
      %v1694 = vld [vmem:[%s1679 + $0x38] sm:$0xf]
      %v1695 = vld [vmem:[%s1679 + $0x3c] sm:$0xf]
      %v1696 = vld [vmem:[%s1679 + $0x40] sm:$0xf]
      %v1697 = vld [vmem:[%s1679 + $0x44] sm:$0xf]
      %v1698 = vld [vmem:[%s1679 + $0x48] sm:$0xf]
      %v1699 = vld [vmem:[%s1679 + $0x4c] sm:$0xf]
      %v1700 = vld [vmem:[%s1679 + $0x50] sm:$0xf]
      %v1701 = vld [vmem:[%s1679 + $0x54] sm:$0xf]
      %v1702 = vld [vmem:[%s1679 + $0x58] sm:$0xf]
      %v1703 = vld [vmem:[%s1679 + $0x5c] sm:$0xf]
      %v1728 = vunpack.c.l.b16 %v1680
      %v1729 = vunpack.c.l.b16 %v1681
      %v1730 = vunpack.c.l.b16 %v1682
      %v1731 = vunpack.c.l.b16 %v1683
      %v1732 = vunpack.c.l.b16 %v1684
      %v1733 = vunpack.c.l.b16 %v1685
      %v1734 = vunpack.c.l.b16 %v1686
      %v1735 = vunpack.c.l.b16 %v1687
      %v1736 = vunpack.c.l.b16 %v1688
      %v1737 = vunpack.c.l.b16 %v1689
      %v1738 = vunpack.c.l.b16 %v1690
      %v1739 = vunpack.c.l.b16 %v1691
      %v1740 = vunpack.c.l.b16 %v1692
      %v1741 = vunpack.c.l.b16 %v1693
      %v1742 = vunpack.c.l.b16 %v1694
      %v1743 = vunpack.c.l.b16 %v1695
      %v1744 = vunpack.c.l.b16 %v1696
      %v1745 = vunpack.c.l.b16 %v1697
      %v1746 = vunpack.c.l.b16 %v1698
      %v1747 = vunpack.c.l.b16 %v1699
      %v1748 = vunpack.c.l.b16 %v1700
      %v1749 = vunpack.c.l.b16 %v1701
      %v1750 = vunpack.c.l.b16 %v1702
      %v1751 = vunpack.c.l.b16 %v1703
      %v1752 = vpack.c.b16 %v1729, %v1728
      %v1753 = vpack.c.b16 %v1731, %v1730
      %v1754 = vpack.c.b16 %v1733, %v1732
      %v1755 = vpack.c.b16 %v1735, %v1734
      %v1756 = vpack.c.b16 %v1737, %v1736
      %v1757 = vpack.c.b16 %v1739, %v1738
      %v1758 = vpack.c.b16 %v1741, %v1740
      %v1759 = vpack.c.b16 %v1743, %v1742
      %v1760 = vpack.c.b16 %v1745, %v1744
      %v1761 = vpack.c.b16 %v1747, %v1746
      %v1762 = vpack.c.b16 %v1749, %v1748
      %v1763 = vpack.c.b16 %v1751, %v1750
      %1776 = vmatprep.subr.bf16.mxu0 0
      %1777 = vmatpush1.bf16.msra.mxu0 %v1752
      %1778 = vmatprep.subr.bf16.mxu0 0
      %1779 = vmatpush1.bf16.msra.mxu0 %v1753
      %1780 = vmatprep.subr.bf16.mxu0 0
      %1781 = vmatpush1.bf16.msra.mxu0 %v1754
      %1782 = vmatprep.subr.bf16.mxu0 0
      %1783 = vmatpush1.bf16.msra.mxu0 %v1755
      %1784 = vmatprep.subr.bf16.mxu0 0
      %1785 = vmatpush1.bf16.msra.mxu0 %v1756
      %1786 = vmatprep.subr.bf16.mxu0 0
      %1787 = vmatpush1.bf16.msra.mxu0 %v1757
      %1788 = vmatprep.subr.bf16.mxu0 0
      %1789 = vmatpush1.bf16.msra.mxu0 %v1758
      %1790 = vmatprep.subr.bf16.mxu0 0
      %1791 = vmatpush1.bf16.msra.mxu0 %v1759
      %1792 = vmatprep.subr.bf16.mxu0 0
      %1793 = vmatpush1.bf16.msra.mxu0 %v1760
      %1794 = vmatprep.subr.bf16.mxu0 0
      %1795 = vmatpush1.bf16.msra.mxu0 %v1761
      %1796 = vmatprep.subr.bf16.mxu0 0
      %1797 = vmatpush1.bf16.msra.mxu0 %v1762
      %1798 = vmatprep.subr.bf16.mxu0 0
      %1799 = vmatpush1.bf16.msra.mxu0 %v1763
      %1800 = vmatprep.subr.bf16.mxu0 0
      %1801 = vmatpush1.bf16.msra.mxu0 0
      %1802 = vmatprep.subr.bf16.mxu0 0
      %1803 = vmatpush1.bf16.msra.mxu0 0
      %1804 = vmatprep.subr.bf16.mxu0 0
      %1805 = vmatpush1.bf16.msra.mxu0 0
      %1806 = vmatprep.subr.bf16.mxu0 0
      %1807 = vmatpush1.bf16.msra.mxu0 0
      %1808 = vmatprep.mubr.bf16.mxu0 %v1581
      %1809 = vmatmul.mubr.bf16.gmra.mrb[0].mxu0 %v1472
      %v1810 = vpop.f32.mrb[0].mxu0
      %v1811 = vadd.f32 0.0, %v1810
      %v1812 = vpop.f32.mrb[0].mxu0
      %v1813 = vpop.f32.mrb[0].mxu0
      %v1814 = vadd.f32 0.0, %v1813
      %v1815 = vpop.f32.mrb[0].mxu0
      %1816 = vmatprep.mubr.bf16.mxu0 %v1584
      %1817 = vmatmul.mubr.bf16.gmra.mrb[0].mxu0 %v1474
      %v1818 = vpop.f32.mrb[0].mxu0
      %v1819 = vadd.f32 0.0, %v1818
      %v1820 = vpop.f32.mrb[0].mxu0
      %v1821 = vpop.f32.mrb[0].mxu0
      %v1822 = vadd.f32 0.0, %v1821
      %v1823 = vpop.f32.mrb[0].mxu0
      %1824 = vmatprep.mubr.bf16.mxu0 %v1587
      %1825 = vmatmul.mubr.bf16.gmra.mrb[0].mxu0 %v1476
      %v1826 = vpop.f32.mrb[0].mxu0
      %v1827 = vadd.f32 0.0, %v1826
      %v1828 = vpop.f32.mrb[0].mxu0
      %v1829 = vpop.f32.mrb[0].mxu0
      %v1830 = vadd.f32 0.0, %v1829
      %v1831 = vpop.f32.mrb[0].mxu0
      %1832 = vmatprep.mubr.bf16.mxu0 %v1590
      %1833 = vmatmul.mubr.bf16.gmra.mrb[0].mxu0 %v1478
      %v1834 = vpop.f32.mrb[0].mxu0
      %v1835 = vadd.f32 0.0, %v1834
      %v1836 = vpop.f32.mrb[0].mxu0
      %v1837 = vpop.f32.mrb[0].mxu0
      %v1838 = vadd.f32 0.0, %v1837
      %v1839 = vpop.f32.mrb[0].mxu0
      %1840 = vmatprep.mubr.bf16.mxu0 %v1593
      %1841 = vmatmul.mubr.bf16.gmra.mrb[0].mxu0 %v1480
      %v1842 = vpop.f32.mrb[0].mxu0
      %v1843 = vadd.f32 0.0, %v1842
      %v1844 = vpop.f32.mrb[0].mxu0
      %v1845 = vpop.f32.mrb[0].mxu0
      %v1846 = vadd.f32 0.0, %v1845
      %v1847 = vpop.f32.mrb[0].mxu0
      %1848 = vmatprep.mubr.bf16.mxu0 %v1596
      %1849 = vmatmul.mubr.bf16.gmra.mrb[0].mxu0 %v1482
      %v1850 = vpop.f32.mrb[0].mxu0
      %v1851 = vadd.f32 0.0, %v1850
      %v1852 = vpop.f32.mrb[0].mxu0
      %v1853 = vpop.f32.mrb[0].mxu0
      %v1854 = vadd.f32 0.0, %v1853
      %v1855 = vpop.f32.mrb[0].mxu0
      %1856 = vdwg.mxu0
      %v1857 = vmax.f32 %v1633, %v1811
      %v1858 = vmax.f32 %v1636, %v1814
      %v1859 = vmax.f32 %v1641, %v1819
      %v1860 = vmax.f32 %v1644, %v1822
      %v1861 = vmax.f32 %v1649, %v1827
      %v1862 = vmax.f32 %v1652, %v1830
      %v1863 = vmax.f32 %v1657, %v1835
      %v1864 = vmax.f32 %v1660, %v1838
      %v1865 = vmax.f32 %v1665, %v1843
      %v1866 = vmax.f32 %v1668, %v1846
      %v1867 = vmax.f32 %v1673, %v1851
      %v1868 = vmax.f32 %v1676, %v1854
      %v1869 = vpack.c.bf16 %v1858, %v1857
      %v1870 = vpack.c.bf16 %v1860, %v1859
      %v1871 = vpack.c.bf16 %v1862, %v1861
      %v1872 = vpack.c.bf16 %v1864, %v1863
      %v1873 = vpack.c.bf16 %v1866, %v1865
      %v1874 = vpack.c.bf16 %v1868, %v1867
      %v1875 = vld [vmem:[%s2] sm:$0xf]
      %v1876 = vld [vmem:[%s2 + $0x4] sm:$0xf]
      %v1877 = vld [vmem:[%s2 + $0x8] sm:$0xf]
      %v1878 = vld [vmem:[%s2 + $0xc] sm:$0xf]
      %v1879 = vld [vmem:[%s2 + $0x10] sm:$0xf]
      %v1880 = vld [vmem:[%s2 + $0x14] sm:$0xf]
      %v1881 = vld [vmem:[%s2 + $0x18] sm:$0xf]
      %v1882 = vld [vmem:[%s2 + $0x1c] sm:$0xf]
      %v1883 = vld [vmem:[%s2 + $0x20] sm:$0xf]
      %v1884 = vld [vmem:[%s2 + $0x24] sm:$0xf]
      %v1885 = vld [vmem:[%s2 + $0x28] sm:$0xf]
      %v1886 = vld [vmem:[%s2 + $0x2c] sm:$0xf]
      %s1887 = scalar_lea.vmem %s2, 48
      %v1888 = vld [vmem:[%s1887] sm:$0xf]
      %v1889 = vld [vmem:[%s1887 + $0x4] sm:$0xf]
      %v1890 = vld [vmem:[%s1887 + $0x8] sm:$0xf]
      %v1891 = vld [vmem:[%s1887 + $0xc] sm:$0xf]
      %v1892 = vld [vmem:[%s1887 + $0x10] sm:$0xf]
      %v1893 = vld [vmem:[%s1887 + $0x14] sm:$0xf]
      %v1894 = vld [vmem:[%s1887 + $0x18] sm:$0xf]
      %v1895 = vld [vmem:[%s1887 + $0x1c] sm:$0xf]
      %v1896 = vld [vmem:[%s1887 + $0x20] sm:$0xf]
      %v1897 = vld [vmem:[%s1887 + $0x24] sm:$0xf]
      %v1898 = vld [vmem:[%s1887 + $0x28] sm:$0xf]
      %v1899 = vld [vmem:[%s1887 + $0x2c] sm:$0xf]
      %vm1905 = vcmask 1043456
      %v1906 = vrot.slane %v1869, 4
      %v1907 = vrot.slane %v1870, 4
      %v1908 = vsel %vm1905, %v1906, %v1907
      %v1909 = vrot.slane %v1871, 4
      %v1910 = vsel %vm1905, %v1907, %v1909
      %v1911 = vrot.slane %v1872, 4
      %v1912 = vsel %vm1905, %v1909, %v1911
      %v1913 = vrot.slane %v1873, 4
      %v1914 = vsel %vm1905, %v1911, %v1913
      %v1927 = vunpack.c.l.b16 %v1888
      %v1928 = vunpack.c.l.b16 %v1889
      %v1929 = vunpack.c.l.b16 %v1890
      %v1930 = vunpack.c.l.b16 %v1891
      %v1931 = vunpack.c.l.b16 %v1892
      %v1932 = vunpack.c.l.b16 %v1893
      %v1933 = vunpack.c.l.b16 %v1894
      %v1934 = vunpack.c.l.b16 %v1895
      %v1935 = vunpack.c.l.b16 %v1896
      %v1936 = vunpack.c.l.b16 %v1897
      %v1937 = vunpack.c.l.b16 %v1898
      %v1938 = vunpack.c.l.b16 %v1899
      %v1939 = vpack.c.b16 %v1928, %v1927
      %v1940 = vpack.c.b16 %v1930, %v1929
      %v1941 = vpack.c.b16 %v1932, %v1931
      %v1942 = vpack.c.b16 %v1934, %v1933
      %v1943 = vpack.c.b16 %v1936, %v1935
      %v1944 = vpack.c.b16 %v1938, %v1937
      %vm1951 = vcmask 785408
      %v1953 = vsel %vm1951, %v1908, 0
      %v1956 = vsel %vm1951, %v1910, 0
      %v1959 = vsel %vm1951, %v1912, 0
      %v1962 = vsel %vm1951, %v1914, 0
      %1964 = vmatprep.subr.bf16.mxu0 0
      %1965 = vmatpush1.bf16.msra.mxu0 %v1939
      %1966 = vmatprep.subr.bf16.mxu0 0
      %1967 = vmatpush1.bf16.msra.mxu0 %v1940
      %1968 = vmatprep.subr.bf16.mxu0 0
      %1969 = vmatpush1.bf16.msra.mxu0 %v1941
      %1970 = vmatprep.subr.bf16.mxu0 0
      %1971 = vmatpush1.bf16.msra.mxu0 %v1942
      %1972 = vmatprep.subr.bf16.mxu0 0
      %1973 = vmatpush1.bf16.msra.mxu0 %v1943
      %1974 = vmatprep.subr.bf16.mxu0 0
      %1975 = vmatpush1.bf16.msra.mxu0 %v1944
      %1976 = vmatprep.subr.bf16.mxu0 0
      %1977 = vmatpush1.bf16.msra.mxu0 0
      %1978 = vmatprep.subr.bf16.mxu0 0
      %1979 = vmatpush1.bf16.msra.mxu0 0
      %1980 = vmatprep.subr.bf16.mxu0 0
      %1981 = vmatpush1.bf16.msra.mxu0 0
      %1982 = vmatprep.subr.bf16.mxu0 0
      %1983 = vmatpush1.bf16.msra.mxu0 0
      %1984 = vmatprep.subr.bf16.mxu0 0
      %1985 = vmatpush1.bf16.msra.mxu0 0
      %1986 = vmatprep.subr.bf16.mxu0 0
      %1987 = vmatpush1.bf16.msra.mxu0 0
      %1988 = vmatprep.subr.bf16.mxu0 0
      %1989 = vmatpush1.bf16.msra.mxu0 0
      %1990 = vmatprep.subr.bf16.mxu0 0
      %1991 = vmatpush1.bf16.msra.mxu0 0
      %1992 = vmatprep.subr.bf16.mxu0 0
      %1993 = vmatpush1.bf16.msra.mxu0 0
      %1994 = vmatprep.subr.bf16.mxu0 0
      %1995 = vmatpush1.bf16.msra.mxu0 0
      %1996 = vmatprep.mubr.bf16.mxu0 0
      %1997 = vmatmul.mubr.bf16.gmra.mrb[0].mxu0 %v1953
      %v1998 = vpop.f32.mrb[0].mxu0
      %v1999 = vadd.f32 0.0, %v1998
      %v2000 = vpop.f32.mrb[0].mxu0
      %v2001 = vpop.f32.mrb[0].mxu0
      %v2002 = vadd.f32 0.0, %v2001
      %v2003 = vpop.f32.mrb[0].mxu0
      %2004 = vmatprep.mubr.bf16.mxu0 0
      %2005 = vmatmul.mubr.bf16.gmra.mrb[0].mxu0 %v1956
      %v2006 = vpop.f32.mrb[0].mxu0
      %v2007 = vadd.f32 0.0, %v2006
      %v2008 = vpop.f32.mrb[0].mxu0
      %v2009 = vpop.f32.mrb[0].mxu0
      %v2010 = vadd.f32 0.0, %v2009
      %v2011 = vpop.f32.mrb[0].mxu0
      %2012 = vmatprep.mubr.bf16.mxu0 0
      %2013 = vmatmul.mubr.bf16.gmra.mrb[0].mxu0 %v1959
      %v2014 = vpop.f32.mrb[0].mxu0
      %v2015 = vadd.f32 0.0, %v2014
      %v2016 = vpop.f32.mrb[0].mxu0
      %v2017 = vpop.f32.mrb[0].mxu0
      %v2018 = vadd.f32 0.0, %v2017
      %v2019 = vpop.f32.mrb[0].mxu0
      %2020 = vmatprep.mubr.bf16.mxu0 0
      %2021 = vmatmul.mubr.bf16.gmra.mrb[0].mxu0 %v1962
      %v2022 = vpop.f32.mrb[0].mxu0
      %v2023 = vadd.f32 0.0, %v2022
      %v2024 = vpop.f32.mrb[0].mxu0
      %v2025 = vpop.f32.mrb[0].mxu0
      %v2026 = vadd.f32 0.0, %v2025
      %v2027 = vpop.f32.mrb[0].mxu0
      %2028 = vdwg.mxu0
      %v2041 = vunpack.c.l.b16 %v1875
      %v2042 = vunpack.c.l.b16 %v1876
      %v2043 = vunpack.c.l.b16 %v1877
      %v2044 = vunpack.c.l.b16 %v1878
      %v2045 = vunpack.c.l.b16 %v1879
      %v2046 = vunpack.c.l.b16 %v1880
      %v2047 = vunpack.c.l.b16 %v1881
      %v2048 = vunpack.c.l.b16 %v1882
      %v2049 = vunpack.c.l.b16 %v1883
      %v2050 = vunpack.c.l.b16 %v1884
      %v2051 = vunpack.c.l.b16 %v1885
      %v2052 = vunpack.c.l.b16 %v1886
      %v2053 = vpack.c.b16 %v2042, %v2041
      %v2054 = vpack.c.b16 %v2044, %v2043
      %v2055 = vpack.c.b16 %v2046, %v2045
      %v2056 = vpack.c.b16 %v2048, %v2047
      %v2057 = vpack.c.b16 %v2050, %v2049
      %v2058 = vpack.c.b16 %v2052, %v2051
      %v2066 = vsel %vm1951, %v1869, 0
      %v2069 = vsel %vm1951, %v1870, 0
      %v2072 = vsel %vm1951, %v1871, 0
      %v2075 = vsel %vm1951, %v1872, 0
      %2077 = vmatprep.subr.bf16.mxu0 0
      %2078 = vmatpush1.bf16.msra.mxu0 %v2053
      %2079 = vmatprep.subr.bf16.mxu0 0
      %2080 = vmatpush1.bf16.msra.mxu0 %v2054
      %2081 = vmatprep.subr.bf16.mxu0 0
      %2082 = vmatpush1.bf16.msra.mxu0 %v2055
      %2083 = vmatprep.subr.bf16.mxu0 0
      %2084 = vmatpush1.bf16.msra.mxu0 %v2056
      %2085 = vmatprep.subr.bf16.mxu0 0
      %2086 = vmatpush1.bf16.msra.mxu0 %v2057
      %2087 = vmatprep.subr.bf16.mxu0 0
      %2088 = vmatpush1.bf16.msra.mxu0 %v2058
      %2089 = vmatprep.subr.bf16.mxu0 0
      %2090 = vmatpush1.bf16.msra.mxu0 0
      %2091 = vmatprep.subr.bf16.mxu0 0
      %2092 = vmatpush1.bf16.msra.mxu0 0
      %2093 = vmatprep.subr.bf16.mxu0 0
      %2094 = vmatpush1.bf16.msra.mxu0 0
      %2095 = vmatprep.subr.bf16.mxu0 0
      %2096 = vmatpush1.bf16.msra.mxu0 0
      %2097 = vmatprep.subr.bf16.mxu0 0
      %2098 = vmatpush1.bf16.msra.mxu0 0
      %2099 = vmatprep.subr.bf16.mxu0 0
      %2100 = vmatpush1.bf16.msra.mxu0 0
      %2101 = vmatprep.subr.bf16.mxu0 0
      %2102 = vmatpush1.bf16.msra.mxu0 0
      %2103 = vmatprep.subr.bf16.mxu0 0
      %2104 = vmatpush1.bf16.msra.mxu0 0
      %2105 = vmatprep.subr.bf16.mxu0 0
      %2106 = vmatpush1.bf16.msra.mxu0 0
      %2107 = vmatprep.subr.bf16.mxu0 0
      %2108 = vmatpush1.bf16.msra.mxu0 0
      %2109 = vmatprep.mubr.bf16.mxu0 0
      %2110 = vmatmul.mubr.bf16.gmra.mrb[0].mxu0 %v2066
      %v2111 = vpop.f32.mrb[0].mxu0
      %v2112 = vadd.f32 %v1999, %v2111
      %v2113 = vpop.f32.mrb[0].mxu0
      %v2114 = vpop.f32.mrb[0].mxu0
      %v2115 = vadd.f32 %v2002, %v2114
      %v2116 = vpop.f32.mrb[0].mxu0
      %2117 = vmatprep.mubr.bf16.mxu0 0
      %2118 = vmatmul.mubr.bf16.gmra.mrb[0].mxu0 %v2069
      %v2119 = vpop.f32.mrb[0].mxu0
      %v2120 = vadd.f32 %v2007, %v2119
      %v2121 = vpop.f32.mrb[0].mxu0
      %v2122 = vpop.f32.mrb[0].mxu0
      %v2123 = vadd.f32 %v2010, %v2122
      %v2124 = vpop.f32.mrb[0].mxu0
      %2125 = vmatprep.mubr.bf16.mxu0 0
      %2126 = vmatmul.mubr.bf16.gmra.mrb[0].mxu0 %v2072
      %v2127 = vpop.f32.mrb[0].mxu0
      %v2128 = vadd.f32 %v2015, %v2127
      %v2129 = vpop.f32.mrb[0].mxu0
      %v2130 = vpop.f32.mrb[0].mxu0
      %v2131 = vadd.f32 %v2018, %v2130
      %v2132 = vpop.f32.mrb[0].mxu0
      %2133 = vmatprep.mubr.bf16.mxu0 0
      %2134 = vmatmul.mubr.bf16.gmra.mrb[0].mxu0 %v2075
      %v2135 = vpop.f32.mrb[0].mxu0
      %v2136 = vadd.f32 %v2023, %v2135
      %v2137 = vpop.f32.mrb[0].mxu0
      %v2138 = vpop.f32.mrb[0].mxu0
      %v2139 = vadd.f32 %v2026, %v2138
      %v2140 = vpop.f32.mrb[0].mxu0
      %2141 = vdwg.mxu0
      %s2142 = scalar_lea.vmem %s2, 96
      %v2143 = vld [vmem:[%s2142] sm:$0xf]
      %v2144 = vld [vmem:[%s2142 + $0x4] sm:$0xf]
      %v2145 = vld [vmem:[%s2142 + $0x8] sm:$0xf]
      %v2146 = vld [vmem:[%s2142 + $0xc] sm:$0xf]
      %v2147 = vld [vmem:[%s2142 + $0x10] sm:$0xf]
      %v2148 = vld [vmem:[%s2142 + $0x14] sm:$0xf]
      %v2149 = vld [vmem:[%s2142 + $0x18] sm:$0xf]
      %v2150 = vld [vmem:[%s2142 + $0x1c] sm:$0xf]
      %v2151 = vld [vmem:[%s2142 + $0x20] sm:$0xf]
      %v2152 = vld [vmem:[%s2142 + $0x24] sm:$0xf]
      %v2153 = vld [vmem:[%s2142 + $0x28] sm:$0xf]
      %v2154 = vld [vmem:[%s2142 + $0x2c] sm:$0xf]
      %v2167 = vunpack.c.l.b16 %v2143
      %v2168 = vunpack.c.l.b16 %v2144
      %v2169 = vunpack.c.l.b16 %v2145
      %v2170 = vunpack.c.l.b16 %v2146
      %v2171 = vunpack.c.l.b16 %v2147
      %v2172 = vunpack.c.l.b16 %v2148
      %v2173 = vunpack.c.l.b16 %v2149
      %v2174 = vunpack.c.l.b16 %v2150
      %v2175 = vunpack.c.l.b16 %v2151
      %v2176 = vunpack.c.l.b16 %v2152
      %v2177 = vunpack.c.l.b16 %v2153
      %v2178 = vunpack.c.l.b16 %v2154
      %v2179 = vpack.c.b16 %v2168, %v2167
      %v2180 = vpack.c.b16 %v2170, %v2169
      %v2181 = vpack.c.b16 %v2172, %v2171
      %v2182 = vpack.c.b16 %v2174, %v2173
      %v2183 = vpack.c.b16 %v2176, %v2175
      %v2184 = vpack.c.b16 %v2178, %v2177
      %v2192 = vsel %vm1951, %v1873, 0
      %2194 = vmatprep.subr.bf16.mxu0 0
      %2195 = vmatpush1.bf16.msra.mxu0 %v2179
      %2196 = vmatprep.subr.bf16.mxu0 0
      %2197 = vmatpush1.bf16.msra.mxu0 %v2180
      %2198 = vmatprep.subr.bf16.mxu0 0
      %2199 = vmatpush1.bf16.msra.mxu0 %v2181
      %2200 = vmatprep.subr.bf16.mxu0 0
      %2201 = vmatpush1.bf16.msra.mxu0 %v2182
      %2202 = vmatprep.subr.bf16.mxu0 0
      %2203 = vmatpush1.bf16.msra.mxu0 %v2183
      %2204 = vmatprep.subr.bf16.mxu0 0
      %2205 = vmatpush1.bf16.msra.mxu0 %v2184
      %2206 = vmatprep.subr.bf16.mxu0 0
      %2207 = vmatpush1.bf16.msra.mxu0 0
      %2208 = vmatprep.subr.bf16.mxu0 0
      %2209 = vmatpush1.bf16.msra.mxu0 0
      %2210 = vmatprep.subr.bf16.mxu0 0
      %2211 = vmatpush1.bf16.msra.mxu0 0
      %2212 = vmatprep.subr.bf16.mxu0 0
      %2213 = vmatpush1.bf16.msra.mxu0 0
      %2214 = vmatprep.subr.bf16.mxu0 0
      %2215 = vmatpush1.bf16.msra.mxu0 0
      %2216 = vmatprep.subr.bf16.mxu0 0
      %2217 = vmatpush1.bf16.msra.mxu0 0
      %2218 = vmatprep.subr.bf16.mxu0 0
      %2219 = vmatpush1.bf16.msra.mxu0 0
      %2220 = vmatprep.subr.bf16.mxu0 0
      %2221 = vmatpush1.bf16.msra.mxu0 0
      %2222 = vmatprep.subr.bf16.mxu0 0
      %2223 = vmatpush1.bf16.msra.mxu0 0
      %2224 = vmatprep.subr.bf16.mxu0 0
      %2225 = vmatpush1.bf16.msra.mxu0 0
      %2226 = vmatprep.mubr.bf16.mxu0 0
      %2227 = vmatmul.mubr.bf16.gmra.mrb[0].mxu0 %v2069
      %v2228 = vpop.f32.mrb[0].mxu0
      %v2229 = vadd.f32 0.0, %v2228
      %v2230 = vpop.f32.mrb[0].mxu0
      %v2231 = vpop.f32.mrb[0].mxu0
      %v2232 = vadd.f32 0.0, %v2231
      %v2233 = vpop.f32.mrb[0].mxu0
      %2234 = vmatprep.mubr.bf16.mxu0 0
      %2235 = vmatmul.mubr.bf16.gmra.mrb[0].mxu0 %v2072
      %v2236 = vpop.f32.mrb[0].mxu0
      %v2237 = vadd.f32 0.0, %v2236
      %v2238 = vpop.f32.mrb[0].mxu0
      %v2239 = vpop.f32.mrb[0].mxu0
      %v2240 = vadd.f32 0.0, %v2239
      %v2241 = vpop.f32.mrb[0].mxu0
      %2242 = vmatprep.mubr.bf16.mxu0 0
      %2243 = vmatmul.mubr.bf16.gmra.mrb[0].mxu0 %v2075
      %v2244 = vpop.f32.mrb[0].mxu0
      %v2245 = vadd.f32 0.0, %v2244
      %v2246 = vpop.f32.mrb[0].mxu0
      %v2247 = vpop.f32.mrb[0].mxu0
      %v2248 = vadd.f32 0.0, %v2247
      %v2249 = vpop.f32.mrb[0].mxu0
      %2250 = vmatprep.mubr.bf16.mxu0 0
      %2251 = vmatmul.mubr.bf16.gmra.mrb[0].mxu0 %v2192
      %v2252 = vpop.f32.mrb[0].mxu0
      %v2253 = vadd.f32 0.0, %v2252
      %v2254 = vpop.f32.mrb[0].mxu0
      %v2255 = vpop.f32.mrb[0].mxu0
      %v2256 = vadd.f32 0.0, %v2255
      %v2257 = vpop.f32.mrb[0].mxu0
      %2258 = vdwg.mxu0
      %v2259 = vadd.f32 %v2112, %v2229
      %v2260 = vadd.f32 %v2115, %v2232
      %v2261 = vadd.f32 %v2120, %v2237
      %v2262 = vadd.f32 %v2123, %v2240
      %v2263 = vadd.f32 %v2128, %v2245
      %v2264 = vadd.f32 %v2131, %v2248
      %v2265 = vadd.f32 %v2136, %v2253
      %v2266 = vadd.f32 %v2139, %v2256
      %s2267 = scalar_lea.vmem %s2, 144
      %v2268 = vld [vmem:[%s2267] sm:$0xf]
      %v2269 = vld [vmem:[%s2267 + $0x4] sm:$0xf]
      %v2270 = vld [vmem:[%s2267 + $0x8] sm:$0xf]
      %v2271 = vld [vmem:[%s2267 + $0xc] sm:$0xf]
      %v2272 = vld [vmem:[%s2267 + $0x10] sm:$0xf]
      %v2273 = vld [vmem:[%s2267 + $0x14] sm:$0xf]
      %v2274 = vld [vmem:[%s2267 + $0x18] sm:$0xf]
      %v2275 = vld [vmem:[%s2267 + $0x1c] sm:$0xf]
      %v2276 = vld [vmem:[%s2267 + $0x20] sm:$0xf]
      %v2277 = vld [vmem:[%s2267 + $0x24] sm:$0xf]
      %v2278 = vld [vmem:[%s2267 + $0x28] sm:$0xf]
      %v2279 = vld [vmem:[%s2267 + $0x2c] sm:$0xf]
      %v2281 = vrot.slane %v1874, 4
      %v2282 = vsel %vm1905, %v1913, %v2281
      %v2295 = vunpack.c.l.b16 %v2268
      %v2296 = vunpack.c.l.b16 %v2269
      %v2297 = vunpack.c.l.b16 %v2270
      %v2298 = vunpack.c.l.b16 %v2271
      %v2299 = vunpack.c.l.b16 %v2272
      %v2300 = vunpack.c.l.b16 %v2273
      %v2301 = vunpack.c.l.b16 %v2274
      %v2302 = vunpack.c.l.b16 %v2275
      %v2303 = vunpack.c.l.b16 %v2276
      %v2304 = vunpack.c.l.b16 %v2277
      %v2305 = vunpack.c.l.b16 %v2278
      %v2306 = vunpack.c.l.b16 %v2279
      %v2307 = vpack.c.b16 %v2296, %v2295
      %v2308 = vpack.c.b16 %v2298, %v2297
      %v2309 = vpack.c.b16 %v2300, %v2299
      %v2310 = vpack.c.b16 %v2302, %v2301
      %v2311 = vpack.c.b16 %v2304, %v2303
      %v2312 = vpack.c.b16 %v2306, %v2305
      %v2320 = vsel %vm1951, %v2282, 0
      %2322 = vmatprep.subr.bf16.mxu0 0
      %2323 = vmatpush1.bf16.msra.mxu0 %v2307
      %2324 = vmatprep.subr.bf16.mxu0 0
      %2325 = vmatpush1.bf16.msra.mxu0 %v2308
      %2326 = vmatprep.subr.bf16.mxu0 0
      %2327 = vmatpush1.bf16.msra.mxu0 %v2309
      %2328 = vmatprep.subr.bf16.mxu0 0
      %2329 = vmatpush1.bf16.msra.mxu0 %v2310
      %2330 = vmatprep.subr.bf16.mxu0 0
      %2331 = vmatpush1.bf16.msra.mxu0 %v2311
      %2332 = vmatprep.subr.bf16.mxu0 0
      %2333 = vmatpush1.bf16.msra.mxu0 %v2312
      %2334 = vmatprep.subr.bf16.mxu0 0
      %2335 = vmatpush1.bf16.msra.mxu0 0
      %2336 = vmatprep.subr.bf16.mxu0 0
      %2337 = vmatpush1.bf16.msra.mxu0 0
      %2338 = vmatprep.subr.bf16.mxu0 0
      %2339 = vmatpush1.bf16.msra.mxu0 0
      %2340 = vmatprep.subr.bf16.mxu0 0
      %2341 = vmatpush1.bf16.msra.mxu0 0
      %2342 = vmatprep.subr.bf16.mxu0 0
      %2343 = vmatpush1.bf16.msra.mxu0 0
      %2344 = vmatprep.subr.bf16.mxu0 0
      %2345 = vmatpush1.bf16.msra.mxu0 0
      %2346 = vmatprep.subr.bf16.mxu0 0
      %2347 = vmatpush1.bf16.msra.mxu0 0
      %2348 = vmatprep.subr.bf16.mxu0 0
      %2349 = vmatpush1.bf16.msra.mxu0 0
      %2350 = vmatprep.subr.bf16.mxu0 0
      %2351 = vmatpush1.bf16.msra.mxu0 0
      %2352 = vmatprep.subr.bf16.mxu0 0
      %2353 = vmatpush1.bf16.msra.mxu0 0
      %2354 = vmatprep.mubr.bf16.mxu0 0
      %2355 = vmatmul.mubr.bf16.gmra.mrb[0].mxu0 %v1956
      %v2356 = vpop.f32.mrb[0].mxu0
      %v2357 = vadd.f32 0.0, %v2356
      %v2358 = vpop.f32.mrb[0].mxu0
      %v2359 = vpop.f32.mrb[0].mxu0
      %v2360 = vadd.f32 0.0, %v2359
      %v2361 = vpop.f32.mrb[0].mxu0
      %2362 = vmatprep.mubr.bf16.mxu0 0
      %2363 = vmatmul.mubr.bf16.gmra.mrb[0].mxu0 %v1959
      %v2364 = vpop.f32.mrb[0].mxu0
      %v2365 = vadd.f32 0.0, %v2364
      %v2366 = vpop.f32.mrb[0].mxu0
      %v2367 = vpop.f32.mrb[0].mxu0
      %v2368 = vadd.f32 0.0, %v2367
      %v2369 = vpop.f32.mrb[0].mxu0
      %2370 = vmatprep.mubr.bf16.mxu0 0
      %2371 = vmatmul.mubr.bf16.gmra.mrb[0].mxu0 %v1962
      %v2372 = vpop.f32.mrb[0].mxu0
      %v2373 = vadd.f32 0.0, %v2372
      %v2374 = vpop.f32.mrb[0].mxu0
      %v2375 = vpop.f32.mrb[0].mxu0
      %v2376 = vadd.f32 0.0, %v2375
      %v2377 = vpop.f32.mrb[0].mxu0
      %2378 = vmatprep.mubr.bf16.mxu0 0
      %2379 = vmatmul.mubr.bf16.gmra.mrb[0].mxu0 %v2320
      %v2380 = vpop.f32.mrb[0].mxu0
      %v2381 = vadd.f32 0.0, %v2380
      %v2382 = vpop.f32.mrb[0].mxu0
      %v2383 = vpop.f32.mrb[0].mxu0
      %v2384 = vadd.f32 0.0, %v2383
      %v2385 = vpop.f32.mrb[0].mxu0
      %2386 = vdwg.mxu0
      %v2387 = vadd.f32 %v2259, %v2357
      %v2388 = vadd.f32 %v2260, %v2360
      %v2389 = vadd.f32 %v2261, %v2365
      %v2390 = vadd.f32 %v2262, %v2368
      %v2391 = vadd.f32 %v2263, %v2373
      %v2392 = vadd.f32 %v2264, %v2376
      %v2393 = vadd.f32 %v2265, %v2381
      %v2394 = vadd.f32 %v2266, %v2384
      %s2395 = scalar_lea.vmem %s2, 192
      %v2396 = vld [vmem:[%s2395] sm:$0xf]
      %v2397 = vld [vmem:[%s2395 + $0x4] sm:$0xf]
      %v2398 = vld [vmem:[%s2395 + $0x8] sm:$0xf]
      %v2399 = vld [vmem:[%s2395 + $0xc] sm:$0xf]
      %v2400 = vld [vmem:[%s2395 + $0x10] sm:$0xf]
      %v2401 = vld [vmem:[%s2395 + $0x14] sm:$0xf]
      %v2402 = vld [vmem:[%s2395 + $0x18] sm:$0xf]
      %v2403 = vld [vmem:[%s2395 + $0x1c] sm:$0xf]
      %v2404 = vld [vmem:[%s2395 + $0x20] sm:$0xf]
      %v2405 = vld [vmem:[%s2395 + $0x24] sm:$0xf]
      %v2406 = vld [vmem:[%s2395 + $0x28] sm:$0xf]
      %v2407 = vld [vmem:[%s2395 + $0x2c] sm:$0xf]
      %v2420 = vunpack.c.l.b16 %v2396
      %v2421 = vunpack.c.l.b16 %v2397
      %v2422 = vunpack.c.l.b16 %v2398
      %v2423 = vunpack.c.l.b16 %v2399
      %v2424 = vunpack.c.l.b16 %v2400
      %v2425 = vunpack.c.l.b16 %v2401
      %v2426 = vunpack.c.l.b16 %v2402
      %v2427 = vunpack.c.l.b16 %v2403
      %v2428 = vunpack.c.l.b16 %v2404
      %v2429 = vunpack.c.l.b16 %v2405
      %v2430 = vunpack.c.l.b16 %v2406
      %v2431 = vunpack.c.l.b16 %v2407
      %v2432 = vpack.c.b16 %v2421, %v2420
      %v2433 = vpack.c.b16 %v2423, %v2422
      %v2434 = vpack.c.b16 %v2425, %v2424
      %v2435 = vpack.c.b16 %v2427, %v2426
      %v2436 = vpack.c.b16 %v2429, %v2428
      %v2437 = vpack.c.b16 %v2431, %v2430
      %v2445 = vsel %vm1951, %v1874, 0
      %2447 = vmatprep.subr.bf16.mxu0 0
      %2448 = vmatpush1.bf16.msra.mxu0 %v2432
      %2449 = vmatprep.subr.bf16.mxu0 0
      %2450 = vmatpush1.bf16.msra.mxu0 %v2433
      %2451 = vmatprep.subr.bf16.mxu0 0
      %2452 = vmatpush1.bf16.msra.mxu0 %v2434
      %2453 = vmatprep.subr.bf16.mxu0 0
      %2454 = vmatpush1.bf16.msra.mxu0 %v2435
      %2455 = vmatprep.subr.bf16.mxu0 0
      %2456 = vmatpush1.bf16.msra.mxu0 %v2436
      %2457 = vmatprep.subr.bf16.mxu0 0
      %2458 = vmatpush1.bf16.msra.mxu0 %v2437
      %2459 = vmatprep.subr.bf16.mxu0 0
      %2460 = vmatpush1.bf16.msra.mxu0 0
      %2461 = vmatprep.subr.bf16.mxu0 0
      %2462 = vmatpush1.bf16.msra.mxu0 0
      %2463 = vmatprep.subr.bf16.mxu0 0
      %2464 = vmatpush1.bf16.msra.mxu0 0
      %2465 = vmatprep.subr.bf16.mxu0 0
      %2466 = vmatpush1.bf16.msra.mxu0 0
      %2467 = vmatprep.subr.bf16.mxu0 0
      %2468 = vmatpush1.bf16.msra.mxu0 0
      %2469 = vmatprep.subr.bf16.mxu0 0
      %2470 = vmatpush1.bf16.msra.mxu0 0
      %2471 = vmatprep.subr.bf16.mxu0 0
      %2472 = vmatpush1.bf16.msra.mxu0 0
      %2473 = vmatprep.subr.bf16.mxu0 0
      %2474 = vmatpush1.bf16.msra.mxu0 0
      %2475 = vmatprep.subr.bf16.mxu0 0
      %2476 = vmatpush1.bf16.msra.mxu0 0
      %2477 = vmatprep.subr.bf16.mxu0 0
      %2478 = vmatpush1.bf16.msra.mxu0 0
      %2479 = vmatprep.mubr.bf16.mxu0 0
      %2480 = vmatmul.mubr.bf16.gmra.mrb[0].mxu0 %v2072
      %v2481 = vpop.f32.mrb[0].mxu0
      %v2482 = vadd.f32 0.0, %v2481
      %v2483 = vpop.f32.mrb[0].mxu0
      %v2484 = vpop.f32.mrb[0].mxu0
      %v2485 = vadd.f32 0.0, %v2484
      %v2486 = vpop.f32.mrb[0].mxu0
      %2487 = vmatprep.mubr.bf16.mxu0 0
      %2488 = vmatmul.mubr.bf16.gmra.mrb[0].mxu0 %v2075
      %v2489 = vpop.f32.mrb[0].mxu0
      %v2490 = vadd.f32 0.0, %v2489
      %v2491 = vpop.f32.mrb[0].mxu0
      %v2492 = vpop.f32.mrb[0].mxu0
      %v2493 = vadd.f32 0.0, %v2492
      %v2494 = vpop.f32.mrb[0].mxu0
      %2495 = vmatprep.mubr.bf16.mxu0 0
      %2496 = vmatmul.mubr.bf16.gmra.mrb[0].mxu0 %v2192
      %v2497 = vpop.f32.mrb[0].mxu0
      %v2498 = vadd.f32 0.0, %v2497
      %v2499 = vpop.f32.mrb[0].mxu0
      %v2500 = vpop.f32.mrb[0].mxu0
      %v2501 = vadd.f32 0.0, %v2500
      %v2502 = vpop.f32.mrb[0].mxu0
      %2503 = vmatprep.mubr.bf16.mxu0 0
      %2504 = vmatmul.mubr.bf16.gmra.mrb[0].mxu0 %v2445
      %v2505 = vpop.f32.mrb[0].mxu0
      %v2506 = vadd.f32 0.0, %v2505
      %v2507 = vpop.f32.mrb[0].mxu0
      %v2508 = vpop.f32.mrb[0].mxu0
      %v2509 = vadd.f32 0.0, %v2508
      %v2510 = vpop.f32.mrb[0].mxu0
      %2511 = vdwg.mxu0
      %v2512 = vadd.f32 %v2387, %v2482
      %v2513 = vadd.f32 %v2388, %v2485
      %v2514 = vadd.f32 %v2389, %v2490
      %v2515 = vadd.f32 %v2390, %v2493
      %v2516 = vadd.f32 %v2391, %v2498
      %v2517 = vadd.f32 %v2392, %v2501
      %v2518 = vadd.f32 %v2393, %v2506
      %v2519 = vadd.f32 %v2394, %v2509
      %v2520 = vlaneseq
      %v2521 = vshrl.u32 %v2520, 7
      %v2522 = vsub.s32 1, %v2521
      %v2523 = vrot.slane %v388, %v2522
      %v2524 = vadd.f32 %v2512, %v2523
      %v2525 = vadd.f32 %v2513, %v2523
      %v2526 = vadd.f32 %v2514, %v2523
      %v2527 = vadd.f32 %v2515, %v2523
      %v2528 = vadd.f32 %v2516, %v2523
      %v2529 = vadd.f32 %v2517, %v2523
      %v2530 = vadd.f32 %v2518, %v2523
      %v2531 = vadd.f32 %v2519, %v2523
      %v2532 = vmax.f32 %v2524, 0.0
      %v2533 = vmax.f32 %v2525, 0.0
      %v2534 = vmax.f32 %v2526, 0.0
      %v2535 = vmax.f32 %v2527, 0.0
      %v2536 = vmax.f32 %v2528, 0.0
      %v2537 = vmax.f32 %v2529, 0.0
      %v2538 = vmax.f32 %v2530, 0.0
      %v2539 = vmax.f32 %v2531, 0.0
      %v2540 = vpack.c.bf16 %v2533, %v2532
      %v2541 = vpack.c.bf16 %v2535, %v2534
      %v2542 = vpack.c.bf16 %v2537, %v2536
      %v2543 = vpack.c.bf16 %v2539, %v2538
      %v2544 = vld [vmem:[%s8] sm:$0xf]
      %v2545 = vld [vmem:[%s8 + $0x4] sm:$0xf]
      %v2546 = vld [vmem:[%s8 + $0x8] sm:$0xf]
      %v2547 = vld [vmem:[%s8 + $0xc] sm:$0xf]
      %v2552 = vunpack.c.l.b16 %v2544
      %v2553 = vunpack.c.l.b16 %v2545
      %v2554 = vunpack.c.l.b16 %v2546
      %v2555 = vunpack.c.l.b16 %v2547
      %v2556 = vpack.c.b16 %v2553, %v2552
      %v2557 = vpack.c.b16 %v2555, %v2554
      %v2559 = vsel %vm1158, %v2556, 0
      %v2562 = vsel %vm1158, %v2557, 0
      %2564 = vmatprep.subr.bf16.mxu0 0
      %2565 = vmatpush1.bf16.msra.mxu0 %v2540
      %2566 = vmatprep.subr.bf16.mxu0 0
      %2567 = vmatpush1.bf16.msra.mxu0 %v2541
      %2568 = vmatprep.subr.bf16.mxu0 0
      %2569 = vmatpush1.bf16.msra.mxu0 %v2542
      %2570 = vmatprep.subr.bf16.mxu0 0
      %2571 = vmatpush1.bf16.msra.mxu0 %v2543
      %2572 = vmatprep.subr.bf16.mxu0 0
      %2573 = vmatpush1.bf16.msra.mxu0 0
      %2574 = vmatprep.subr.bf16.mxu0 0
      %2575 = vmatpush1.bf16.msra.mxu0 0
      %2576 = vmatprep.subr.bf16.mxu0 0
      %2577 = vmatpush1.bf16.msra.mxu0 0
      %2578 = vmatprep.subr.bf16.mxu0 0
      %2579 = vmatpush1.bf16.msra.mxu0 0
      %2580 = vmatprep.subr.bf16.mxu0 0
      %2581 = vmatpush1.bf16.msra.mxu0 0
      %2582 = vmatprep.subr.bf16.mxu0 0
      %2583 = vmatpush1.bf16.msra.mxu0 0
      %2584 = vmatprep.subr.bf16.mxu0 0
      %2585 = vmatpush1.bf16.msra.mxu0 0
      %2586 = vmatprep.subr.bf16.mxu0 0
      %2587 = vmatpush1.bf16.msra.mxu0 0
      %2588 = vmatprep.subr.bf16.mxu0 0
      %2589 = vmatpush1.bf16.msra.mxu0 0
      %2590 = vmatprep.subr.bf16.mxu0 0
      %2591 = vmatpush1.bf16.msra.mxu0 0
      %2592 = vmatprep.subr.bf16.mxu0 0
      %2593 = vmatpush1.bf16.msra.mxu0 0
      %2594 = vmatprep.subr.bf16.mxu0 0
      %2595 = vmatpush1.bf16.msra.mxu0 0
      %2596 = vmatprep.mubr.bf16.mxu0 0
      %2597 = vmatmul.mubr.bf16.gmra.mrb[0].mxu0 %v2559
      %v2598 = vpop.f32.mrb[0].mxu0
      %v2599 = vadd.f32 0.0, %v2598
      %v2600 = vpop.f32.mrb[0].mxu0
      %v2601 = vpop.f32.mrb[0].mxu0
      %v2602 = vadd.f32 0.0, %v2601
      %v2603 = vpop.f32.mrb[0].mxu0
      %2604 = vmatprep.mubr.bf16.mxu0 0
      %2605 = vmatmul.mubr.bf16.gmra.mrb[0].mxu0 %v2562
      %v2606 = vpop.f32.mrb[0].mxu0
      %v2607 = vadd.f32 0.0, %v2606
      %v2608 = vpop.f32.mrb[0].mxu0
      %v2609 = vpop.f32.mrb[0].mxu0
      %v2610 = vadd.f32 0.0, %v2609
      %v2611 = vpop.f32.mrb[0].mxu0
      %2612 = vdwg.mxu0
      %s2613 = scalar_lea.vmem %s8, 16
      %v2614 = vld [vmem:[%s2613] sm:$0xf]
      %v2615 = vld [vmem:[%s2613 + $0x4] sm:$0xf]
      %v2616 = vld [vmem:[%s2613 + $0x8] sm:$0xf]
      %v2617 = vld [vmem:[%s2613 + $0xc] sm:$0xf]
      %v2622 = vunpack.c.l.b16 %v2614
      %v2623 = vunpack.c.l.b16 %v2615
      %v2624 = vunpack.c.l.b16 %v2616
      %v2625 = vunpack.c.l.b16 %v2617
      %v2626 = vpack.c.b16 %v2623, %v2622
      %v2627 = vpack.c.b16 %v2625, %v2624
      %v2629 = vsel %vm1158, %v2626, 0
      %v2632 = vsel %vm1158, %v2627, 0
      %2634 = vmatprep.subr.bf16.mxu0 0
      %2635 = vmatpush1.bf16.msra.mxu0 %v2540
      %2636 = vmatprep.subr.bf16.mxu0 0
      %2637 = vmatpush1.bf16.msra.mxu0 %v2541
      %2638 = vmatprep.subr.bf16.mxu0 0
      %2639 = vmatpush1.bf16.msra.mxu0 %v2542
      %2640 = vmatprep.subr.bf16.mxu0 0
      %2641 = vmatpush1.bf16.msra.mxu0 %v2543
      %2642 = vmatprep.subr.bf16.mxu0 0
      %2643 = vmatpush1.bf16.msra.mxu0 0
      %2644 = vmatprep.subr.bf16.mxu0 0
      %2645 = vmatpush1.bf16.msra.mxu0 0
      %2646 = vmatprep.subr.bf16.mxu0 0
      %2647 = vmatpush1.bf16.msra.mxu0 0
      %2648 = vmatprep.subr.bf16.mxu0 0
      %2649 = vmatpush1.bf16.msra.mxu0 0
      %2650 = vmatprep.subr.bf16.mxu0 0
      %2651 = vmatpush1.bf16.msra.mxu0 0
      %2652 = vmatprep.subr.bf16.mxu0 0
      %2653 = vmatpush1.bf16.msra.mxu0 0
      %2654 = vmatprep.subr.bf16.mxu0 0
      %2655 = vmatpush1.bf16.msra.mxu0 0
      %2656 = vmatprep.subr.bf16.mxu0 0
      %2657 = vmatpush1.bf16.msra.mxu0 0
      %2658 = vmatprep.subr.bf16.mxu0 0
      %2659 = vmatpush1.bf16.msra.mxu0 0
      %2660 = vmatprep.subr.bf16.mxu0 0
      %2661 = vmatpush1.bf16.msra.mxu0 0
      %2662 = vmatprep.subr.bf16.mxu0 0
      %2663 = vmatpush1.bf16.msra.mxu0 0
      %2664 = vmatprep.subr.bf16.mxu0 0
      %2665 = vmatpush1.bf16.msra.mxu0 0
      %2666 = vmatprep.mubr.bf16.mxu0 0
      %2667 = vmatmul.mubr.bf16.gmra.mrb[0].mxu0 %v2629
      %v2668 = vpop.f32.mrb[0].mxu0
      %v2669 = vadd.f32 0.0, %v2668
      %v2670 = vpop.f32.mrb[0].mxu0
      %v2671 = vpop.f32.mrb[0].mxu0
      %v2672 = vadd.f32 0.0, %v2671
      %v2673 = vpop.f32.mrb[0].mxu0
      %2674 = vmatprep.mubr.bf16.mxu0 0
      %2675 = vmatmul.mubr.bf16.gmra.mrb[0].mxu0 %v2632
      %v2676 = vpop.f32.mrb[0].mxu0
      %v2677 = vadd.f32 0.0, %v2676
      %v2678 = vpop.f32.mrb[0].mxu0
      %v2679 = vpop.f32.mrb[0].mxu0
      %v2680 = vadd.f32 0.0, %v2679
      %v2681 = vpop.f32.mrb[0].mxu0
      %2682 = vdwg.mxu0
      %v2683 = vmax.f32 %v2599, %v2669
      %v2684 = vmax.f32 %v2602, %v2672
      %v2685 = vmax.f32 %v2607, %v2677
      %v2686 = vmax.f32 %v2610, %v2680
      %v2687 = vpack.c.bf16 %v2684, %v2683
      %v2688 = vpack.c.bf16 %v2686, %v2685
      %v2689 = vld [vmem:[%s9] sm:$0xf]
      %v2690 = vld [vmem:[%s9 + $0x4] sm:$0xf]
      %v2691 = vld [vmem:[%s9 + $0x8] sm:$0xf]
      %v2692 = vld [vmem:[%s9 + $0xc] sm:$0xf]
      %v2693 = vld [vmem:[%s9 + $0x10] sm:$0xf]
      %v2694 = vld [vmem:[%s9 + $0x14] sm:$0xf]
      %v2695 = vld [vmem:[%s9 + $0x18] sm:$0xf]
      %v2696 = vld [vmem:[%s9 + $0x1c] sm:$0xf]
      %v2697 = vld [vmem:[%s9 + $0x20] sm:$0xf]
      %v2698 = vld [vmem:[%s9 + $0x24] sm:$0xf]
      %v2699 = vld [vmem:[%s9 + $0x28] sm:$0xf]
      %v2700 = vld [vmem:[%s9 + $0x2c] sm:$0xf]
      %v2701 = vld [vmem:[%s9 + $0x30] sm:$0xf]
      %v2702 = vld [vmem:[%s9 + $0x34] sm:$0xf]
      %v2703 = vld [vmem:[%s9 + $0x38] sm:$0xf]
      %v2704 = vld [vmem:[%s9 + $0x3c] sm:$0xf]
      %v2721 = vunpack.c.l.b16 %v2689
      %v2722 = vunpack.c.l.b16 %v2690
      %v2723 = vunpack.c.l.b16 %v2691
      %v2724 = vunpack.c.l.b16 %v2692
      %v2725 = vunpack.c.l.b16 %v2693
      %v2726 = vunpack.c.l.b16 %v2694
      %v2727 = vunpack.c.l.b16 %v2695
      %v2728 = vunpack.c.l.b16 %v2696
      %v2729 = vunpack.c.l.b16 %v2697
      %v2730 = vunpack.c.l.b16 %v2698
      %v2731 = vunpack.c.l.b16 %v2699
      %v2732 = vunpack.c.l.b16 %v2700
      %v2733 = vunpack.c.l.b16 %v2701
      %v2734 = vunpack.c.l.b16 %v2702
      %v2735 = vunpack.c.l.b16 %v2703
      %v2736 = vunpack.c.l.b16 %v2704
      %v2737 = vpack.c.b16 %v2722, %v2721
      %v2738 = vpack.c.b16 %v2724, %v2723
      %v2739 = vpack.c.b16 %v2726, %v2725
      %v2740 = vpack.c.b16 %v2728, %v2727
      %v2741 = vpack.c.b16 %v2730, %v2729
      %v2742 = vpack.c.b16 %v2732, %v2731
      %v2743 = vpack.c.b16 %v2734, %v2733
      %v2744 = vpack.c.b16 %v2736, %v2735
      %2753 = vmatprep.subr.bf16.mxu0 0
      %2754 = vmatpush1.bf16.msra.mxu0 %v2737
      %2755 = vmatprep.subr.bf16.mxu0 0
      %2756 = vmatpush1.bf16.msra.mxu0 %v2738
      %2757 = vmatprep.subr.bf16.mxu0 0
      %2758 = vmatpush1.bf16.msra.mxu0 %v2739
      %2759 = vmatprep.subr.bf16.mxu0 0
      %2760 = vmatpush1.bf16.msra.mxu0 %v2740
      %2761 = vmatprep.subr.bf16.mxu0 0
      %2762 = vmatpush1.bf16.msra.mxu0 %v2741
      %2763 = vmatprep.subr.bf16.mxu0 0
      %2764 = vmatpush1.bf16.msra.mxu0 %v2742
      %2765 = vmatprep.subr.bf16.mxu0 0
      %2766 = vmatpush1.bf16.msra.mxu0 %v2743
      %2767 = vmatprep.subr.bf16.mxu0 0
      %2768 = vmatpush1.bf16.msra.mxu0 %v2744
      %2769 = vmatprep.subr.bf16.mxu0 0
      %2770 = vmatpush1.bf16.msra.mxu0 0
      %2771 = vmatprep.subr.bf16.mxu0 0
      %2772 = vmatpush1.bf16.msra.mxu0 0
      %2773 = vmatprep.subr.bf16.mxu0 0
      %2774 = vmatpush1.bf16.msra.mxu0 0
      %2775 = vmatprep.subr.bf16.mxu0 0
      %2776 = vmatpush1.bf16.msra.mxu0 0
      %2777 = vmatprep.subr.bf16.mxu0 0
      %2778 = vmatpush1.bf16.msra.mxu0 0
      %2779 = vmatprep.subr.bf16.mxu0 0
      %2780 = vmatpush1.bf16.msra.mxu0 0
      %2781 = vmatprep.subr.bf16.mxu0 0
      %2782 = vmatpush1.bf16.msra.mxu0 0
      %2783 = vmatprep.subr.bf16.mxu0 0
      %2784 = vmatpush1.bf16.msra.mxu0 0
      %2785 = vmatprep.mubr.bf16.mxu0 0
      %2786 = vmatmul.mubr.bf16.gmra.mrb[0].mxu0 %v2687
      %v2787 = vpop.f32.mrb[0].mxu0
      %v2788 = vadd.f32 0.0, %v2787
      %v2789 = vpop.f32.mrb[0].mxu0
      %v2790 = vpop.f32.mrb[0].mxu0
      %v2791 = vadd.f32 0.0, %v2790
      %v2792 = vpop.f32.mrb[0].mxu0
      %2793 = vmatprep.mubr.bf16.mxu0 0
      %2794 = vmatmul.mubr.bf16.gmra.mrb[0].mxu0 %v2688
      %v2795 = vpop.f32.mrb[0].mxu0
      %v2796 = vadd.f32 0.0, %v2795
      %v2797 = vpop.f32.mrb[0].mxu0
      %v2798 = vpop.f32.mrb[0].mxu0
      %v2799 = vadd.f32 0.0, %v2798
      %v2800 = vpop.f32.mrb[0].mxu0
      %2801 = vdwg.mxu0
      %s2802 = scalar_lea.vmem %s9, 64
      %v2803 = vld [vmem:[%s2802] sm:$0xf]
      %v2804 = vld [vmem:[%s2802 + $0x4] sm:$0xf]
      %v2805 = vld [vmem:[%s2802 + $0x8] sm:$0xf]
      %v2806 = vld [vmem:[%s2802 + $0xc] sm:$0xf]
      %v2807 = vld [vmem:[%s2802 + $0x10] sm:$0xf]
      %v2808 = vld [vmem:[%s2802 + $0x14] sm:$0xf]
      %v2809 = vld [vmem:[%s2802 + $0x18] sm:$0xf]
      %v2810 = vld [vmem:[%s2802 + $0x1c] sm:$0xf]
      %v2811 = vld [vmem:[%s2802 + $0x20] sm:$0xf]
      %v2812 = vld [vmem:[%s2802 + $0x24] sm:$0xf]
      %v2813 = vld [vmem:[%s2802 + $0x28] sm:$0xf]
      %v2814 = vld [vmem:[%s2802 + $0x2c] sm:$0xf]
      %v2815 = vld [vmem:[%s2802 + $0x30] sm:$0xf]
      %v2816 = vld [vmem:[%s2802 + $0x34] sm:$0xf]
      %v2817 = vld [vmem:[%s2802 + $0x38] sm:$0xf]
      %v2818 = vld [vmem:[%s2802 + $0x3c] sm:$0xf]
      %v2835 = vunpack.c.l.b16 %v2803
      %v2836 = vunpack.c.l.b16 %v2804
      %v2837 = vunpack.c.l.b16 %v2805
      %v2838 = vunpack.c.l.b16 %v2806
      %v2839 = vunpack.c.l.b16 %v2807
      %v2840 = vunpack.c.l.b16 %v2808
      %v2841 = vunpack.c.l.b16 %v2809
      %v2842 = vunpack.c.l.b16 %v2810
      %v2843 = vunpack.c.l.b16 %v2811
      %v2844 = vunpack.c.l.b16 %v2812
      %v2845 = vunpack.c.l.b16 %v2813
      %v2846 = vunpack.c.l.b16 %v2814
      %v2847 = vunpack.c.l.b16 %v2815
      %v2848 = vunpack.c.l.b16 %v2816
      %v2849 = vunpack.c.l.b16 %v2817
      %v2850 = vunpack.c.l.b16 %v2818
      %v2851 = vpack.c.b16 %v2836, %v2835
      %v2852 = vpack.c.b16 %v2838, %v2837
      %v2853 = vpack.c.b16 %v2840, %v2839
      %v2854 = vpack.c.b16 %v2842, %v2841
      %v2855 = vpack.c.b16 %v2844, %v2843
      %v2856 = vpack.c.b16 %v2846, %v2845
      %v2857 = vpack.c.b16 %v2848, %v2847
      %v2858 = vpack.c.b16 %v2850, %v2849
      %2867 = vmatprep.subr.bf16.mxu0 0
      %2868 = vmatpush1.bf16.msra.mxu0 %v2851
      %2869 = vmatprep.subr.bf16.mxu0 0
      %2870 = vmatpush1.bf16.msra.mxu0 %v2852
      %2871 = vmatprep.subr.bf16.mxu0 0
      %2872 = vmatpush1.bf16.msra.mxu0 %v2853
      %2873 = vmatprep.subr.bf16.mxu0 0
      %2874 = vmatpush1.bf16.msra.mxu0 %v2854
      %2875 = vmatprep.subr.bf16.mxu0 0
      %2876 = vmatpush1.bf16.msra.mxu0 %v2855
      %2877 = vmatprep.subr.bf16.mxu0 0
      %2878 = vmatpush1.bf16.msra.mxu0 %v2856
      %2879 = vmatprep.subr.bf16.mxu0 0
      %2880 = vmatpush1.bf16.msra.mxu0 %v2857
      %2881 = vmatprep.subr.bf16.mxu0 0
      %2882 = vmatpush1.bf16.msra.mxu0 %v2858
      %2883 = vmatprep.subr.bf16.mxu0 0
      %2884 = vmatpush1.bf16.msra.mxu0 0
      %2885 = vmatprep.subr.bf16.mxu0 0
      %2886 = vmatpush1.bf16.msra.mxu0 0
      %2887 = vmatprep.subr.bf16.mxu0 0
      %2888 = vmatpush1.bf16.msra.mxu0 0
      %2889 = vmatprep.subr.bf16.mxu0 0
      %2890 = vmatpush1.bf16.msra.mxu0 0
      %2891 = vmatprep.subr.bf16.mxu0 0
      %2892 = vmatpush1.bf16.msra.mxu0 0
      %2893 = vmatprep.subr.bf16.mxu0 0
      %2894 = vmatpush1.bf16.msra.mxu0 0
      %2895 = vmatprep.subr.bf16.mxu0 0
      %2896 = vmatpush1.bf16.msra.mxu0 0
      %2897 = vmatprep.subr.bf16.mxu0 0
      %2898 = vmatpush1.bf16.msra.mxu0 0
      %2899 = vmatprep.mubr.bf16.mxu0 0
      %2900 = vmatmul.mubr.bf16.gmra.mrb[0].mxu0 %v2687
      %v2901 = vpop.f32.mrb[0].mxu0
      %v2902 = vadd.f32 0.0, %v2901
      %v2903 = vpop.f32.mrb[0].mxu0
      %v2904 = vpop.f32.mrb[0].mxu0
      %v2905 = vadd.f32 0.0, %v2904
      %v2906 = vpop.f32.mrb[0].mxu0
      %2907 = vmatprep.mubr.bf16.mxu0 0
      %2908 = vmatmul.mubr.bf16.gmra.mrb[0].mxu0 %v2688
      %v2909 = vpop.f32.mrb[0].mxu0
      %v2910 = vadd.f32 0.0, %v2909
      %v2911 = vpop.f32.mrb[0].mxu0
      %v2912 = vpop.f32.mrb[0].mxu0
      %v2913 = vadd.f32 0.0, %v2912
      %v2914 = vpop.f32.mrb[0].mxu0
      %2915 = vdwg.mxu0
      %v2916 = vmax.f32 %v2788, %v2902
      %v2917 = vmax.f32 %v2791, %v2905
      %v2918 = vmax.f32 %v2796, %v2910
      %v2919 = vmax.f32 %v2799, %v2913
      %v2920 = vpack.c.bf16 %v2917, %v2916
      %v2921 = vpack.c.bf16 %v2919, %v2918
      %v2922 = vld [vmem:[%s3] sm:$0xf]
      %v2923 = vld [vmem:[%s3 + $0x4] sm:$0xf]
      %v2924 = vld [vmem:[%s3 + $0x8] sm:$0xf]
      %v2925 = vld [vmem:[%s3 + $0xc] sm:$0xf]
      %v2926 = vld [vmem:[%s3 + $0x10] sm:$0xf]
      %v2927 = vld [vmem:[%s3 + $0x14] sm:$0xf]
      %v2928 = vld [vmem:[%s3 + $0x18] sm:$0xf]
      %v2929 = vld [vmem:[%s3 + $0x1c] sm:$0xf]
      %s2930 = scalar_lea.vmem %s3, 32
      %v2931 = vld [vmem:[%s2930] sm:$0xf]
      %v2932 = vld [vmem:[%s2930 + $0x4] sm:$0xf]
      %v2933 = vld [vmem:[%s2930 + $0x8] sm:$0xf]
      %v2934 = vld [vmem:[%s2930 + $0xc] sm:$0xf]
      %v2935 = vld [vmem:[%s2930 + $0x10] sm:$0xf]
      %v2936 = vld [vmem:[%s2930 + $0x14] sm:$0xf]
      %v2937 = vld [vmem:[%s2930 + $0x18] sm:$0xf]
      %v2938 = vld [vmem:[%s2930 + $0x1c] sm:$0xf]
      %v2940 = vrot.slane %v2920, 4
      %v2949 = vunpack.c.l.b16 %v2931
      %v2950 = vunpack.c.l.b16 %v2932
      %v2951 = vunpack.c.l.b16 %v2933
      %v2952 = vunpack.c.l.b16 %v2934
      %v2953 = vunpack.c.l.b16 %v2935
      %v2954 = vunpack.c.l.b16 %v2936
      %v2955 = vunpack.c.l.b16 %v2937
      %v2956 = vunpack.c.l.b16 %v2938
      %v2957 = vpack.c.b16 %v2950, %v2949
      %v2958 = vpack.c.b16 %v2952, %v2951
      %v2959 = vpack.c.b16 %v2954, %v2953
      %v2960 = vpack.c.b16 %v2956, %v2955
      %v2966 = vsel %vm1158, %v2940, 0
      %2968 = vmatprep.subr.bf16.mxu0 0
      %2969 = vmatpush1.bf16.msra.mxu0 %v2957
      %2970 = vmatprep.subr.bf16.mxu0 0
      %2971 = vmatpush1.bf16.msra.mxu0 %v2958
      %2972 = vmatprep.subr.bf16.mxu0 0
      %2973 = vmatpush1.bf16.msra.mxu0 %v2959
      %2974 = vmatprep.subr.bf16.mxu0 0
      %2975 = vmatpush1.bf16.msra.mxu0 %v2960
      %2976 = vmatprep.subr.bf16.mxu0 0
      %2977 = vmatpush1.bf16.msra.mxu0 0
      %2978 = vmatprep.subr.bf16.mxu0 0
      %2979 = vmatpush1.bf16.msra.mxu0 0
      %2980 = vmatprep.subr.bf16.mxu0 0
      %2981 = vmatpush1.bf16.msra.mxu0 0
      %2982 = vmatprep.subr.bf16.mxu0 0
      %2983 = vmatpush1.bf16.msra.mxu0 0
      %2984 = vmatprep.subr.bf16.mxu0 0
      %2985 = vmatpush1.bf16.msra.mxu0 0
      %2986 = vmatprep.subr.bf16.mxu0 0
      %2987 = vmatpush1.bf16.msra.mxu0 0
      %2988 = vmatprep.subr.bf16.mxu0 0
      %2989 = vmatpush1.bf16.msra.mxu0 0
      %2990 = vmatprep.subr.bf16.mxu0 0
      %2991 = vmatpush1.bf16.msra.mxu0 0
      %2992 = vmatprep.subr.bf16.mxu0 0
      %2993 = vmatpush1.bf16.msra.mxu0 0
      %2994 = vmatprep.subr.bf16.mxu0 0
      %2995 = vmatpush1.bf16.msra.mxu0 0
      %2996 = vmatprep.subr.bf16.mxu0 0
      %2997 = vmatpush1.bf16.msra.mxu0 0
      %2998 = vmatprep.subr.bf16.mxu0 0
      %2999 = vmatpush1.bf16.msra.mxu0 0
      %3000 = vmatprep.mubr.bf16.mxu0 0
      %3001 = vmatmul.mubr.bf16.gmra.mrb[0].mxu0 %v2966
      %v3002 = vpop.f32.mrb[0].mxu0
      %v3003 = vadd.f32 0.0, %v3002
      %v3004 = vpop.f32.mrb[0].mxu0
      %v3005 = vpop.f32.mrb[0].mxu0
      %v3006 = vpop.f32.mrb[0].mxu0
      %3007 = vdwg.mxu0
      %v3016 = vunpack.c.l.b16 %v2922
      %v3017 = vunpack.c.l.b16 %v2923
      %v3018 = vunpack.c.l.b16 %v2924
      %v3019 = vunpack.c.l.b16 %v2925
      %v3020 = vunpack.c.l.b16 %v2926
      %v3021 = vunpack.c.l.b16 %v2927
      %v3022 = vunpack.c.l.b16 %v2928
      %v3023 = vunpack.c.l.b16 %v2929
      %v3024 = vpack.c.b16 %v3017, %v3016
      %v3025 = vpack.c.b16 %v3019, %v3018
      %v3026 = vpack.c.b16 %v3021, %v3020
      %v3027 = vpack.c.b16 %v3023, %v3022
      %v3033 = vsel %vm1158, %v2920, 0
      %3035 = vmatprep.subr.bf16.mxu0 0
      %3036 = vmatpush1.bf16.msra.mxu0 %v3024
      %3037 = vmatprep.subr.bf16.mxu0 0
      %3038 = vmatpush1.bf16.msra.mxu0 %v3025
      %3039 = vmatprep.subr.bf16.mxu0 0
      %3040 = vmatpush1.bf16.msra.mxu0 %v3026
      %3041 = vmatprep.subr.bf16.mxu0 0
      %3042 = vmatpush1.bf16.msra.mxu0 %v3027
      %3043 = vmatprep.subr.bf16.mxu0 0
      %3044 = vmatpush1.bf16.msra.mxu0 0
      %3045 = vmatprep.subr.bf16.mxu0 0
      %3046 = vmatpush1.bf16.msra.mxu0 0
      %3047 = vmatprep.subr.bf16.mxu0 0
      %3048 = vmatpush1.bf16.msra.mxu0 0
      %3049 = vmatprep.subr.bf16.mxu0 0
      %3050 = vmatpush1.bf16.msra.mxu0 0
      %3051 = vmatprep.subr.bf16.mxu0 0
      %3052 = vmatpush1.bf16.msra.mxu0 0
      %3053 = vmatprep.subr.bf16.mxu0 0
      %3054 = vmatpush1.bf16.msra.mxu0 0
      %3055 = vmatprep.subr.bf16.mxu0 0
      %3056 = vmatpush1.bf16.msra.mxu0 0
      %3057 = vmatprep.subr.bf16.mxu0 0
      %3058 = vmatpush1.bf16.msra.mxu0 0
      %3059 = vmatprep.subr.bf16.mxu0 0
      %3060 = vmatpush1.bf16.msra.mxu0 0
      %3061 = vmatprep.subr.bf16.mxu0 0
      %3062 = vmatpush1.bf16.msra.mxu0 0
      %3063 = vmatprep.subr.bf16.mxu0 0
      %3064 = vmatpush1.bf16.msra.mxu0 0
      %3065 = vmatprep.subr.bf16.mxu0 0
      %3066 = vmatpush1.bf16.msra.mxu0 0
      %3067 = vmatprep.mubr.bf16.mxu0 0
      %3068 = vmatmul.mubr.bf16.gmra.mrb[0].mxu0 %v3033
      %v3069 = vpop.f32.mrb[0].mxu0
      %v3070 = vadd.f32 %v3003, %v3069
      %v3071 = vpop.f32.mrb[0].mxu0
      %v3072 = vpop.f32.mrb[0].mxu0
      %v3073 = vpop.f32.mrb[0].mxu0
      %3074 = vdwg.mxu0
      %s3075 = scalar_lea.vmem %s3, 64
      %v3076 = vld [vmem:[%s3075] sm:$0xf]
      %v3077 = vld [vmem:[%s3075 + $0x4] sm:$0xf]
      %v3078 = vld [vmem:[%s3075 + $0x8] sm:$0xf]
      %v3079 = vld [vmem:[%s3075 + $0xc] sm:$0xf]
      %v3080 = vld [vmem:[%s3075 + $0x10] sm:$0xf]
      %v3081 = vld [vmem:[%s3075 + $0x14] sm:$0xf]
      %v3082 = vld [vmem:[%s3075 + $0x18] sm:$0xf]
      %v3083 = vld [vmem:[%s3075 + $0x1c] sm:$0xf]
      %v3092 = vunpack.c.l.b16 %v3076
      %v3093 = vunpack.c.l.b16 %v3077
      %v3094 = vunpack.c.l.b16 %v3078
      %v3095 = vunpack.c.l.b16 %v3079
      %v3096 = vunpack.c.l.b16 %v3080
      %v3097 = vunpack.c.l.b16 %v3081
      %v3098 = vunpack.c.l.b16 %v3082
      %v3099 = vunpack.c.l.b16 %v3083
      %v3100 = vpack.c.b16 %v3093, %v3092
      %v3101 = vpack.c.b16 %v3095, %v3094
      %v3102 = vpack.c.b16 %v3097, %v3096
      %v3103 = vpack.c.b16 %v3099, %v3098
      %v3109 = vsel %vm1158, %v2921, 0
      %3111 = vmatprep.subr.bf16.mxu0 0
      %3112 = vmatpush1.bf16.msra.mxu0 %v3100
      %3113 = vmatprep.subr.bf16.mxu0 0
      %3114 = vmatpush1.bf16.msra.mxu0 %v3101
      %3115 = vmatprep.subr.bf16.mxu0 0
      %3116 = vmatpush1.bf16.msra.mxu0 %v3102
      %3117 = vmatprep.subr.bf16.mxu0 0
      %3118 = vmatpush1.bf16.msra.mxu0 %v3103
      %3119 = vmatprep.subr.bf16.mxu0 0
      %3120 = vmatpush1.bf16.msra.mxu0 0
      %3121 = vmatprep.subr.bf16.mxu0 0
      %3122 = vmatpush1.bf16.msra.mxu0 0
      %3123 = vmatprep.subr.bf16.mxu0 0
      %3124 = vmatpush1.bf16.msra.mxu0 0
      %3125 = vmatprep.subr.bf16.mxu0 0
      %3126 = vmatpush1.bf16.msra.mxu0 0
      %3127 = vmatprep.subr.bf16.mxu0 0
      %3128 = vmatpush1.bf16.msra.mxu0 0
      %3129 = vmatprep.subr.bf16.mxu0 0
      %3130 = vmatpush1.bf16.msra.mxu0 0
      %3131 = vmatprep.subr.bf16.mxu0 0
      %3132 = vmatpush1.bf16.msra.mxu0 0
      %3133 = vmatprep.subr.bf16.mxu0 0
      %3134 = vmatpush1.bf16.msra.mxu0 0
      %3135 = vmatprep.subr.bf16.mxu0 0
      %3136 = vmatpush1.bf16.msra.mxu0 0
      %3137 = vmatprep.subr.bf16.mxu0 0
      %3138 = vmatpush1.bf16.msra.mxu0 0
      %3139 = vmatprep.subr.bf16.mxu0 0
      %3140 = vmatpush1.bf16.msra.mxu0 0
      %3141 = vmatprep.subr.bf16.mxu0 0
      %3142 = vmatpush1.bf16.msra.mxu0 0
      %3143 = vmatprep.mubr.bf16.mxu0 0
      %3144 = vmatmul.mubr.bf16.gmra.mrb[0].mxu0 %v3109
      %v3145 = vpop.f32.mrb[0].mxu0
      %v3146 = vadd.f32 0.0, %v3145
      %v3147 = vpop.f32.mrb[0].mxu0
      %v3148 = vpop.f32.mrb[0].mxu0
      %v3149 = vpop.f32.mrb[0].mxu0
      %3150 = vdwg.mxu0
      %v3151 = vadd.f32 %v3070, %v3146
      %s3152 = scalar_lea.vmem %s3, 96
      %v3153 = vld [vmem:[%s3152] sm:$0xf]
      %v3154 = vld [vmem:[%s3152 + $0x4] sm:$0xf]
      %v3155 = vld [vmem:[%s3152 + $0x8] sm:$0xf]
      %v3156 = vld [vmem:[%s3152 + $0xc] sm:$0xf]
      %v3157 = vld [vmem:[%s3152 + $0x10] sm:$0xf]
      %v3158 = vld [vmem:[%s3152 + $0x14] sm:$0xf]
      %v3159 = vld [vmem:[%s3152 + $0x18] sm:$0xf]
      %v3160 = vld [vmem:[%s3152 + $0x1c] sm:$0xf]
      %v3162 = vrot.slane %v2921, 4
      %v3171 = vunpack.c.l.b16 %v3153
      %v3172 = vunpack.c.l.b16 %v3154
      %v3173 = vunpack.c.l.b16 %v3155
      %v3174 = vunpack.c.l.b16 %v3156
      %v3175 = vunpack.c.l.b16 %v3157
      %v3176 = vunpack.c.l.b16 %v3158
      %v3177 = vunpack.c.l.b16 %v3159
      %v3178 = vunpack.c.l.b16 %v3160
      %v3179 = vpack.c.b16 %v3172, %v3171
      %v3180 = vpack.c.b16 %v3174, %v3173
      %v3181 = vpack.c.b16 %v3176, %v3175
      %v3182 = vpack.c.b16 %v3178, %v3177
      %v3188 = vsel %vm1158, %v3162, 0
      %3190 = vmatprep.subr.bf16.mxu0 0
      %3191 = vmatpush1.bf16.msra.mxu0 %v3179
      %3192 = vmatprep.subr.bf16.mxu0 0
      %3193 = vmatpush1.bf16.msra.mxu0 %v3180
      %3194 = vmatprep.subr.bf16.mxu0 0
      %3195 = vmatpush1.bf16.msra.mxu0 %v3181
      %3196 = vmatprep.subr.bf16.mxu0 0
      %3197 = vmatpush1.bf16.msra.mxu0 %v3182
      %3198 = vmatprep.subr.bf16.mxu0 0
      %3199 = vmatpush1.bf16.msra.mxu0 0
      %3200 = vmatprep.subr.bf16.mxu0 0
      %3201 = vmatpush1.bf16.msra.mxu0 0
      %3202 = vmatprep.subr.bf16.mxu0 0
      %3203 = vmatpush1.bf16.msra.mxu0 0
      %3204 = vmatprep.subr.bf16.mxu0 0
      %3205 = vmatpush1.bf16.msra.mxu0 0
      %3206 = vmatprep.subr.bf16.mxu0 0
      %3207 = vmatpush1.bf16.msra.mxu0 0
      %3208 = vmatprep.subr.bf16.mxu0 0
      %3209 = vmatpush1.bf16.msra.mxu0 0
      %3210 = vmatprep.subr.bf16.mxu0 0
      %3211 = vmatpush1.bf16.msra.mxu0 0
      %3212 = vmatprep.subr.bf16.mxu0 0
      %3213 = vmatpush1.bf16.msra.mxu0 0
      %3214 = vmatprep.subr.bf16.mxu0 0
      %3215 = vmatpush1.bf16.msra.mxu0 0
      %3216 = vmatprep.subr.bf16.mxu0 0
      %3217 = vmatpush1.bf16.msra.mxu0 0
      %3218 = vmatprep.subr.bf16.mxu0 0
      %3219 = vmatpush1.bf16.msra.mxu0 0
      %3220 = vmatprep.subr.bf16.mxu0 0
      %3221 = vmatpush1.bf16.msra.mxu0 0
      %3222 = vmatprep.mubr.bf16.mxu0 0
      %3223 = vmatmul.mubr.bf16.gmra.mrb[0].mxu0 %v3188
      %v3224 = vpop.f32.mrb[0].mxu0
      %v3225 = vadd.f32 0.0, %v3224
      %v3226 = vpop.f32.mrb[0].mxu0
      %v3227 = vpop.f32.mrb[0].mxu0
      %v3228 = vpop.f32.mrb[0].mxu0
      %3229 = vdwg.mxu0
      %v3230 = vadd.f32 %v3151, %v3225
      %v3231 = vlaneseq
      %v3232 = vshrl.u32 %v3231, 7
      %v3233 = vsub.s32 2, %v3232
      %v3234 = vrot.slane %v388, %v3233
      %v3235 = vadd.f32 %v3230, %v3234
      %v3236 = vmax.f32 %v3235, 0.0
      %v3237 = vpack.c.bf16 %v3236, %v3236
      %v3238 = vld [vmem:[%s4] sm:$0xf]
      %v3239 = vld [vmem:[%s4 + $0x4] sm:$0xf]
      %v3240 = vld [vmem:[%s4 + $0x8] sm:$0xf]
      %v3241 = vld [vmem:[%s4 + $0xc] sm:$0xf]
      %v3242 = vld [vmem:[%s4 + $0x10] sm:$0xf]
      %v3243 = vld [vmem:[%s4 + $0x14] sm:$0xf]
      %v3244 = vld [vmem:[%s4 + $0x18] sm:$0xf]
      %v3245 = vld [vmem:[%s4 + $0x1c] sm:$0xf]
      %v3246 = vld [vmem:[%s4 + $0x20] sm:$0xf]
      %v3247 = vld [vmem:[%s4 + $0x24] sm:$0xf]
      %v3248 = vld [vmem:[%s4 + $0x28] sm:$0xf]
      %v3249 = vld [vmem:[%s4 + $0x2c] sm:$0xf]
      %v3250 = vld [vmem:[%s4 + $0x30] sm:$0xf]
      %v3251 = vld [vmem:[%s4 + $0x34] sm:$0xf]
      %v3252 = vld [vmem:[%s4 + $0x38] sm:$0xf]
      %v3253 = vld [vmem:[%s4 + $0x3c] sm:$0xf]
      %v3254 = vlaneseq
      %v3255 = vshrl.u32 %v3254, 7
      %v3256 = vsub.s32 3, %v3255
      %v3257 = vrot.slane %v388, %v3256
      %v3274 = vunpack.c.l.b16 %v3238
      %v3275 = vunpack.c.l.b16 %v3239
      %v3276 = vunpack.c.l.b16 %v3240
      %v3277 = vunpack.c.l.b16 %v3241
      %v3278 = vunpack.c.l.b16 %v3242
      %v3279 = vunpack.c.l.b16 %v3243
      %v3280 = vunpack.c.l.b16 %v3244
      %v3281 = vunpack.c.l.b16 %v3245
      %v3282 = vunpack.c.l.b16 %v3246
      %v3283 = vunpack.c.l.b16 %v3247
      %v3284 = vunpack.c.l.b16 %v3248
      %v3285 = vunpack.c.l.b16 %v3249
      %v3286 = vunpack.c.l.b16 %v3250
      %v3287 = vunpack.c.l.b16 %v3251
      %v3288 = vunpack.c.l.b16 %v3252
      %v3289 = vunpack.c.l.b16 %v3253
      %v3290 = vpack.c.b16 %v3275, %v3274
      %v3291 = vpack.c.b16 %v3277, %v3276
      %v3292 = vpack.c.b16 %v3279, %v3278
      %v3293 = vpack.c.b16 %v3281, %v3280
      %v3294 = vpack.c.b16 %v3283, %v3282
      %v3295 = vpack.c.b16 %v3285, %v3284
      %v3296 = vpack.c.b16 %v3287, %v3286
      %v3297 = vpack.c.b16 %v3289, %v3288
      %3306 = vmatprep.subr.bf16.mxu0 0
      %3307 = vmatpush1.bf16.msra.mxu0 %v3290
      %3308 = vmatprep.subr.bf16.mxu0 0
      %3309 = vmatpush1.bf16.msra.mxu0 %v3291
      %3310 = vmatprep.subr.bf16.mxu0 0
      %3311 = vmatpush1.bf16.msra.mxu0 %v3292
      %3312 = vmatprep.subr.bf16.mxu0 0
      %3313 = vmatpush1.bf16.msra.mxu0 %v3293
      %3314 = vmatprep.subr.bf16.mxu0 0
      %3315 = vmatpush1.bf16.msra.mxu0 %v3294
      %3316 = vmatprep.subr.bf16.mxu0 0
      %3317 = vmatpush1.bf16.msra.mxu0 %v3295
      %3318 = vmatprep.subr.bf16.mxu0 0
      %3319 = vmatpush1.bf16.msra.mxu0 %v3296
      %3320 = vmatprep.subr.bf16.mxu0 0
      %3321 = vmatpush1.bf16.msra.mxu0 %v3297
      %3322 = vmatprep.subr.bf16.mxu0 0
      %3323 = vmatpush1.bf16.msra.mxu0 0
      %3324 = vmatprep.subr.bf16.mxu0 0
      %3325 = vmatpush1.bf16.msra.mxu0 0
      %3326 = vmatprep.subr.bf16.mxu0 0
      %3327 = vmatpush1.bf16.msra.mxu0 0
      %3328 = vmatprep.subr.bf16.mxu0 0
      %3329 = vmatpush1.bf16.msra.mxu0 0
      %3330 = vmatprep.subr.bf16.mxu0 0
      %3331 = vmatpush1.bf16.msra.mxu0 0
      %3332 = vmatprep.subr.bf16.mxu0 0
      %3333 = vmatpush1.bf16.msra.mxu0 0
      %3334 = vmatprep.subr.bf16.mxu0 0
      %3335 = vmatpush1.bf16.msra.mxu0 0
      %3336 = vmatprep.subr.bf16.mxu0 0
      %3337 = vmatpush1.bf16.msra.mxu0 0
      %3338 = vmatprep.mubr.bf16.mxu0 0
      %3339 = vmatmul.mubr.bf16.gmra.mrb[0].mxu0 %v3237
      %v3340 = vpop.f32.mrb[0].mxu0
      %v3341 = vadd.f32 %v3257, %v3340
      %v3342 = vpop.f32.mrb[0].mxu0
      %v3343 = vpop.f32.mrb[0].mxu0
      %v3344 = vpop.f32.mrb[0].mxu0
      %3345 = vdwg.mxu0
      %v3346 = vmax.f32 %v3341, 0.0
      %v3347 = vpack.c.bf16 %v3346, %v3346
      %v3348 = vld [vmem:[%s5] sm:$0xf]
      %v3349 = vld [vmem:[%s5 + $0x4] sm:$0xf]
      %v3350 = vld [vmem:[%s5 + $0x8] sm:$0xf]
      %v3351 = vld [vmem:[%s5 + $0xc] sm:$0xf]
      %v3352 = vld [vmem:[%s5 + $0x10] sm:$0xf]
      %v3353 = vld [vmem:[%s5 + $0x14] sm:$0xf]
      %v3354 = vld [vmem:[%s5 + $0x18] sm:$0xf]
      %v3355 = vld [vmem:[%s5 + $0x1c] sm:$0xf]
      %v3356 = vld [vmem:[%s5 + $0x20] sm:$0xf]
      %v3357 = vld [vmem:[%s5 + $0x24] sm:$0xf]
      %v3358 = vld [vmem:[%s5 + $0x28] sm:$0xf]
      %v3359 = vld [vmem:[%s5 + $0x2c] sm:$0xf]
      %v3360 = vld [vmem:[%s5 + $0x30] sm:$0xf]
      %v3361 = vld [vmem:[%s5 + $0x34] sm:$0xf]
      %v3362 = vld [vmem:[%s5 + $0x38] sm:$0xf]
      %v3363 = vld [vmem:[%s5 + $0x3c] sm:$0xf]
      %v3364 = vlaneseq
      %v3365 = vshrl.u32 %v3364, 7
      %v3366 = vsub.s32 4, %v3365
      %v3367 = vrot.slane %v388, %v3366
      %v3384 = vunpack.c.l.b16 %v3348
      %v3385 = vunpack.c.l.b16 %v3349
      %v3386 = vunpack.c.l.b16 %v3350
      %v3387 = vunpack.c.l.b16 %v3351
      %v3388 = vunpack.c.l.b16 %v3352
      %v3389 = vunpack.c.l.b16 %v3353
      %v3390 = vunpack.c.l.b16 %v3354
      %v3391 = vunpack.c.l.b16 %v3355
      %v3392 = vunpack.c.l.b16 %v3356
      %v3393 = vunpack.c.l.b16 %v3357
      %v3394 = vunpack.c.l.b16 %v3358
      %v3395 = vunpack.c.l.b16 %v3359
      %v3396 = vunpack.c.l.b16 %v3360
      %v3397 = vunpack.c.l.b16 %v3361
      %v3398 = vunpack.c.l.b16 %v3362
      %v3399 = vunpack.c.l.b16 %v3363
      %v3400 = vpack.c.b16 %v3385, %v3384
      %v3401 = vpack.c.b16 %v3387, %v3386
      %v3402 = vpack.c.b16 %v3389, %v3388
      %v3403 = vpack.c.b16 %v3391, %v3390
      %v3404 = vpack.c.b16 %v3393, %v3392
      %v3405 = vpack.c.b16 %v3395, %v3394
      %v3406 = vpack.c.b16 %v3397, %v3396
      %v3407 = vpack.c.b16 %v3399, %v3398
      %3416 = vmatprep.subr.bf16.mxu0 0
      %3417 = vmatpush1.bf16.msra.mxu0 %v3400
      %3418 = vmatprep.subr.bf16.mxu0 0
      %3419 = vmatpush1.bf16.msra.mxu0 %v3401
      %3420 = vmatprep.subr.bf16.mxu0 0
      %3421 = vmatpush1.bf16.msra.mxu0 %v3402
      %3422 = vmatprep.subr.bf16.mxu0 0
      %3423 = vmatpush1.bf16.msra.mxu0 %v3403
      %3424 = vmatprep.subr.bf16.mxu0 0
      %3425 = vmatpush1.bf16.msra.mxu0 %v3404
      %3426 = vmatprep.subr.bf16.mxu0 0
      %3427 = vmatpush1.bf16.msra.mxu0 %v3405
      %3428 = vmatprep.subr.bf16.mxu0 0
      %3429 = vmatpush1.bf16.msra.mxu0 %v3406
      %3430 = vmatprep.subr.bf16.mxu0 0
      %3431 = vmatpush1.bf16.msra.mxu0 %v3407
      %3432 = vmatprep.subr.bf16.mxu0 0
      %3433 = vmatpush1.bf16.msra.mxu0 0
      %3434 = vmatprep.subr.bf16.mxu0 0
      %3435 = vmatpush1.bf16.msra.mxu0 0
      %3436 = vmatprep.subr.bf16.mxu0 0
      %3437 = vmatpush1.bf16.msra.mxu0 0
      %3438 = vmatprep.subr.bf16.mxu0 0
      %3439 = vmatpush1.bf16.msra.mxu0 0
      %3440 = vmatprep.subr.bf16.mxu0 0
      %3441 = vmatpush1.bf16.msra.mxu0 0
      %3442 = vmatprep.subr.bf16.mxu0 0
      %3443 = vmatpush1.bf16.msra.mxu0 0
      %3444 = vmatprep.subr.bf16.mxu0 0
      %3445 = vmatpush1.bf16.msra.mxu0 0
      %3446 = vmatprep.subr.bf16.mxu0 0
      %3447 = vmatpush1.bf16.msra.mxu0 0
      %3448 = vmatprep.mubr.bf16.mxu0 0
      %3449 = vmatmul.mubr.bf16.gmra.mrb[0].mxu0 %v3347
      %v3450 = vpop.f32.mrb[0].mxu0
      %v3451 = vadd.f32 %v3367, %v3450
      %v3452 = vpop.f32.mrb[0].mxu0
      %v3453 = vpop.f32.mrb[0].mxu0
      %v3454 = vpop.f32.mrb[0].mxu0
      %3455 = vdwg.mxu0
      %v3456 = vadd.f32 %v3451, %v3346
      %3457 = vst [vmem:[%s386] sm:$0xff] %v3456
      %p3458 = scmp.lt.s32.totalorder %s22, 1
      %s3459 = scalar_select %p3458, %s22, 1
      %s3460 = smul.addr %s3459, 8
      %s3461 = scalar_lea.vmem %s11, %s3460
      // Predicated region
      $region65: #{_lambda_.1} parent=63 // pred_check
        %p3462 = pneg %p276
      $region66: #{_lambda_.1} parent=63 // pred_check_branch
        %3464 = sbr.rel (%p3462) target = $region68
      $region67: #{_lambda_.1} parent=63 // pred_region
        _
      $region68: #{_lambda_.1} parent=63 // pred_fallthru
        _
    $region64: #{_lambda_.1} parent=5 // pred_fallthru
      _
    %p3465 = scmp.le.s32.totalorder 2, %s17
    // Predicated region
    $region69: #{_lambda_.1} parent=5 // pred_check
      %p3466 = pneg %p3465
    $region70: #{_lambda_.1} parent=5 // pred_check_branch
      %3468 = sbr.rel (%p3466) target = $region72
    $region71: #{_lambda_.1} parent=5 // pred_region
      %s3469 = ssub.s32 %s17, 2
      // Predicated region
      $region73: #{_lambda_.1} parent=71 // pred_check
        %p3470 = pneg %p282
      $region74: #{_lambda_.1} parent=71 // pred_check_branch
        %3472 = sbr.rel (%p3470) target = $region76
      $region75: #{_lambda_.1} parent=71 // pred_region
        %p3473 = scmp.lt.s32.totalorder %s23, 1
        %s3474 = scalar_select %p3473, %s23, 1
        %s3475 = smul.addr %s3474, 8
        %s3476 = scalar_lea.vmem %s11, %s3475
      $region76: #{_lambda_.1} parent=71 // pred_fallthru
        _
    $region72: #{_lambda_.1} parent=5 // pred_fallthru
      _
  $region6: #{_lambda_.1} parent=0 // loop_footer
    %s21 = sadd.s32 1, %s17
  $region7: #{_lambda_.1} parent=0 // loop_footer_branch
    %16 = sbr.rel target = $region3
  $region8: #{_lambda_.1} parent=0 // loop_exit
    _

</llo_original>
